<compile_context>
chip_gen: v7x
topology: tpu7x:2x2x1
jax: 0.10.0
libtpu: 0.0.40
codegen_flags: <defaults>
</compile_context>

<pallas_src>
import functools

import jax
import jax.numpy as jnp
from jax import lax
from jax.experimental import pallas as pl
from jax.experimental.pallas import tpu as pltpu

EPS = 1e-5
LANE = 128


def _round_up(x, m):
    return (x + m - 1) // m * m


# ---------------------------------------------------------------------------
# pipeline_mode=pl.Buffered(1) support probe: single-buffer grid-invariant
# operands (weights, masks, BN scale/shift); fall back to default double
# buffering if this JAX/Mosaic version rejects it.
# ---------------------------------------------------------------------------
def _probe_copy_kernel(x_ref, o_ref):
    o_ref[...] = x_ref[...]


@functools.lru_cache(maxsize=None)
def _single_buffer_supported():
    try:
        spec = pl.BlockSpec((8, LANE), lambda i: (0, 0),
                            pipeline_mode=pl.Buffered(1))
        fn = pl.pallas_call(
            _probe_copy_kernel,
            grid=(2,),
            in_specs=[spec],
            out_specs=pl.BlockSpec((8, LANE), lambda i: (0, 0)),
            out_shape=jax.ShapeDtypeStruct((8, LANE), jnp.float32),
        )
        jax.block_until_ready(fn(jnp.zeros((8, LANE), jnp.float32)))
        return True
    except Exception:   # any failure -> treat as unsupported, use default spec
        return False


def _invariant_spec(block_shape, index_map):
    if _single_buffer_supported():
        return pl.BlockSpec(block_shape, index_map, pipeline_mode=pl.Buffered(1))
    return pl.BlockSpec(block_shape, index_map)


# ---------------------------------------------------------------------------
# Kernel 1: conv1 as 9 accumulating bf16 MXU matmuls + per-image BN1 partials.
# ---------------------------------------------------------------------------
def _conv1_stats_kernel(x_ref, w_ref, vmask_ref, y_ref, st_ref, *, Wp, Lm):
    pf = x_ref[0]                                          # (L, Cp) f32 padded frame
    acc = None
    for k in range(9):                                     # tap k = dy*3 + dx
        off = (k // 3) * Wp + (k % 3)
        tap = pf[off:off + Lm, :].astype(jnp.bfloat16)
        part = jnp.dot(tap, w_ref[k], preferred_element_type=jnp.float32)
        acc = part if acc is None else acc + part
    y_ref[0] = acc.astype(y_ref.dtype)                     # bf16 inter-stage activation
    ym = acc * vmask_ref[...]                              # zero non-image rows (f32)
    st_ref[0] = jnp.concatenate(
        [jnp.sum(ym, axis=0, keepdims=True),
         jnp.sum(ym * ym, axis=0, keepdims=True)], axis=0)  # (2, Cp) sum, sumsq


# ---------------------------------------------------------------------------
# Kernel 2: BN1(affine,f32) + ReLU + conv2 (9 bf16 matmuls) + BN2 partials.
# ---------------------------------------------------------------------------
def _bnrelu_conv2_stats_kernel(y1_ref, sc_ref, sh_ref, w_ref, vmask_ref,
                               y2_ref, st_ref, *, Wp, Lm, pre, Lf):
    cp = y1_ref.shape[2]
    h = jnp.maximum(y1_ref[0].astype(jnp.float32) * sc_ref[...] + sh_ref[...], 0.0)
    hm = h * vmask_ref[...]                                # zero rows -> correct halo
    # 8-aligned [zeros | hm | zeros] frame: no sublane realign on the concat.
    frame = jnp.concatenate(
        [jnp.zeros((pre, cp), jnp.float32), hm,
         jnp.zeros((Lf - pre - Lm, cp), jnp.float32)], axis=0)      # (Lf, Cp)
    acc = None
    for k in range(9):
        off = pre - (Wp + 1) + (k // 3) * Wp + (k % 3)
        tap = frame[off:off + Lm, :].astype(jnp.bfloat16)
        part = jnp.dot(tap, w_ref[k], preferred_element_type=jnp.float32)
        acc = part if acc is None else acc + part
    y2_ref[0] = acc.astype(y2_ref.dtype)
    ym = acc * vmask_ref[...]
    st_ref[0] = jnp.concatenate(
        [jnp.sum(ym, axis=0, keepdims=True),
         jnp.sum(ym * ym, axis=0, keepdims=True)], axis=0)


# ---------------------------------------------------------------------------
# Kernel 3: BN2(affine) + identity add + ReLU.  Identity is read directly from
# the padded input frame (rows shifted by Wp+1); halo columns are zero there.
# ---------------------------------------------------------------------------
def _bn_add_relu_kernel(y2_ref, x_ref, sc_ref, sh_ref, o_ref, *, Wp, Lm):
    ident = x_ref[0][Wp + 1:Wp + 1 + Lm, :]                # (Lm, Cp) f32 identity
    y2 = y2_ref[0].astype(jnp.float32)
    o_ref[0] = jnp.maximum(y2 * sc_ref[...] + sh_ref[...] + ident, 0.0)


def residual_block(x_nchw, w1, g1, b1, w2, g2, b2):
    """ResidualBlock forward, stride=1 / downsample=None, training-mode BN.

    x_nchw : (N, Cin, H, W) f32 (PyTorch NCHW)
    w1     : (Cout, Cin, 3, 3)   w2 : (Cout, Cout, 3, 3)
    g*/b*  : (Cout,) BatchNorm affine params
    returns: (N, Cout, H, W) f32
    """
    N, Cin, H, W = x_nchw.shape
    Cout = w1.shape[0]
    assert Cin == Cout, "identity skip requires in_channels == out_channels"

    f32, bf16 = jnp.float32, jnp.bfloat16
    Cp = _round_up(max(Cin, Cout), LANE)      # lane-dense channel width
    Hp, Wp = H + 2, W + 2
    Lm = _round_up(H * Wp, 8)                 # rows of the flat conv output
    L = _round_up(Lm + 2 * Wp + 2, 8)         # rows of the flat padded input frame
    pre = _round_up(Wp + 1, 8)                # 8-aligned top pad of conv2's frame
    Lf = _round_up(pre + Lm + Wp + 1, 8)      # rows of conv2's rebuilt frame

    # ---- wrapper-side layout prep (NCHW -> flat padded NHWC frame) ---------
    x = jnp.transpose(x_nchw, (0, 2, 3, 1)).astype(f32)               # NHWC
    x = jnp.pad(x, ((0, 0), (0, 0), (0, 0), (0, Cp - Cin)))           # lane pad
    xpad = jnp.pad(x, ((0, 0), (1, 1), (1, 1), (0, 0)))               # spatial halo
    x_flat = xpad.reshape(N, Hp * Wp, Cp)
    x_flat = jnp.pad(x_flat, ((0, 0), (0, L - Hp * Wp), (0, 0)))      # (N, L, Cp) f32

    def prep_w(w):   # OIHW -> (9, Cp, Cp) bf16; tap k = dy*3+dx on the leading axis
        wk = jnp.transpose(w, (2, 3, 1, 0)).astype(f32)               # (3,3,Ci,Co)
        wk = jnp.pad(wk, ((0, 0), (0, 0),
                          (0, Cp - wk.shape[2]), (0, Cp - wk.shape[3])))
        return wk.reshape(9, Cp, Cp).astype(bf16)

    w1c, w2c = prep_w(w1), prep_w(w2)

    # Row-validity mask over the flat output rows (r < H*Wp and r % Wp < W).
    rv = jnp.arange(Lm, dtype=jnp.int32)
    valid = ((rv < H * Wp) & ((rv % Wp) < W)).astype(f32)[:, None]    # (Lm, 1)

    n_valid = float(N * H * W)

    # Per-step VMEM estimate: double-buffered image blocks + resident weights +
    # in-kernel f32 temporaries (frame, tap realigns, accumulator).  Clamp to
    # 48 MiB so the request is always safe on v7x's 64 MiB physical VMEM.
    est = (2 * 4 * L * Cp          # x_flat block, f32, double buffered
           + 2 * 9 * Cp * Cp       # weights, bf16, resident
           + 2 * 2 * 2 * Lm * Cp   # y1/y2 blocks, bf16, double buffered
           + 4 * Lf * Cp           # conv2 frame, f32
           + 4 * 4 * Lm * Cp)      # acc + h + tap realign temporaries, f32
    vmem_limit = int(min(max(2 * est, 32 * 2 ** 20), 48 * 2 ** 20))
    cparams = pltpu.CompilerParams(dimension_semantics=("parallel",),
                                   vmem_limit_bytes=vmem_limit)

    # ---- stage 1: conv1 (bf16 MXU) + per-image BN1 partial sums ------------
    k1 = functools.partial(_conv1_stats_kernel, Wp=Wp, Lm=Lm)
    y1, st1 = pl.pallas_call(
        k1,
        grid=(N,),
        in_specs=[
            pl.BlockSpec((1, L, Cp), lambda n: (n, 0, 0)),
            _invariant_spec((9, Cp, Cp), lambda n: (0, 0, 0)),
            _invariant_spec((Lm, 1), lambda n: (0, 0)),
        ],
        out_specs=(
            pl.BlockSpec((1, Lm, Cp), lambda n: (n, 0, 0)),
            pl.BlockSpec((1, 2, Cp), lambda n: (n, 0, 0)),
        ),
        out_shape=(
            jax.ShapeDtypeStruct((N, Lm, Cp), bf16),
            jax.ShapeDtypeStruct((N, 2, Cp), f32),
        ),
        compiler_params=cparams,
    )(x_flat, w1c, valid)

    def bn_affine(stats, g, b):
        s = jnp.sum(stats, axis=0)                             # tiny (2, Cp) f32 reduce
        mean = s[0] / n_valid
        var = jnp.maximum(s[1] / n_valid - mean * mean, 0.0)   # clamp f32 cancellation
        gp = jnp.pad(g.astype(f32), (0, Cp - g.shape[0]))
        bp = jnp.pad(b.astype(f32), (0, Cp - b.shape[0]))
        inv = gp * lax.rsqrt(var + EPS)
        return inv[None, :], (bp - mean * inv)[None, :]        # (1, Cp) scale, shift

    scale1, shift1 = bn_affine(st1, g1, b1)

    # ---- stage 2: BN1 + ReLU + conv2 (bf16 MXU) + per-image BN2 partials ---
    k2 = functools.partial(_bnrelu_conv2_stats_kernel, Wp=Wp, Lm=Lm, pre=pre, Lf=Lf)
    y2, st2 = pl.pallas_call(
        k2,
        grid=(N,),
        in_specs=[
            pl.BlockSpec((1, Lm, Cp), lambda n: (n, 0, 0)),
            _invariant_spec((1, Cp), lambda n: (0, 0)),
            _invariant_spec((1, Cp), lambda n: (0, 0)),
            _invariant_spec((9, Cp, Cp), lambda n: (0, 0, 0)),
            _invariant_spec((Lm, 1), lambda n: (0, 0)),
        ],
        out_specs=(
            pl.BlockSpec((1, Lm, Cp), lambda n: (n, 0, 0)),
            pl.BlockSpec((1, 2, Cp), lambda n: (n, 0, 0)),
        ),
        out_shape=(
            jax.ShapeDtypeStruct((N, Lm, Cp), bf16),
            jax.ShapeDtypeStruct((N, 2, Cp), f32),
        ),
        compiler_params=cparams,
    )(y1, scale1, shift1, w2c, valid)

    scale2, shift2 = bn_affine(st2, g2, b2)

    # ---- stage 3: BN2 + identity add + ReLU (identity read from x_flat) ----
    k3 = functools.partial(_bn_add_relu_kernel, Wp=Wp, Lm=Lm)
    out_flat = pl.pallas_call(
        k3,
        grid=(N,),
        in_specs=[
            pl.BlockSpec((1, Lm, Cp), lambda n: (n, 0, 0)),
            pl.BlockSpec((1, L, Cp), lambda n: (n, 0, 0)),
            _invariant_spec((1, Cp), lambda n: (0, 0)),
            _invariant_spec((1, Cp), lambda n: (0, 0)),
        ],
        out_specs=pl.BlockSpec((1, Lm, Cp), lambda n: (n, 0, 0)),
        out_shape=jax.ShapeDtypeStruct((N, Lm, Cp), f32),
        compiler_params=cparams,
    )(y2, x_flat, scale2, shift2)

    # drop halo columns / padded rows / padded channels, back to NCHW
    out = out_flat[:, :H * Wp, :].reshape(N, H, Wp, Cp)[:, :, :W, :Cout]
    return jnp.transpose(out, (0, 3, 1, 2))


def _reference(x, w1, g1, b1, w2, g2, b2):
    """Pure-JAX reference of the PyTorch forward (training-mode BN), NCHW."""
    def conv3x3(x, w):
        return lax.conv_general_dilated(
            x, w, window_strides=(1, 1), padding="SAME",
            dimension_numbers=("NCHW", "OIHW", "NCHW"),
            precision=lax.Precision.HIGHEST)

    def bn(x, g, b):
        mean = jnp.mean(x, axis=(0, 2, 3), keepdims=True)
        var = jnp.mean((x - mean) ** 2, axis=(0, 2, 3), keepdims=True)
        return ((x - mean) * lax.rsqrt(var + EPS)
                * g.reshape(1, -1, 1, 1) + b.reshape(1, -1, 1, 1))

    out = jax.nn.relu(bn(conv3x3(x, w1), g1, b1))
    out = bn(conv3x3(out, w2), g2, b2)
    return jax.nn.relu(out + x)


if __name__ == "__main__":
    N, C, H, W = 2, 4, 16, 16      # in_channels = out_channels = 4, stride = 1
    key = jax.random.PRNGKey(0)
    kx, kw1, kw2 = jax.random.split(key, 3)

    x = jax.random.normal(kx, (N, C, H, W), dtype=jnp.float32)
    w1 = jax.random.normal(kw1, (C, C, 3, 3), dtype=jnp.float32) * 0.1
    w2 = jax.random.normal(kw2, (C, C, 3, 3), dtype=jnp.float32) * 0.1
    # BatchNorm2d default init: weight (gamma) = 1, bias (beta) = 0
    g1 = jnp.ones((C,), jnp.float32)
    b1 = jnp.zeros((C,), jnp.float32)
    g2 = jnp.ones((C,), jnp.float32)
    b2 = jnp.zeros((C,), jnp.float32)

    out = residual_block(x, w1, g1, b1, w2, g2, b2)
    out = jax.block_until_ready(out)

    ref = _reference(x, w1, g1, b1, w2, g2, b2)
    assert out.shape == (N, C, H, W)
    # Tolerance sized for bf16 MXU operands + bf16 inter-stage activations
    # (BN stats and affine math are kept in f32).
    assert jnp.allclose(out, ref, atol=2.5e-2, rtol=2.5e-2), (
        f"max abs err {jnp.max(jnp.abs(out - ref))}")

    print("KERNEL_OK")
</pallas_src>

<mosaic_0001>
module attributes {stable_mosaic.version = 11 : i64} {
  func.func @_probe_copy_kernel(%arg0: i32, %arg1: memref<8x128xf32, #tpu.memory_space<vmem>>, %arg2: memref<8x128xf32, #tpu.memory_space<vmem>>) attributes {dimension_semantics = [#tpu.dimension_semantics<arbitrary>], iteration_bounds = array<i64: 2>, scalar_prefetch = 0 : i64, scratch_operands = 0 : i64, tpu.core_type = #tpu.core_type<tc>, window_params = [{pipeline_mode = #tpu.pipeline_mode<synchronous>, transform_indices = @transform_0, window_bounds = array<i64: 8, 128>}, {pipeline_mode = #tpu.pipeline_mode<synchronous>, transform_indices = @transform_1, window_bounds = array<i64: 8, 128>}]} {
    %c0 = arith.constant 0 : index
    %c0_0 = arith.constant 0 : index
    %0 = vector.load %arg1[%c0, %c0_0] : memref<8x128xf32, #tpu.memory_space<vmem>>, vector<8x128xf32>
    %c0_1 = arith.constant 0 : index
    %c0_2 = arith.constant 0 : index
    %1 = vector.load %arg2[%c0_1, %c0_2] : memref<8x128xf32, #tpu.memory_space<vmem>>, vector<8x128xf32>
    tpu.vector_store %arg2[%c0_1, %c0_2], %0 {strides = array<i32>} : memref<8x128xf32, #tpu.memory_space<vmem>>, vector<8x128xf32>,
    return
  }
  func.func @transform_0(%arg0: i32) -> (i32, i32) {
    %c0_i32 = arith.constant 0 : i32
    %c0_i32_0 = arith.constant 0 : i32
    %c0_i32_1 = arith.constant 0 : i32
    return %c0_i32, %c0_i32_0 : i32, i32
  }
  func.func @transform_1(%arg0: i32) -> (i32, i32) {
    %c0_i32 = arith.constant 0 : i32
    %c0_i32_0 = arith.constant 0 : i32
    %c0_i32_1 = arith.constant 0 : i32
    return %c0_i32, %c0_i32_0 : i32, i32
  }
}

module attributes {stable_mosaic.version = 11 : i64} {
  func.func @_conv1_stats_kernel(%arg0: i32, %arg1: memref<1x328x128xf32, #tpu.memory_space<vmem>>, %arg2: memref<9x128x128xbf16, #tpu.memory_space<vmem>>, %arg3: memref<288x1xf32, #tpu.memory_space<vmem>>, %arg4: memref<1x288x128xbf16, #tpu.memory_space<vmem>>, %arg5: memref<1x2x128xf32, #tpu.memory_space<vmem>>) attributes {dimension_semantics = [#tpu.dimension_semantics<parallel>], iteration_bounds = array<i64: 2>, scalar_prefetch = 0 : i64, scratch_operands = 0 : i64, tpu.core_type = #tpu.core_type<tc>, window_params = [{transform_indices = @transform_0, window_bounds = array<i64: 1, 328, 128>}, {pipeline_mode = #tpu.pipeline_mode<synchronous>, transform_indices = @transform_1, window_bounds = array<i64: 9, 128, 128>}, {pipeline_mode = #tpu.pipeline_mode<synchronous>, transform_indices = @transform_2, window_bounds = array<i64: 288, 1>}, {transform_indices = @transform_3, window_bounds = array<i64: 1, 288, 128>}, {transform_indices = @transform_4, window_bounds = array<i64: 1, 2, 128>}]} {
    %c0 = arith.constant 0 : index
    %c0_0 = arith.constant 0 : index
    %c0_1 = arith.constant 0 : index
    %0 = vector.load %arg1[%c0, %c0_0, %c0_1] : memref<1x328x128xf32, #tpu.memory_space<vmem>>, vector<1x328x128xf32>
    %1 = vector.shape_cast %0 : vector<1x328x128xf32> to vector<328x128xf32>
    %2 = vector.extract_strided_slice %1 {offsets = [0, 0], sizes = [288, 128], strides = [1, 1]} : vector<328x128xf32> to vector<288x128xf32>
    %3 = arith.truncf %2 : vector<288x128xf32> to vector<288x128xbf16>
    %c0_2 = arith.constant 0 : index
    %c0_3 = arith.constant 0 : index
    %c0_4 = arith.constant 0 : index
    %4 = vector.load %arg2[%c0_2, %c0_3, %c0_4] : memref<9x128x128xbf16, #tpu.memory_space<vmem>>, vector<1x128x128xbf16>
    %5 = vector.shape_cast %4 : vector<1x128x128xbf16> to vector<128x128xbf16>
    %cst = arith.constant dense<0.000000e+00> : vector<288x128xf32>
    %6 = tpu.matmul %3, %5, %cst {dimension_numbers = #tpu.dot_dimension_numbers<[1], [0], [0], [1], [0, 0, 1, 1], [], []>} : vector<288x128xbf16>, vector<128x128xbf16>, vector<288x128xf32> -> vector<288x128xf32>
    %7 = vector.extract_strided_slice %1 {offsets = [1, 0], sizes = [288, 128], strides = [1, 1]} : vector<328x128xf32> to vector<288x128xf32>
    %8 = arith.truncf %7 : vector<288x128xf32> to vector<288x128xbf16>
    %c1 = arith.constant 1 : index
    %c0_5 = arith.constant 0 : index
    %c0_6 = arith.constant 0 : index
    %9 = vector.load %arg2[%c1, %c0_5, %c0_6] : memref<9x128x128xbf16, #tpu.memory_space<vmem>>, vector<1x128x128xbf16>
    %10 = vector.shape_cast %9 : vector<1x128x128xbf16> to vector<128x128xbf16>
    %cst_7 = arith.constant dense<0.000000e+00> : vector<288x128xf32>
    %11 = tpu.matmul %8, %10, %cst_7 {dimension_numbers = #tpu.dot_dimension_numbers<[1], [0], [0], [1], [0, 0, 1, 1], [], []>} : vector<288x128xbf16>, vector<128x128xbf16>, vector<288x128xf32> -> vector<288x128xf32>
    %12 = arith.addf %6, %11 : vector<288x128xf32>
    %13 = vector.extract_strided_slice %1 {offsets = [2, 0], sizes = [288, 128], strides = [1, 1]} : vector<328x128xf32> to vector<288x128xf32>
    %14 = arith.truncf %13 : vector<288x128xf32> to vector<288x128xbf16>
    %c2 = arith.constant 2 : index
    %c0_8 = arith.constant 0 : index
    %c0_9 = arith.constant 0 : index
    %15 = vector.load %arg2[%c2, %c0_8, %c0_9] : memref<9x128x128xbf16, #tpu.memory_space<vmem>>, vector<1x128x128xbf16>
    %16 = vector.shape_cast %15 : vector<1x128x128xbf16> to vector<128x128xbf16>
    %cst_10 = arith.constant dense<0.000000e+00> : vector<288x128xf32>
    %17 = tpu.matmul %14, %16, %cst_10 {dimension_numbers = #tpu.dot_dimension_numbers<[1], [0], [0], [1], [0, 0, 1, 1], [], []>} : vector<288x128xbf16>, vector<128x128xbf16>, vector<288x128xf32> -> vector<288x128xf32>
    %18 = arith.addf %12, %17 : vector<288x128xf32>
    %19 = vector.extract_strided_slice %1 {offsets = [18, 0], sizes = [288, 128], strides = [1, 1]} : vector<328x128xf32> to vector<288x128xf32>
    %20 = arith.truncf %19 : vector<288x128xf32> to vector<288x128xbf16>
    %c3 = arith.constant 3 : index
    %c0_11 = arith.constant 0 : index
    %c0_12 = arith.constant 0 : index
    %21 = vector.load %arg2[%c3, %c0_11, %c0_12] : memref<9x128x128xbf16, #tpu.memory_space<vmem>>, vector<1x128x128xbf16>
    %22 = vector.shape_cast %21 : vector<1x128x128xbf16> to vector<128x128xbf16>
    %cst_13 = arith.constant dense<0.000000e+00> : vector<288x128xf32>
    %23 = tpu.matmul %20, %22, %cst_13 {dimension_numbers = #tpu.dot_dimension_numbers<[1], [0], [0], [1], [0, 0, 1, 1], [], []>} : vector<288x128xbf16>, vector<128x128xbf16>, vector<288x128xf32> -> vector<288x128xf32>
    %24 = arith.addf %18, %23 : vector<288x128xf32>
    %25 = vector.extract_strided_slice %1 {offsets = [19, 0], sizes = [288, 128], strides = [1, 1]} : vector<328x128xf32> to vector<288x128xf32>
    %26 = arith.truncf %25 : vector<288x128xf32> to vector<288x128xbf16>
    %c4 = arith.constant 4 : index
    %c0_14 = arith.constant 0 : index
    %c0_15 = arith.constant 0 : index
    %27 = vector.load %arg2[%c4, %c0_14, %c0_15] : memref<9x128x128xbf16, #tpu.memory_space<vmem>>, vector<1x128x128xbf16>
    %28 = vector.shape_cast %27 : vector<1x128x128xbf16> to vector<128x128xbf16>
    %cst_16 = arith.constant dense<0.000000e+00> : vector<288x128xf32>
    %29 = tpu.matmul %26, %28, %cst_16 {dimension_numbers = #tpu.dot_dimension_numbers<[1], [0], [0], [1], [0, 0, 1, 1], [], []>} : vector<288x128xbf16>, vector<128x128xbf16>, vector<288x128xf32> -> vector<288x128xf32>
    %30 = arith.addf %24, %29 : vector<288x128xf32>
    %31 = vector.extract_strided_slice %1 {offsets = [20, 0], sizes = [288, 128], strides = [1, 1]} : vector<328x128xf32> to vector<288x128xf32>
    %32 = arith.truncf %31 : vector<288x128xf32> to vector<288x128xbf16>
    %c5 = arith.constant 5 : index
    %c0_17 = arith.constant 0 : index
    %c0_18 = arith.constant 0 : index
    %33 = vector.load %arg2[%c5, %c0_17, %c0_18] : memref<9x128x128xbf16, #tpu.memory_space<vmem>>, vector<1x128x128xbf16>
    %34 = vector.shape_cast %33 : vector<1x128x128xbf16> to vector<128x128xbf16>
    %cst_19 = arith.constant dense<0.000000e+00> : vector<288x128xf32>
    %35 = tpu.matmul %32, %34, %cst_19 {dimension_numbers = #tpu.dot_dimension_numbers<[1], [0], [0], [1], [0, 0, 1, 1], [], []>} : vector<288x128xbf16>, vector<128x128xbf16>, vector<288x128xf32> -> vector<288x128xf32>
    %36 = arith.addf %30, %35 : vector<288x128xf32>
    %37 = vector.extract_strided_slice %1 {offsets = [36, 0], sizes = [288, 128], strides = [1, 1]} : vector<328x128xf32> to vector<288x128xf32>
    %38 = arith.truncf %37 : vector<288x128xf32> to vector<288x128xbf16>
    %c6 = arith.constant 6 : index
    %c0_20 = arith.constant 0 : index
    %c0_21 = arith.constant 0 : index
    %39 = vector.load %arg2[%c6, %c0_20, %c0_21] : memref<9x128x128xbf16, #tpu.memory_space<vmem>>, vector<1x128x128xbf16>
    %40 = vector.shape_cast %39 : vector<1x128x128xbf16> to vector<128x128xbf16>
    %cst_22 = arith.constant dense<0.000000e+00> : vector<288x128xf32>
    %41 = tpu.matmul %38, %40, %cst_22 {dimension_numbers = #tpu.dot_dimension_numbers<[1], [0], [0], [1], [0, 0, 1, 1], [], []>} : vector<288x128xbf16>, vector<128x128xbf16>, vector<288x128xf32> -> vector<288x128xf32>
    %42 = arith.addf %36, %41 : vector<288x128xf32>
    %43 = vector.extract_strided_slice %1 {offsets = [37, 0], sizes = [288, 128], strides = [1, 1]} : vector<328x128xf32> to vector<288x128xf32>
    %44 = arith.truncf %43 : vector<288x128xf32> to vector<288x128xbf16>
    %c7 = arith.constant 7 : index
    %c0_23 = arith.constant 0 : index
    %c0_24 = arith.constant 0 : index
    %45 = vector.load %arg2[%c7, %c0_23, %c0_24] : memref<9x128x128xbf16, #tpu.memory_space<vmem>>, vector<1x128x128xbf16>
    %46 = vector.shape_cast %45 : vector<1x128x128xbf16> to vector<128x128xbf16>
    %cst_25 = arith.constant dense<0.000000e+00> : vector<288x128xf32>
    %47 = tpu.matmul %44, %46, %cst_25 {dimension_numbers = #tpu.dot_dimension_numbers<[1], [0], [0], [1], [0, 0, 1, 1], [], []>} : vector<288x128xbf16>, vector<128x128xbf16>, vector<288x128xf32> -> vector<288x128xf32>
    %48 = arith.addf %42, %47 : vector<288x128xf32>
    %49 = vector.extract_strided_slice %1 {offsets = [38, 0], sizes = [288, 128], strides = [1, 1]} : vector<328x128xf32> to vector<288x128xf32>
    %50 = arith.truncf %49 : vector<288x128xf32> to vector<288x128xbf16>
    %c8 = arith.constant 8 : index
    %c0_26 = arith.constant 0 : index
    %c0_27 = arith.constant 0 : index
    %51 = vector.load %arg2[%c8, %c0_26, %c0_27] : memref<9x128x128xbf16, #tpu.memory_space<vmem>>, vector<1x128x128xbf16>
    %52 = vector.shape_cast %51 : vector<1x128x128xbf16> to vector<128x128xbf16>
    %cst_28 = arith.constant dense<0.000000e+00> : vector<288x128xf32>
    %53 = tpu.matmul %50, %52, %cst_28 {dimension_numbers = #tpu.dot_dimension_numbers<[1], [0], [0], [1], [0, 0, 1, 1], [], []>} : vector<288x128xbf16>, vector<128x128xbf16>, vector<288x128xf32> -> vector<288x128xf32>
    %54 = arith.addf %48, %53 : vector<288x128xf32>
    %55 = arith.truncf %54 : vector<288x128xf32> to vector<288x128xbf16>
    %c0_29 = arith.constant 0 : index
    %c0_30 = arith.constant 0 : index
    %c0_31 = arith.constant 0 : index
    %56 = vector.load %arg4[%c0_29, %c0_30, %c0_31] : memref<1x288x128xbf16, #tpu.memory_space<vmem>>, vector<1x288x128xbf16>
    %57 = vector.shape_cast %56 : vector<1x288x128xbf16> to vector<288x128xbf16>
    %58 = vector.shape_cast %55 : vector<288x128xbf16> to vector<1x288x128xbf16>
    tpu.vector_store %arg4[%c0_29, %c0_30, %c0_31], %58 {strides = array<i32>} : memref<1x288x128xbf16, #tpu.memory_space<vmem>>, vector<1x288x128xbf16>,
    %c0_32 = arith.constant 0 : index
    %c0_33 = arith.constant 0 : index
    %59 = vector.load %arg3[%c0_32, %c0_33] : memref<288x1xf32, #tpu.memory_space<vmem>>, vector<288x1xf32>
    %60 = vector.broadcast %59 : vector<288x1xf32> to vector<288x128xf32>
    %61 = arith.mulf %54, %60 : vector<288x128xf32>
    %cst_34 = arith.constant dense<0.000000e+00> : vector<128xf32>
    %62 = vector.multi_reduction <add>, %61, %cst_34 [0] : vector<288x128xf32> to vector<128xf32>
    %63 = vector.shape_cast %62 : vector<128xf32> to vector<1x128xf32>
    %64 = arith.mulf %61, %61 : vector<288x128xf32>
    %cst_35 = arith.constant dense<0.000000e+00> : vector<128xf32>
    %65 = vector.multi_reduction <add>, %64, %cst_35 [0] : vector<288x128xf32> to vector<128xf32>
    %66 = vector.shape_cast %65 : vector<128xf32> to vector<1x128xf32>
    %67 = tpu.concatenate %63, %66 in 0 : vector<1x128xf32>, vector<1x128xf32> -> vector<2x128xf32>
    %c0_36 = arith.constant 0 : index
    %c0_37 = arith.constant 0 : index
    %c0_38 = arith.constant 0 : index
    %68 = vector.load %arg5[%c0_36, %c0_37, %c0_38] : memref<1x2x128xf32, #tpu.memory_space<vmem>>, vector<1x2x128xf32>
    %69 = vector.shape_cast %68 : vector<1x2x128xf32> to vector<2x128xf32>
    %70 = vector.shape_cast %67 : vector<2x128xf32> to vector<1x2x128xf32>
    tpu.vector_store %arg5[%c0_36, %c0_37, %c0_38], %70 {strides = array<i32>} : memref<1x2x128xf32, #tpu.memory_space<vmem>>, vector<1x2x128xf32>,
    return
  }
  func.func @transform_0(%arg0: i32) -> (i32, i32, i32) {
    %c0_i32 = arith.constant 0 : i32
    %c0_i32_0 = arith.constant 0 : i32
    %c0_i32_1 = arith.constant 0 : i32
    return %arg0, %c0_i32, %c0_i32_0 : i32, i32, i32
  }
  func.func @transform_1(%arg0: i32) -> (i32, i32, i32) {
    %c0_i32 = arith.constant 0 : i32
    %c0_i32_0 = arith.constant 0 : i32
    %c0_i32_1 = arith.constant 0 : i32
    %c0_i32_2 = arith.constant 0 : i32
    return %c0_i32, %c0_i32_0, %c0_i32_1 : i32, i32, i32
  }
  func.func @transform_2(%arg0: i32) -> (i32, i32) {
    %c0_i32 = arith.constant 0 : i32
    %c0_i32_0 = arith.constant 0 : i32
    %c0_i32_1 = arith.constant 0 : i32
    return %c0_i32, %c0_i32_0 : i32, i32
  }
  func.func @transform_3(%arg0: i32) -> (i32, i32, i32) {
    %c0_i32 = arith.constant 0 : i32
    %c0_i32_0 = arith.constant 0 : i32
    %c0_i32_1 = arith.constant 0 : i32
    return %arg0, %c0_i32, %c0_i32_0 : i32, i32, i32
  }
  func.func @transform_4(%arg0: i32) -> (i32, i32, i32) {
    %c0_i32 = arith.constant 0 : i32
    %c0_i32_0 = arith.constant 0 : i32
    %c0_i32_1 = arith.constant 0 : i32
    return %arg0, %c0_i32, %c0_i32_0 : i32, i32, i32
  }
}

</mosaic_0001>

<llo_original>
// kernel: tpu_custom_call.1
$region0: #{tpu_custom_call.1}
  #allocation0 [shape = 'u32[]', space=smem, size = 0x4, offset = 0x4, fixed_abs, tag = 'smem constant byte address 0x4 - core index']
  #allocation1 [shape = 'u32[144,128]{1,0:T(1,128)}', space=vmem, size = 0x12000, scoped, tag = 'internal scratch']
  %s0 = inlined_call_operand.hbm [shape: f32[8,128], index: 0, kind: input, shape index: {}]
  %s1 = inlined_call_operand.hbm [shape: f32[8,128], index: 1, kind: output, shape index: {}]
  %s2 = sld [smem:[#allocation0]]
  $region41: #{tpu_custom_call.1} parent=0
    _
  %s4 = ssub.s32 1, %s2
  %s5 = scalar_select 0, %s4, %s2
  $region1: #{tpu_custom_call.1} parent=0
    #allocation2 [shape = 'u8[4096]{0}', space=vmem, size = 0x1000, scoped, tag = 'input window, operand 0, single buffered']
    #allocation3 [shape = 's32[2]{0}', space=sflag, size = 0x8, scoped, tag = 'scoped memory for tpu_custom_call.1']
    #allocation4 [shape = 's32[2]{0}', space=sflag, size = 0x8, scoped, tag = 'scoped memory for tpu_custom_call.1']
    #allocation5 [shape = 'u8[4096]{0}', space=vmem, size = 0x1000, scoped, tag = 'output window, operand 0, single buffered']
    %6 = vsyncpa [#allocation3], 0
    %7 = vsyncpa [#allocation4], 0
    loop: start=0, step=1, limit=4
    $region2: #{tpu_custom_call.1} parent=1 // loop_pre_header
      _
    $region3: #{tpu_custom_call.1} parent=1 // loop_header
      %s9 = sphi 0, %s13
      %p10 = scmp.ge.s32.totalorder %s9, 4
      %s17 = sphi 0, %s17
      %s19 = sphi 0, %s17
      %s20 = sphi 0, %s19
      %s34 = sphi 0, %s20
      %s38 = sphi 0, %s38
      %s40 = sphi 0, %s38
      %s41 = sphi 0, %s40
      %s55 = sphi 0, %s41
    $region4: #{tpu_custom_call.1} parent=1 // loop_header_branch
      %12 = sbr.rel (%p10) target = $region8
    $region5: #{tpu_custom_call.1} parent=1 // loop_body
      %s14 = ssub.s32 %s9, 1
      %s15 = ssub.s32 %s9, 2
      %s16 = sadd.s32 %s9, 1
      %s18 = sadd.s32 %s17, 1
      %p21 = scmp.eq.s32.totalorder %s9, 1
      %p22 = scmp.ne.s32.totalorder %s17, %s19
      %p23 = scmp.eq.s32.totalorder %s9, 0
      %p24 = por %p22, %p23
      %p25 = scmp.ne.s32.totalorder %s17, %s19
      %p26 = scmp.eq.s32.totalorder %s14, 1
      %p27 = por %p25, %p26
      %p28 = scmp.ne.s32.totalorder %s19, %s20
      %p29 = scmp.eq.s32.totalorder %s14, 0
      %p30 = por %p28, %p29
      %p31 = scmp.ne.s32.totalorder %s19, %s20
      %p32 = scmp.eq.s32.totalorder %s15, 1
      %p33 = por %p31, %p32
      %p35 = scmp.ne.s32.totalorder %s20, %s34
      %p36 = scmp.eq.s32.totalorder %s15, 0
      %p37 = por %p35, %p36
      %s39 = sadd.s32 %s38, 1
      %p42 = scmp.eq.s32.totalorder %s9, 1
      %p43 = scmp.ne.s32.totalorder %s38, %s40
      %p44 = scmp.eq.s32.totalorder %s9, 0
      %p45 = por %p43, %p44
      %p46 = scmp.ne.s32.totalorder %s38, %s40
      %p47 = scmp.eq.s32.totalorder %s14, 1
      %p48 = por %p46, %p47
      %p49 = scmp.ne.s32.totalorder %s40, %s41
      %p50 = scmp.eq.s32.totalorder %s14, 0
      %p51 = por %p49, %p50
      %p52 = scmp.ne.s32.totalorder %s40, %s41
      %p53 = scmp.eq.s32.totalorder %s15, 1
      %p54 = por %p52, %p53
      %p56 = scmp.ne.s32.totalorder %s41, %s55
      %p57 = scmp.eq.s32.totalorder %s15, 0
      %p58 = por %p56, %p57
      %p59 = scmp.le.s32.totalorder 1, %s9
      %p60 = scmp.lt.s32.totalorder %s9, 3
      %p61 = pnand %p59, %p60
      %p62 = pneg %p61
      // Predicated region
      $region9: #{tpu_custom_call.1} parent=5 // pred_check
        _
      $region10: #{tpu_custom_call.1} parent=5 // pred_check_branch
        %64 = sbr.rel (%p61) target = $region12
      $region11: #{tpu_custom_call.1} parent=5 // pred_region
        %s65 = ssub.s32 %s9, 1
        // Predicated region
        $region13: #{tpu_custom_call.1} parent=11 // pred_check
          %p66 = pneg %p30
        $region14: #{tpu_custom_call.1} parent=11 // pred_check_branch
          %68 = sbr.rel (%p66) target = $region16
        $region15: #{tpu_custom_call.1} parent=11 // pred_region
          %s70 = ssub.s32 128, 128
          %71 = vsyncadd [#allocation3], %s70
          %s73 = sshll.u32 [#allocation2], 4
          %s74 = int_to_ptr.vmem [resolvable:$true] %s73
          %76 = dma.hbm_to_vmem [thread:$0]  %s0, 128, %s74, [#allocation3]
        $region16: #{tpu_custom_call.1} parent=11 // pred_fallthru
          _
      $region12: #{tpu_custom_call.1} parent=5 // pred_fallthru
        _
      %p77 = scmp.lt.s32.totalorder %s9, 2
      // Predicated region
      $region17: #{tpu_custom_call.1} parent=5 // pred_check
        %p78 = pneg %p77
      $region18: #{tpu_custom_call.1} parent=5 // pred_check_branch
        %80 = sbr.rel (%p78) target = $region20
      $region19: #{tpu_custom_call.1} parent=5 // pred_region
        _
      $region20: #{tpu_custom_call.1} parent=5 // pred_fallthru
        _
      %p81 = scmp.le.s32.totalorder 1, %s9
      %p82 = scmp.lt.s32.totalorder %s9, 3
      %p83 = pnand %p81, %p82
      %p84 = pneg %p83
      // Predicated region
      $region21: #{tpu_custom_call.1} parent=5 // pred_check
        _
      $region22: #{tpu_custom_call.1} parent=5 // pred_check_branch
        %86 = sbr.rel (%p83) target = $region24
      $region23: #{tpu_custom_call.1} parent=5 // pred_region
        %s87 = ssub.s32 %s9, 1
        // Predicated region
        $region25: #{tpu_custom_call.1} parent=23 // pred_check
          %p88 = pneg %p30
        $region26: #{tpu_custom_call.1} parent=23 // pred_check_branch
          %90 = sbr.rel (%p88) target = $region28
        $region27: #{tpu_custom_call.1} parent=23 // pred_region
          %91 = dma.done [#allocation3], 128
        $region28: #{tpu_custom_call.1} parent=23 // pred_fallthru
          _
        %p92 = pneg %p30
        %p93 = pneg %p27
        %p94 = pneg %p51
        %p95 = pneg %p48
        %v96 = vld [vmem:[#allocation2] sm:$0xff]
        %97 = vst [vmem:[#allocation5] sm:$0xff] %v96
        // Predicated region
        $region29: #{tpu_custom_call.1} parent=23 // pred_check
          %p98 = pneg %p48
        $region30: #{tpu_custom_call.1} parent=23 // pred_check_branch
          %100 = sbr.rel (%p98) target = $region32
        $region31: #{tpu_custom_call.1} parent=23 // pred_region
          %s102 = ssub.s32 128, 128
          %103 = vsyncadd [#allocation4], %s102
          %s105 = sshll.u32 [#allocation5], 4
          %s106 = int_to_ptr.vmem [resolvable:$true] %s105
          %108 = dma.vmem_to_hbm [thread:$0]  %s106, 128, %s1, [#allocation4]
        $region32: #{tpu_custom_call.1} parent=23 // pred_fallthru
          _
        // Predicated region
        $region33: #{tpu_custom_call.1} parent=23 // pred_check
          %p109 = pneg %p48
        $region34: #{tpu_custom_call.1} parent=23 // pred_check_branch
          %111 = sbr.rel (%p109) target = $region36
        $region35: #{tpu_custom_call.1} parent=23 // pred_region
          %112 = dma.done [#allocation4], 128
        $region36: #{tpu_custom_call.1} parent=23 // pred_fallthru
          _
      $region24: #{tpu_custom_call.1} parent=5 // pred_fallthru
        _
      %p113 = scmp.le.s32.totalorder 2, %s9
      // Predicated region
      $region37: #{tpu_custom_call.1} parent=5 // pred_check
        %p114 = pneg %p113
      $region38: #{tpu_custom_call.1} parent=5 // pred_check_branch
        %116 = sbr.rel (%p114) target = $region40
      $region39: #{tpu_custom_call.1} parent=5 // pred_region
        %s117 = ssub.s32 %s9, 2
      $region40: #{tpu_custom_call.1} parent=5 // pred_fallthru
        _
    $region6: #{tpu_custom_call.1} parent=1 // loop_footer
      %s13 = sadd.s32 1, %s9
    $region7: #{tpu_custom_call.1} parent=1 // loop_footer_branch
      %8 = sbr.rel target = $region3
    $region8: #{tpu_custom_call.1} parent=1 // loop_exit
      _
    %118 = vsyncpa [#allocation3], 1
    %s119 = scalar_lea.sflag [#allocation3], 1
    %120 = vsyncpa %s119, 1
    %121 = vsyncpa [#allocation4], 1
    %s122 = scalar_lea.sflag [#allocation4], 1
    %123 = vsyncpa %s122, 1

// kernel: tpu_custom_call.1
$region0: #{tpu_custom_call.1}
  #allocation0 [shape = 'u32[]', space=smem, size = 0x4, offset = 0x4, fixed_abs, tag = 'smem constant byte address 0x4 - core index']
  #allocation1 [shape = 'u32[144,128]{1,0:T(1,128)}', space=vmem, size = 0x12000, scoped, tag = 'internal scratch']
  %s0 = inlined_call_operand.hbm [shape: f32[2,328,128], index: 0, kind: input, shape index: {}]
  %s1 = inlined_call_operand.hbm [shape: bf16[9,128,128], index: 1, kind: input, shape index: {}]
  %s2 = inlined_call_operand.vmem [shape: f32[288,1], index: 2, kind: input, shape index: {}]
  %s3 = inlined_call_operand.hbm [shape: bf16[2,288,128], index: 3, kind: output, shape index: {0}]
  %s4 = inlined_call_operand.hbm [shape: f32[2,2,128], index: 4, kind: output, shape index: {1}]
  %5 = xla_tuple %s3, %s4
  %s6 = sld [smem:[#allocation0]]
  $region61: #{tpu_custom_call.1} parent=0
    _
  %s8 = ssub.s32 1, %s6
  %s9 = scalar_select 0, %s8, %s6
  $region1: #{tpu_custom_call.1} parent=0
    #allocation2 [shape = 'u8[335872]{0}', space=vmem, size = 0x52000, scoped, tag = 'input window, operand 0']
    #allocation3 [shape = 's32[2]{0}', space=sflag, size = 0x8, scoped, tag = 'scoped memory for tpu_custom_call.1']
    #allocation4 [shape = 's32[2]{0}', space=sflag, size = 0x8, scoped, tag = 'scoped memory for tpu_custom_call.1']
    #allocation5 [shape = 'u8[294912]{0}', space=vmem, size = 0x48000, scoped, tag = 'input window, operand 1, single buffered']
    #allocation6 [shape = 's32[1]{0}', space=sflag, size = 0x4, scoped, tag = 'scoped memory for tpu_custom_call.1']
    #allocation7 [shape = 'u8[147456]{0}', space=vmem, size = 0x24000, scoped, tag = 'output window, operand 0']
    #allocation8 [shape = 'u8[2048]{0}', space=vmem, size = 0x800, scoped, tag = 'output window, operand 1']
    #allocation9 [shape = 's32[2]{0}', space=sflag, size = 0x8, scoped, tag = 'scoped memory for tpu_custom_call.1']
    %10 = vsyncpa [#allocation3], 0
    %s11 = scalar_lea.sflag [#allocation3], 1
    %12 = vsyncpa %s11, 0
    %13 = vsyncpa [#allocation6], 0
    %14 = vsyncpa [#allocation4], 0
    %s15 = scalar_lea.sflag [#allocation4], 1
    %16 = vsyncpa %s15, 0
    %17 = vsyncpa [#allocation9], 0
    %s18 = scalar_lea.sflag [#allocation9], 1
    %19 = vsyncpa %s18, 0
    loop: start=0, step=1, limit=4
    $region2: #{tpu_custom_call.1} parent=1 // loop_pre_header
      _
    $region3: #{tpu_custom_call.1} parent=1 // loop_header
      %s21 = sphi 0, %s25
      %p22 = scmp.ge.s32.totalorder %s21, 4
      %s31 = sphi 0, %s33
      %s34 = sphi 0, %s31
      %s35 = sphi 0, %s34
      %s51 = sphi 0, %s35
      %s55 = sphi 0, %s55
      %s57 = sphi 0, %s55
      %s58 = sphi 0, %s57
      %s72 = sphi 0, %s58
      %s76 = sphi 0, %s76
      %s78 = sphi 0, %s76
      %s79 = sphi 0, %s78
      %s93 = sphi 0, %s79
      %s99 = sphi 0, %s101
      %s102 = sphi 0, %s99
      %s103 = sphi 0, %s102
      %s119 = sphi 0, %s103
      %s125 = sphi 0, %s127
      %s128 = sphi 0, %s125
      %s129 = sphi 0, %s128
      %s145 = sphi 0, %s129
    $region4: #{tpu_custom_call.1} parent=1 // loop_header_branch
      %24 = sbr.rel (%p22) target = $region8
    $region5: #{tpu_custom_call.1} parent=1 // loop_body
      %s26 = ssub.s32 %s21, 1
      %s27 = ssub.s32 %s21, 2
      %s28 = sadd.s32 %s21, 1
      %s29 = ssub.s32 %s21, %s28
      %p30 = scmp.eq.s32.totalorder %s29, 0
      %s32 = sadd.s32 %s31, 1
      %s33 = scalar_select %p30, %s31, %s32
      %p36 = pneg %p30
      %p37 = scmp.eq.s32.totalorder %s21, 1
      %p38 = por %p36, %p37
      %p39 = scmp.ne.s32.totalorder %s31, %s34
      %p40 = scmp.eq.s32.totalorder %s21, 0
      %p41 = por %p39, %p40
      %p42 = scmp.ne.s32.totalorder %s31, %s34
      %p43 = scmp.eq.s32.totalorder %s26, 1
      %p44 = por %p42, %p43
      %p45 = scmp.ne.s32.totalorder %s34, %s35
      %p46 = scmp.eq.s32.totalorder %s26, 0
      %p47 = por %p45, %p46
      %p48 = scmp.ne.s32.totalorder %s34, %s35
      %p49 = scmp.eq.s32.totalorder %s27, 1
      %p50 = por %p48, %p49
      %p52 = scmp.ne.s32.totalorder %s35, %s51
      %p53 = scmp.eq.s32.totalorder %s27, 0
      %p54 = por %p52, %p53
      %s56 = sadd.s32 %s55, 1
      %p59 = scmp.eq.s32.totalorder %s21, 1
      %p60 = scmp.ne.s32.totalorder %s55, %s57
      %p61 = scmp.eq.s32.totalorder %s21, 0
      %p62 = por %p60, %p61
      %p63 = scmp.ne.s32.totalorder %s55, %s57
      %p64 = scmp.eq.s32.totalorder %s26, 1
      %p65 = por %p63, %p64
      %p66 = scmp.ne.s32.totalorder %s57, %s58
      %p67 = scmp.eq.s32.totalorder %s26, 0
      %p68 = por %p66, %p67
      %p69 = scmp.ne.s32.totalorder %s57, %s58
      %p70 = scmp.eq.s32.totalorder %s27, 1
      %p71 = por %p69, %p70
      %p73 = scmp.ne.s32.totalorder %s58, %s72
      %p74 = scmp.eq.s32.totalorder %s27, 0
      %p75 = por %p73, %p74
      %s77 = sadd.s32 %s76, 1
      %p80 = scmp.eq.s32.totalorder %s21, 1
      %p81 = scmp.ne.s32.totalorder %s76, %s78
      %p82 = scmp.eq.s32.totalorder %s21, 0
      %p83 = por %p81, %p82
      %p84 = scmp.ne.s32.totalorder %s76, %s78
      %p85 = scmp.eq.s32.totalorder %s26, 1
      %p86 = por %p84, %p85
      %p87 = scmp.ne.s32.totalorder %s78, %s79
      %p88 = scmp.eq.s32.totalorder %s26, 0
      %p89 = por %p87, %p88
      %p90 = scmp.ne.s32.totalorder %s78, %s79
      %p91 = scmp.eq.s32.totalorder %s27, 1
      %p92 = por %p90, %p91
      %p94 = scmp.ne.s32.totalorder %s79, %s93
      %p95 = scmp.eq.s32.totalorder %s27, 0
      %p96 = por %p94, %p95
      %s97 = ssub.s32 %s21, %s28
      %p98 = scmp.eq.s32.totalorder %s97, 0
      %s100 = sadd.s32 %s99, 1
      %s101 = scalar_select %p98, %s99, %s100
      %p104 = pneg %p98
      %p105 = scmp.eq.s32.totalorder %s21, 1
      %p106 = por %p104, %p105
      %p107 = scmp.ne.s32.totalorder %s99, %s102
      %p108 = scmp.eq.s32.totalorder %s21, 0
      %p109 = por %p107, %p108
      %p110 = scmp.ne.s32.totalorder %s99, %s102
      %p111 = scmp.eq.s32.totalorder %s26, 1
      %p112 = por %p110, %p111
      %p113 = scmp.ne.s32.totalorder %s102, %s103
      %p114 = scmp.eq.s32.totalorder %s26, 0
      %p115 = por %p113, %p114
      %p116 = scmp.ne.s32.totalorder %s102, %s103
      %p117 = scmp.eq.s32.totalorder %s27, 1
      %p118 = por %p116, %p117
      %p120 = scmp.ne.s32.totalorder %s103, %s119
      %p121 = scmp.eq.s32.totalorder %s27, 0
      %p122 = por %p120, %p121
      %s123 = ssub.s32 %s21, %s28
      %p124 = scmp.eq.s32.totalorder %s123, 0
      %s126 = sadd.s32 %s125, 1
      %s127 = scalar_select %p124, %s125, %s126
      %p130 = pneg %p124
      %p131 = scmp.eq.s32.totalorder %s21, 1
      %p132 = por %p130, %p131
      %p133 = scmp.ne.s32.totalorder %s125, %s128
      %p134 = scmp.eq.s32.totalorder %s21, 0
      %p135 = por %p133, %p134
      %p136 = scmp.ne.s32.totalorder %s125, %s128
      %p137 = scmp.eq.s32.totalorder %s26, 1
      %p138 = por %p136, %p137
      %p139 = scmp.ne.s32.totalorder %s128, %s129
      %p140 = scmp.eq.s32.totalorder %s26, 0
      %p141 = por %p139, %p140
      %p142 = scmp.ne.s32.totalorder %s128, %s129
      %p143 = scmp.eq.s32.totalorder %s27, 1
      %p144 = por %p142, %p143
      %p146 = scmp.ne.s32.totalorder %s129, %s145
      %p147 = scmp.eq.s32.totalorder %s27, 0
      %p148 = por %p146, %p147
      %p149 = scmp.le.s32.totalorder 1, %s21
      %p150 = scmp.lt.s32.totalorder %s21, 3
      %p151 = pnand %p149, %p150
      %p152 = pneg %p151
      // Predicated region
      $region9: #{tpu_custom_call.1} parent=5 // pred_check
        _
      $region10: #{tpu_custom_call.1} parent=5 // pred_check_branch
        %154 = sbr.rel (%p151) target = $region12
      $region11: #{tpu_custom_call.1} parent=5 // pred_region
        %s155 = ssub.s32 %s21, 1
        // Predicated region
        $region13: #{tpu_custom_call.1} parent=11 // pred_check
          %p156 = pneg %p68
        $region14: #{tpu_custom_call.1} parent=11 // pred_check_branch
          %158 = sbr.rel (%p156) target = $region16
        $region15: #{tpu_custom_call.1} parent=11 // pred_region
          %s160 = ssub.s32 9216, 9216
          %161 = vsyncadd [#allocation6], %s160
          %s162 = sshll.u32 [#allocation5], 4
          %s163 = int_to_ptr.vmem [resolvable:$true] %s162
          %168 = dma.hbm_to_vmem [thread:$0]  %s1, 9216, %s163, [#allocation6], 64, 64, 4
        $region16: #{tpu_custom_call.1} parent=11 // pred_fallthru
          _
        // Predicated region
        $region17: #{tpu_custom_call.1} parent=11 // pred_check
          %p169 = pneg %p89
        $region18: #{tpu_custom_call.1} parent=11 // pred_check_branch
          %171 = sbr.rel (%p169) target = $region20
        $region19: #{tpu_custom_call.1} parent=11 // pred_region
          _
        $region20: #{tpu_custom_call.1} parent=11 // pred_fallthru
          _
      $region12: #{tpu_custom_call.1} parent=5 // pred_fallthru
        _
      %p172 = scmp.lt.s32.totalorder %s21, 2
      // Predicated region
      $region21: #{tpu_custom_call.1} parent=5 // pred_check
        %p173 = pneg %p172
      $region22: #{tpu_custom_call.1} parent=5 // pred_check_branch
        %175 = sbr.rel (%p173) target = $region24
      $region23: #{tpu_custom_call.1} parent=5 // pred_region
        // Predicated region
        $region25: #{tpu_custom_call.1} parent=23 // pred_check
          %p176 = pneg %p41
        $region26: #{tpu_custom_call.1} parent=23 // pred_check_branch
          %178 = sbr.rel (%p176) target = $region28
        $region27: #{tpu_custom_call.1} parent=23 // pred_region
          %s179 = sand.u32 %s31, 1
          %s180 = scalar_lea.sflag [#allocation3], %s179
          %s181 = sand.u32 %s31, 1
          %s182 = smul.addr %s181, 328
          %s183 = scalar_lea.vmem [#allocation2], %s182
          %s185 = ssub.s32 5248, 5248
          %186 = vsyncadd %s180, %s185
          %s187 = smul.addr %s21, 41
          %s188 = smul.addr %s187, 128
          %s189 = scalar_lea.hbm %s0, %s188
          %s190 = sshll.u32 %s183, 4
          %s191 = int_to_ptr.vmem [resolvable:$true] %s190
          %196 = dma.hbm_to_vmem [thread:$0]  %s189, 5248, %s191, %s180, 128, 128, 8
        $region28: #{tpu_custom_call.1} parent=23 // pred_fallthru
          _
      $region24: #{tpu_custom_call.1} parent=5 // pred_fallthru
        _
      %p197 = scmp.le.s32.totalorder 1, %s21
      %p198 = scmp.lt.s32.totalorder %s21, 3
      %p199 = pnand %p197, %p198
      %p200 = pneg %p199
      // Predicated region
      $region29: #{tpu_custom_call.1} parent=5 // pred_check
        _
      $region30: #{tpu_custom_call.1} parent=5 // pred_check_branch
        %202 = sbr.rel (%p199) target = $region32
      $region31: #{tpu_custom_call.1} parent=5 // pred_region
        %s203 = ssub.s32 %s21, 1
        %s204 = sand.u32 %s34, 1
        %s205 = scalar_lea.sflag [#allocation3], %s204
        %s206 = sand.u32 %s34, 1
        %s207 = smul.addr %s206, 328
        %s208 = scalar_lea.vmem [#allocation2], %s207
        // Predicated region
        $region33: #{tpu_custom_call.1} parent=31 // pred_check
          %p209 = pneg %p47
        $region34: #{tpu_custom_call.1} parent=31 // pred_check_branch
          %211 = sbr.rel (%p209) target = $region36
        $region35: #{tpu_custom_call.1} parent=31 // pred_region
          %212 = dma.done %s205, 5248
        $region36: #{tpu_custom_call.1} parent=31 // pred_fallthru
          _
        // Predicated region
        $region37: #{tpu_custom_call.1} parent=31 // pred_check
          %p213 = pneg %p68
        $region38: #{tpu_custom_call.1} parent=31 // pred_check_branch
          %215 = sbr.rel (%p213) target = $region40
        $region39: #{tpu_custom_call.1} parent=31 // pred_region
          %216 = dma.done [#allocation6], 9216
        $region40: #{tpu_custom_call.1} parent=31 // pred_fallthru
          _
        %s217 = sand.u32 %s34, 1
        %s218 = scalar_lea.sflag [#allocation3], %s217
        %s219 = sand.u32 %s34, 1
        %s220 = smul.addr %s219, 328
        %s221 = scalar_lea.vmem [#allocation2], %s220
        %p222 = pneg %p47
        %p223 = pneg %p44
        %p224 = pneg %p68
        %p225 = pneg %p65
        %p226 = pneg %p89
        %p227 = pneg %p86
        %p228 = pneg %p115
        %p229 = pneg %p112
        %s230 = sand.u32 %s102, 1
        %s231 = scalar_lea.sflag [#allocation4], %s230
        %s232 = sand.u32 %s102, 1
        %s233 = smul.addr %s232, 144
        %s234 = scalar_lea.vmem [#allocation7], %s233
        %p235 = pneg %p141
        %p236 = pneg %p138
        %s237 = sand.u32 %s128, 1
        %s238 = scalar_lea.sflag [#allocation9], %s237
        %s239 = sand.u32 %s128, 1
        %s240 = smul.addr %s239, 2
        %s241 = scalar_lea.vmem [#allocation8], %s240
        %v243 = vld [vmem:[%s208] sm:$0xff]
        %v244 = vld [vmem:[%s208 + $0x8] sm:$0xff]
        %v245 = vld [vmem:[%s208 + $0x10] sm:$0xff]
        %v246 = vld [vmem:[%s208 + $0x18] sm:$0xff]
        %v247 = vld [vmem:[%s208 + $0x20] sm:$0xff]
        %v248 = vld [vmem:[%s208 + $0x28] sm:$0xff]
        %v249 = vld [vmem:[%s208 + $0x30] sm:$0xff]
        %v250 = vld [vmem:[%s208 + $0x38] sm:$0xff]
        %v251 = vld [vmem:[%s208 + $0x40] sm:$0xff]
        %v252 = vld [vmem:[%s208 + $0x48] sm:$0xff]
        %v253 = vld [vmem:[%s208 + $0x50] sm:$0xff]
        %v254 = vld [vmem:[%s208 + $0x58] sm:$0xff]
        %v255 = vld [vmem:[%s208 + $0x60] sm:$0xff]
        %v256 = vld [vmem:[%s208 + $0x68] sm:$0xff]
        %v257 = vld [vmem:[%s208 + $0x70] sm:$0xff]
        %v258 = vld [vmem:[%s208 + $0x78] sm:$0xff]
        %v259 = vld [vmem:[%s208 + $0x80] sm:$0xff]
        %v260 = vld [vmem:[%s208 + $0x88] sm:$0xff]
        %v261 = vld [vmem:[%s208 + $0x90] sm:$0xff]
        %v262 = vld [vmem:[%s208 + $0x98] sm:$0xff]
        %v263 = vld [vmem:[%s208 + $0xa0] sm:$0xff]
        %v264 = vld [vmem:[%s208 + $0xa8] sm:$0xff]
        %v265 = vld [vmem:[%s208 + $0xb0] sm:$0xff]
        %v266 = vld [vmem:[%s208 + $0xb8] sm:$0xff]
        %v267 = vld [vmem:[%s208 + $0xc0] sm:$0xff]
        %v268 = vld [vmem:[%s208 + $0xc8] sm:$0xff]
        %v269 = vld [vmem:[%s208 + $0xd0] sm:$0xff]
        %v270 = vld [vmem:[%s208 + $0xd8] sm:$0xff]
        %v271 = vld [vmem:[%s208 + $0xe0] sm:$0xff]
        %v272 = vld [vmem:[%s208 + $0xe8] sm:$0xff]
        %v273 = vld [vmem:[%s208 + $0xf0] sm:$0xff]
        %v274 = vld [vmem:[%s208 + $0xf8] sm:$0xff]
        %v275 = vld [vmem:[%s208 + $0x100] sm:$0xff]
        %v276 = vld [vmem:[%s208 + $0x108] sm:$0xff]
        %v277 = vld [vmem:[%s208 + $0x110] sm:$0xff]
        %v278 = vld [vmem:[%s208 + $0x118] sm:$0xff]
        %v279 = vld [vmem:[%s208 + $0x120] sm:$0xff]
        %v280 = vld [vmem:[%s208 + $0x128] sm:$0xff]
        %v281 = vld [vmem:[%s208 + $0x130] sm:$0xff]
        %v282 = vld [vmem:[%s208 + $0x138] sm:$0xff]
        %v283 = vld [vmem:[%s208 + $0x140] sm:$0xff]
        %v284 = vpack.c.bf16 %v244, %v243
        %v285 = vpack.c.bf16 %v246, %v245
        %v286 = vpack.c.bf16 %v248, %v247
        %v287 = vpack.c.bf16 %v250, %v249
        %v288 = vpack.c.bf16 %v252, %v251
        %v289 = vpack.c.bf16 %v254, %v253
        %v290 = vpack.c.bf16 %v256, %v255
        %v291 = vpack.c.bf16 %v258, %v257
        %v292 = vpack.c.bf16 %v260, %v259
        %v293 = vpack.c.bf16 %v262, %v261
        %v294 = vpack.c.bf16 %v264, %v263
        %v295 = vpack.c.bf16 %v266, %v265
        %v296 = vpack.c.bf16 %v268, %v267
        %v297 = vpack.c.bf16 %v270, %v269
        %v298 = vpack.c.bf16 %v272, %v271
        %v299 = vpack.c.bf16 %v274, %v273
        %v300 = vpack.c.bf16 %v276, %v275
        %v301 = vpack.c.bf16 %v278, %v277
        %v302 = vld [vmem:[#allocation5] sm:$0xf]
        %v303 = vld [vmem:[#allocation5 + $0x4] sm:$0xf]
        %v304 = vld [vmem:[#allocation5 + $0x8] sm:$0xf]
        %v305 = vld [vmem:[#allocation5 + $0xc] sm:$0xf]
        %v306 = vld [vmem:[#allocation5 + $0x10] sm:$0xf]
        %v307 = vld [vmem:[#allocation5 + $0x14] sm:$0xf]
        %v308 = vld [vmem:[#allocation5 + $0x18] sm:$0xf]
        %v309 = vld [vmem:[#allocation5 + $0x1c] sm:$0xf]
        %v310 = vld [vmem:[#allocation5 + $0x20] sm:$0xf]
        %v311 = vld [vmem:[#allocation5 + $0x24] sm:$0xf]
        %v312 = vld [vmem:[#allocation5 + $0x28] sm:$0xf]
        %v313 = vld [vmem:[#allocation5 + $0x2c] sm:$0xf]
        %v314 = vld [vmem:[#allocation5 + $0x30] sm:$0xf]
        %v315 = vld [vmem:[#allocation5 + $0x34] sm:$0xf]
        %v316 = vld [vmem:[#allocation5 + $0x38] sm:$0xf]
        %v317 = vld [vmem:[#allocation5 + $0x3c] sm:$0xf]
        %v318 = vpack.c.bf16 %v279, %v279
        %s319 = scalar_lea.vmem [#allocation5], 64
        %v320 = vld [vmem:[%s319] sm:$0xf]
        %v321 = vld [vmem:[%s319 + $0x4] sm:$0xf]
        %v322 = vld [vmem:[%s319 + $0x8] sm:$0xf]
        %v323 = vld [vmem:[%s319 + $0xc] sm:$0xf]
        %v324 = vld [vmem:[%s319 + $0x10] sm:$0xf]
        %v325 = vld [vmem:[%s319 + $0x14] sm:$0xf]
        %v326 = vld [vmem:[%s319 + $0x18] sm:$0xf]
        %v327 = vld [vmem:[%s319 + $0x1c] sm:$0xf]
        %v328 = vld [vmem:[%s319 + $0x20] sm:$0xf]
        %v329 = vld [vmem:[%s319 + $0x24] sm:$0xf]
        %v330 = vld [vmem:[%s319 + $0x28] sm:$0xf]
        %v331 = vld [vmem:[%s319 + $0x2c] sm:$0xf]
        %v332 = vld [vmem:[%s319 + $0x30] sm:$0xf]
        %v333 = vld [vmem:[%s319 + $0x34] sm:$0xf]
        %v334 = vld [vmem:[%s319 + $0x38] sm:$0xf]
        %v335 = vld [vmem:[%s319 + $0x3c] sm:$0xf]
        %vm336 = vsmask.f32 7424
        %v338 = vshrl.u32 %v284, 16
        %v340 = vshll.u32 %v284, 16
        %v342 = vrot.slane %v340, 1
        %v343 = vor.u32 %v338, %v342
        %v345 = vshll.u32 %v285, 16
        %v347 = vrot.slane %v345, 1
        %v348 = vsel %vm336, %v343, %v347
        %v349 = vshrl.u32 %v285, 16
        %v351 = vor.u32 %v349, %v347
        %v353 = vshll.u32 %v286, 16
        %v355 = vrot.slane %v353, 1
        %v356 = vsel %vm336, %v351, %v355
        %v357 = vshrl.u32 %v286, 16
        %v359 = vor.u32 %v357, %v355
        %v361 = vshll.u32 %v287, 16
        %v363 = vrot.slane %v361, 1
        %v364 = vsel %vm336, %v359, %v363
        %v365 = vshrl.u32 %v287, 16
        %v367 = vor.u32 %v365, %v363
        %v369 = vshll.u32 %v288, 16
        %v371 = vrot.slane %v369, 1
        %v372 = vsel %vm336, %v367, %v371
        %v373 = vshrl.u32 %v288, 16
        %v375 = vor.u32 %v373, %v371
        %v377 = vshll.u32 %v289, 16
        %v379 = vrot.slane %v377, 1
        %v380 = vsel %vm336, %v375, %v379
        %v381 = vshrl.u32 %v289, 16
        %v383 = vor.u32 %v381, %v379
        %v385 = vshll.u32 %v290, 16
        %v387 = vrot.slane %v385, 1
        %v388 = vsel %vm336, %v383, %v387
        %v389 = vshrl.u32 %v290, 16
        %v391 = vor.u32 %v389, %v387
        %v393 = vshll.u32 %v291, 16
        %v395 = vrot.slane %v393, 1
        %v396 = vsel %vm336, %v391, %v395
        %v397 = vshrl.u32 %v291, 16
        %v399 = vor.u32 %v397, %v395
        %v401 = vshll.u32 %v292, 16
        %v403 = vrot.slane %v401, 1
        %v404 = vsel %vm336, %v399, %v403
        %v405 = vshrl.u32 %v292, 16
        %v407 = vor.u32 %v405, %v403
        %v409 = vshll.u32 %v293, 16
        %v411 = vrot.slane %v409, 1
        %v412 = vsel %vm336, %v407, %v411
        %v413 = vshrl.u32 %v293, 16
        %v415 = vor.u32 %v413, %v411
        %v417 = vshll.u32 %v294, 16
        %v419 = vrot.slane %v417, 1
        %v420 = vsel %vm336, %v415, %v419
        %v421 = vshrl.u32 %v294, 16
        %v423 = vor.u32 %v421, %v419
        %v425 = vshll.u32 %v295, 16
        %v427 = vrot.slane %v425, 1
        %v428 = vsel %vm336, %v423, %v427
        %v429 = vshrl.u32 %v295, 16
        %v431 = vor.u32 %v429, %v427
        %v433 = vshll.u32 %v296, 16
        %v435 = vrot.slane %v433, 1
        %v436 = vsel %vm336, %v431, %v435
        %v437 = vshrl.u32 %v296, 16
        %v439 = vor.u32 %v437, %v435
        %v441 = vshll.u32 %v297, 16
        %v443 = vrot.slane %v441, 1
        %v444 = vsel %vm336, %v439, %v443
        %v445 = vshrl.u32 %v297, 16
        %v447 = vor.u32 %v445, %v443
        %v449 = vshll.u32 %v298, 16
        %v451 = vrot.slane %v449, 1
        %v452 = vsel %vm336, %v447, %v451
        %v453 = vshrl.u32 %v298, 16
        %v455 = vor.u32 %v453, %v451
        %v457 = vshll.u32 %v299, 16
        %v459 = vrot.slane %v457, 1
        %v460 = vsel %vm336, %v455, %v459
        %v461 = vshrl.u32 %v299, 16
        %v463 = vor.u32 %v461, %v459
        %v465 = vshll.u32 %v300, 16
        %v467 = vrot.slane %v465, 1
        %v468 = vsel %vm336, %v463, %v467
        %v469 = vshrl.u32 %v300, 16
        %v471 = vor.u32 %v469, %v467
        %v473 = vshll.u32 %v301, 16
        %v475 = vrot.slane %v473, 1
        %v476 = vsel %vm336, %v471, %v475
        %v477 = vshrl.u32 %v301, 16
        %v479 = vor.u32 %v477, %v475
        %v481 = vshll.u32 %v318, 16
        %v483 = vrot.slane %v481, 1
        %v484 = vsel %vm336, %v479, %v483
        %v519 = vunpack.c.l.b16 %v320
        %v520 = vunpack.c.l.b16 %v321
        %v521 = vunpack.c.l.b16 %v322
        %v522 = vunpack.c.l.b16 %v323
        %v523 = vunpack.c.l.b16 %v324
        %v524 = vunpack.c.l.b16 %v325
        %v525 = vunpack.c.l.b16 %v326
        %v526 = vunpack.c.l.b16 %v327
        %v527 = vunpack.c.l.b16 %v328
        %v528 = vunpack.c.l.b16 %v329
        %v529 = vunpack.c.l.b16 %v330
        %v530 = vunpack.c.l.b16 %v331
        %v531 = vunpack.c.l.b16 %v332
        %v532 = vunpack.c.l.b16 %v333
        %v533 = vunpack.c.l.b16 %v334
        %v534 = vunpack.c.l.b16 %v335
        %v535 = vpack.c.b16 %v520, %v519
        %v536 = vpack.c.b16 %v522, %v521
        %v537 = vpack.c.b16 %v524, %v523
        %v538 = vpack.c.b16 %v526, %v525
        %v539 = vpack.c.b16 %v528, %v527
        %v540 = vpack.c.b16 %v530, %v529
        %v541 = vpack.c.b16 %v532, %v531
        %v542 = vpack.c.b16 %v534, %v533
        %551 = vmatprep.subr.bf16.mxu0 0
        %552 = vmatpush1.bf16.msra.mxu0 %v535
        %553 = vmatprep.subr.bf16.mxu0 0
        %554 = vmatpush1.bf16.msra.mxu0 %v536
        %555 = vmatprep.subr.bf16.mxu0 0
        %556 = vmatpush1.bf16.msra.mxu0 %v537
        %557 = vmatprep.subr.bf16.mxu0 0
        %558 = vmatpush1.bf16.msra.mxu0 %v538
        %559 = vmatprep.subr.bf16.mxu0 0
        %560 = vmatpush1.bf16.msra.mxu0 %v539
        %561 = vmatprep.subr.bf16.mxu0 0
        %562 = vmatpush1.bf16.msra.mxu0 %v540
        %563 = vmatprep.subr.bf16.mxu0 0
        %564 = vmatpush1.bf16.msra.mxu0 %v541
        %565 = vmatprep.subr.bf16.mxu0 0
        %566 = vmatpush1.bf16.msra.mxu0 %v542
        %567 = vmatprep.subr.bf16.mxu0 0
        %568 = vmatpush1.bf16.msra.mxu0 0
        %569 = vmatprep.subr.bf16.mxu0 0
        %570 = vmatpush1.bf16.msra.mxu0 0
        %571 = vmatprep.subr.bf16.mxu0 0
        %572 = vmatpush1.bf16.msra.mxu0 0
        %573 = vmatprep.subr.bf16.mxu0 0
        %574 = vmatpush1.bf16.msra.mxu0 0
        %575 = vmatprep.subr.bf16.mxu0 0
        %576 = vmatpush1.bf16.msra.mxu0 0
        %577 = vmatprep.subr.bf16.mxu0 0
        %578 = vmatpush1.bf16.msra.mxu0 0
        %579 = vmatprep.subr.bf16.mxu0 0
        %580 = vmatpush1.bf16.msra.mxu0 0
        %581 = vmatprep.subr.bf16.mxu0 0
        %582 = vmatpush1.bf16.msra.mxu0 0
        %583 = vmatprep.mubr.bf16.mxu0 0
        %584 = vmatmul.mubr.bf16.gmra.mrb[0].mxu0 %v348
        %v585 = vpop.f32.mrb[0].mxu0
        %v586 = vadd.f32 0.0, %v585
        %v587 = vpop.f32.mrb[0].mxu0
        %v588 = vpop.f32.mrb[0].mxu0
        %v589 = vadd.f32 0.0, %v588
        %v590 = vpop.f32.mrb[0].mxu0
        %591 = vmatprep.mubr.bf16.mxu0 0
        %592 = vmatmul.mubr.bf16.gmra.mrb[0].mxu0 %v356
        %v593 = vpop.f32.mrb[0].mxu0
        %v594 = vadd.f32 0.0, %v593
        %v595 = vpop.f32.mrb[0].mxu0
        %v596 = vpop.f32.mrb[0].mxu0
        %v597 = vadd.f32 0.0, %v596
        %v598 = vpop.f32.mrb[0].mxu0
        %599 = vmatprep.mubr.bf16.mxu0 0
        %600 = vmatmul.mubr.bf16.gmra.mrb[0].mxu0 %v364
        %v601 = vpop.f32.mrb[0].mxu0
        %v602 = vadd.f32 0.0, %v601
        %v603 = vpop.f32.mrb[0].mxu0
        %v604 = vpop.f32.mrb[0].mxu0
        %v605 = vadd.f32 0.0, %v604
        %v606 = vpop.f32.mrb[0].mxu0
        %607 = vmatprep.mubr.bf16.mxu0 0
        %608 = vmatmul.mubr.bf16.gmra.mrb[0].mxu0 %v372
        %v609 = vpop.f32.mrb[0].mxu0
        %v610 = vadd.f32 0.0, %v609
        %v611 = vpop.f32.mrb[0].mxu0
        %v612 = vpop.f32.mrb[0].mxu0
        %v613 = vadd.f32 0.0, %v612
        %v614 = vpop.f32.mrb[0].mxu0
        %615 = vmatprep.mubr.bf16.mxu0 0
        %616 = vmatmul.mubr.bf16.gmra.mrb[0].mxu0 %v380
        %v617 = vpop.f32.mrb[0].mxu0
        %v618 = vadd.f32 0.0, %v617
        %v619 = vpop.f32.mrb[0].mxu0
        %v620 = vpop.f32.mrb[0].mxu0
        %v621 = vadd.f32 0.0, %v620
        %v622 = vpop.f32.mrb[0].mxu0
        %623 = vmatprep.mubr.bf16.mxu0 0
        %624 = vmatmul.mubr.bf16.gmra.mrb[0].mxu0 %v388
        %v625 = vpop.f32.mrb[0].mxu0
        %v626 = vadd.f32 0.0, %v625
        %v627 = vpop.f32.mrb[0].mxu0
        %v628 = vpop.f32.mrb[0].mxu0
        %v629 = vadd.f32 0.0, %v628
        %v630 = vpop.f32.mrb[0].mxu0
        %631 = vmatprep.mubr.bf16.mxu0 0
        %632 = vmatmul.mubr.bf16.gmra.mrb[0].mxu0 %v396
        %v633 = vpop.f32.mrb[0].mxu0
        %v634 = vadd.f32 0.0, %v633
        %v635 = vpop.f32.mrb[0].mxu0
        %v636 = vpop.f32.mrb[0].mxu0
        %v637 = vadd.f32 0.0, %v636
        %v638 = vpop.f32.mrb[0].mxu0
        %639 = vmatprep.mubr.bf16.mxu0 0
        %640 = vmatmul.mubr.bf16.gmra.mrb[0].mxu0 %v404
        %v641 = vpop.f32.mrb[0].mxu0
        %v642 = vadd.f32 0.0, %v641
        %v643 = vpop.f32.mrb[0].mxu0
        %v644 = vpop.f32.mrb[0].mxu0
        %v645 = vadd.f32 0.0, %v644
        %v646 = vpop.f32.mrb[0].mxu0
        %647 = vmatprep.mubr.bf16.mxu0 0
        %648 = vmatmul.mubr.bf16.gmra.mrb[0].mxu0 %v412
        %v649 = vpop.f32.mrb[0].mxu0
        %v650 = vadd.f32 0.0, %v649
        %v651 = vpop.f32.mrb[0].mxu0
        %v652 = vpop.f32.mrb[0].mxu0
        %v653 = vadd.f32 0.0, %v652
        %v654 = vpop.f32.mrb[0].mxu0
        %655 = vmatprep.mubr.bf16.mxu0 0
        %656 = vmatmul.mubr.bf16.gmra.mrb[0].mxu0 %v420
        %v657 = vpop.f32.mrb[0].mxu0
        %v658 = vadd.f32 0.0, %v657
        %v659 = vpop.f32.mrb[0].mxu0
        %v660 = vpop.f32.mrb[0].mxu0
        %v661 = vadd.f32 0.0, %v660
        %v662 = vpop.f32.mrb[0].mxu0
        %663 = vmatprep.mubr.bf16.mxu0 0
        %664 = vmatmul.mubr.bf16.gmra.mrb[0].mxu0 %v428
        %v665 = vpop.f32.mrb[0].mxu0
        %v666 = vadd.f32 0.0, %v665
        %v667 = vpop.f32.mrb[0].mxu0
        %v668 = vpop.f32.mrb[0].mxu0
        %v669 = vadd.f32 0.0, %v668
        %v670 = vpop.f32.mrb[0].mxu0
        %671 = vmatprep.mubr.bf16.mxu0 0
        %672 = vmatmul.mubr.bf16.gmra.mrb[0].mxu0 %v436
        %v673 = vpop.f32.mrb[0].mxu0
        %v674 = vadd.f32 0.0, %v673
        %v675 = vpop.f32.mrb[0].mxu0
        %v676 = vpop.f32.mrb[0].mxu0
        %v677 = vadd.f32 0.0, %v676
        %v678 = vpop.f32.mrb[0].mxu0
        %679 = vmatprep.mubr.bf16.mxu0 0
        %680 = vmatmul.mubr.bf16.gmra.mrb[0].mxu0 %v444
        %v681 = vpop.f32.mrb[0].mxu0
        %v682 = vadd.f32 0.0, %v681
        %v683 = vpop.f32.mrb[0].mxu0
        %v684 = vpop.f32.mrb[0].mxu0
        %v685 = vadd.f32 0.0, %v684
        %v686 = vpop.f32.mrb[0].mxu0
        %687 = vmatprep.mubr.bf16.mxu0 0
        %688 = vmatmul.mubr.bf16.gmra.mrb[0].mxu0 %v452
        %v689 = vpop.f32.mrb[0].mxu0
        %v690 = vadd.f32 0.0, %v689
        %v691 = vpop.f32.mrb[0].mxu0
        %v692 = vpop.f32.mrb[0].mxu0
        %v693 = vadd.f32 0.0, %v692
        %v694 = vpop.f32.mrb[0].mxu0
        %695 = vmatprep.mubr.bf16.mxu0 0
        %696 = vmatmul.mubr.bf16.gmra.mrb[0].mxu0 %v460
        %v697 = vpop.f32.mrb[0].mxu0
        %v698 = vadd.f32 0.0, %v697
        %v699 = vpop.f32.mrb[0].mxu0
        %v700 = vpop.f32.mrb[0].mxu0
        %v701 = vadd.f32 0.0, %v700
        %v702 = vpop.f32.mrb[0].mxu0
        %703 = vmatprep.mubr.bf16.mxu0 0
        %704 = vmatmul.mubr.bf16.gmra.mrb[0].mxu0 %v468
        %v705 = vpop.f32.mrb[0].mxu0
        %v706 = vadd.f32 0.0, %v705
        %v707 = vpop.f32.mrb[0].mxu0
        %v708 = vpop.f32.mrb[0].mxu0
        %v709 = vadd.f32 0.0, %v708
        %v710 = vpop.f32.mrb[0].mxu0
        %711 = vmatprep.mubr.bf16.mxu0 0
        %712 = vmatmul.mubr.bf16.gmra.mrb[0].mxu0 %v476
        %v713 = vpop.f32.mrb[0].mxu0
        %v714 = vadd.f32 0.0, %v713
        %v715 = vpop.f32.mrb[0].mxu0
        %v716 = vpop.f32.mrb[0].mxu0
        %v717 = vadd.f32 0.0, %v716
        %v718 = vpop.f32.mrb[0].mxu0
        %719 = vmatprep.mubr.bf16.mxu0 0
        %720 = vmatmul.mubr.bf16.gmra.mrb[0].mxu0 %v484
        %v721 = vpop.f32.mrb[0].mxu0
        %v722 = vadd.f32 0.0, %v721
        %v723 = vpop.f32.mrb[0].mxu0
        %v724 = vpop.f32.mrb[0].mxu0
        %v725 = vadd.f32 0.0, %v724
        %v726 = vpop.f32.mrb[0].mxu0
        %727 = vdwg.mxu0
        %v744 = vunpack.c.l.b16 %v302
        %v745 = vunpack.c.l.b16 %v303
        %v746 = vunpack.c.l.b16 %v304
        %v747 = vunpack.c.l.b16 %v305
        %v748 = vunpack.c.l.b16 %v306
        %v749 = vunpack.c.l.b16 %v307
        %v750 = vunpack.c.l.b16 %v308
        %v751 = vunpack.c.l.b16 %v309
        %v752 = vunpack.c.l.b16 %v310
        %v753 = vunpack.c.l.b16 %v311
        %v754 = vunpack.c.l.b16 %v312
        %v755 = vunpack.c.l.b16 %v313
        %v756 = vunpack.c.l.b16 %v314
        %v757 = vunpack.c.l.b16 %v315
        %v758 = vunpack.c.l.b16 %v316
        %v759 = vunpack.c.l.b16 %v317
        %v760 = vpack.c.b16 %v745, %v744
        %v761 = vpack.c.b16 %v747, %v746
        %v762 = vpack.c.b16 %v749, %v748
        %v763 = vpack.c.b16 %v751, %v750
        %v764 = vpack.c.b16 %v753, %v752
        %v765 = vpack.c.b16 %v755, %v754
        %v766 = vpack.c.b16 %v757, %v756
        %v767 = vpack.c.b16 %v759, %v758
        %776 = vmatprep.subr.bf16.mxu0 0
        %777 = vmatpush1.bf16.msra.mxu0 %v760
        %778 = vmatprep.subr.bf16.mxu0 0
        %779 = vmatpush1.bf16.msra.mxu0 %v761
        %780 = vmatprep.subr.bf16.mxu0 0
        %781 = vmatpush1.bf16.msra.mxu0 %v762
        %782 = vmatprep.subr.bf16.mxu0 0
        %783 = vmatpush1.bf16.msra.mxu0 %v763
        %784 = vmatprep.subr.bf16.mxu0 0
        %785 = vmatpush1.bf16.msra.mxu0 %v764
        %786 = vmatprep.subr.bf16.mxu0 0
        %787 = vmatpush1.bf16.msra.mxu0 %v765
        %788 = vmatprep.subr.bf16.mxu0 0
        %789 = vmatpush1.bf16.msra.mxu0 %v766
        %790 = vmatprep.subr.bf16.mxu0 0
        %791 = vmatpush1.bf16.msra.mxu0 %v767
        %792 = vmatprep.subr.bf16.mxu0 0
        %793 = vmatpush1.bf16.msra.mxu0 0
        %794 = vmatprep.subr.bf16.mxu0 0
        %795 = vmatpush1.bf16.msra.mxu0 0
        %796 = vmatprep.subr.bf16.mxu0 0
        %797 = vmatpush1.bf16.msra.mxu0 0
        %798 = vmatprep.subr.bf16.mxu0 0
        %799 = vmatpush1.bf16.msra.mxu0 0
        %800 = vmatprep.subr.bf16.mxu0 0
        %801 = vmatpush1.bf16.msra.mxu0 0
        %802 = vmatprep.subr.bf16.mxu0 0
        %803 = vmatpush1.bf16.msra.mxu0 0
        %804 = vmatprep.subr.bf16.mxu0 0
        %805 = vmatpush1.bf16.msra.mxu0 0
        %806 = vmatprep.subr.bf16.mxu0 0
        %807 = vmatpush1.bf16.msra.mxu0 0
        %808 = vmatprep.mubr.bf16.mxu0 0
        %809 = vmatmul.mubr.bf16.gmra.mrb[0].mxu0 %v284
        %v810 = vpop.f32.mrb[0].mxu0
        %v811 = vadd.f32 %v586, %v810
        %v812 = vpop.f32.mrb[0].mxu0
        %v813 = vpop.f32.mrb[0].mxu0
        %v814 = vadd.f32 %v589, %v813
        %v815 = vpop.f32.mrb[0].mxu0
        %816 = vmatprep.mubr.bf16.mxu0 0
        %817 = vmatmul.mubr.bf16.gmra.mrb[0].mxu0 %v285
        %v818 = vpop.f32.mrb[0].mxu0
        %v819 = vadd.f32 %v594, %v818
        %v820 = vpop.f32.mrb[0].mxu0
        %v821 = vpop.f32.mrb[0].mxu0
        %v822 = vadd.f32 %v597, %v821
        %v823 = vpop.f32.mrb[0].mxu0
        %824 = vmatprep.mubr.bf16.mxu0 0
        %825 = vmatmul.mubr.bf16.gmra.mrb[0].mxu0 %v286
        %v826 = vpop.f32.mrb[0].mxu0
        %v827 = vadd.f32 %v602, %v826
        %v828 = vpop.f32.mrb[0].mxu0
        %v829 = vpop.f32.mrb[0].mxu0
        %v830 = vadd.f32 %v605, %v829
        %v831 = vpop.f32.mrb[0].mxu0
        %832 = vmatprep.mubr.bf16.mxu0 0
        %833 = vmatmul.mubr.bf16.gmra.mrb[0].mxu0 %v287
        %v834 = vpop.f32.mrb[0].mxu0
        %v835 = vadd.f32 %v610, %v834
        %v836 = vpop.f32.mrb[0].mxu0
        %v837 = vpop.f32.mrb[0].mxu0
        %v838 = vadd.f32 %v613, %v837
        %v839 = vpop.f32.mrb[0].mxu0
        %840 = vmatprep.mubr.bf16.mxu0 0
        %841 = vmatmul.mubr.bf16.gmra.mrb[0].mxu0 %v288
        %v842 = vpop.f32.mrb[0].mxu0
        %v843 = vadd.f32 %v618, %v842
        %v844 = vpop.f32.mrb[0].mxu0
        %v845 = vpop.f32.mrb[0].mxu0
        %v846 = vadd.f32 %v621, %v845
        %v847 = vpop.f32.mrb[0].mxu0
        %848 = vmatprep.mubr.bf16.mxu0 0
        %849 = vmatmul.mubr.bf16.gmra.mrb[0].mxu0 %v289
        %v850 = vpop.f32.mrb[0].mxu0
        %v851 = vadd.f32 %v626, %v850
        %v852 = vpop.f32.mrb[0].mxu0
        %v853 = vpop.f32.mrb[0].mxu0
        %v854 = vadd.f32 %v629, %v853
        %v855 = vpop.f32.mrb[0].mxu0
        %856 = vmatprep.mubr.bf16.mxu0 0
        %857 = vmatmul.mubr.bf16.gmra.mrb[0].mxu0 %v290
        %v858 = vpop.f32.mrb[0].mxu0
        %v859 = vadd.f32 %v634, %v858
        %v860 = vpop.f32.mrb[0].mxu0
        %v861 = vpop.f32.mrb[0].mxu0
        %v862 = vadd.f32 %v637, %v861
        %v863 = vpop.f32.mrb[0].mxu0
        %864 = vmatprep.mubr.bf16.mxu0 0
        %865 = vmatmul.mubr.bf16.gmra.mrb[0].mxu0 %v291
        %v866 = vpop.f32.mrb[0].mxu0
        %v867 = vadd.f32 %v642, %v866
        %v868 = vpop.f32.mrb[0].mxu0
        %v869 = vpop.f32.mrb[0].mxu0
        %v870 = vadd.f32 %v645, %v869
        %v871 = vpop.f32.mrb[0].mxu0
        %872 = vmatprep.mubr.bf16.mxu0 0
        %873 = vmatmul.mubr.bf16.gmra.mrb[0].mxu0 %v292
        %v874 = vpop.f32.mrb[0].mxu0
        %v875 = vadd.f32 %v650, %v874
        %v876 = vpop.f32.mrb[0].mxu0
        %v877 = vpop.f32.mrb[0].mxu0
        %v878 = vadd.f32 %v653, %v877
        %v879 = vpop.f32.mrb[0].mxu0
        %880 = vmatprep.mubr.bf16.mxu0 0
        %881 = vmatmul.mubr.bf16.gmra.mrb[0].mxu0 %v293
        %v882 = vpop.f32.mrb[0].mxu0
        %v883 = vadd.f32 %v658, %v882
        %v884 = vpop.f32.mrb[0].mxu0
        %v885 = vpop.f32.mrb[0].mxu0
        %v886 = vadd.f32 %v661, %v885
        %v887 = vpop.f32.mrb[0].mxu0
        %888 = vmatprep.mubr.bf16.mxu0 0
        %889 = vmatmul.mubr.bf16.gmra.mrb[0].mxu0 %v294
        %v890 = vpop.f32.mrb[0].mxu0
        %v891 = vadd.f32 %v666, %v890
        %v892 = vpop.f32.mrb[0].mxu0
        %v893 = vpop.f32.mrb[0].mxu0
        %v894 = vadd.f32 %v669, %v893
        %v895 = vpop.f32.mrb[0].mxu0
        %896 = vmatprep.mubr.bf16.mxu0 0
        %897 = vmatmul.mubr.bf16.gmra.mrb[0].mxu0 %v295
        %v898 = vpop.f32.mrb[0].mxu0
        %v899 = vadd.f32 %v674, %v898
        %v900 = vpop.f32.mrb[0].mxu0
        %v901 = vpop.f32.mrb[0].mxu0
        %v902 = vadd.f32 %v677, %v901
        %v903 = vpop.f32.mrb[0].mxu0
        %904 = vmatprep.mubr.bf16.mxu0 0
        %905 = vmatmul.mubr.bf16.gmra.mrb[0].mxu0 %v296
        %v906 = vpop.f32.mrb[0].mxu0
        %v907 = vadd.f32 %v682, %v906
        %v908 = vpop.f32.mrb[0].mxu0
        %v909 = vpop.f32.mrb[0].mxu0
        %v910 = vadd.f32 %v685, %v909
        %v911 = vpop.f32.mrb[0].mxu0
        %912 = vmatprep.mubr.bf16.mxu0 0
        %913 = vmatmul.mubr.bf16.gmra.mrb[0].mxu0 %v297
        %v914 = vpop.f32.mrb[0].mxu0
        %v915 = vadd.f32 %v690, %v914
        %v916 = vpop.f32.mrb[0].mxu0
        %v917 = vpop.f32.mrb[0].mxu0
        %v918 = vadd.f32 %v693, %v917
        %v919 = vpop.f32.mrb[0].mxu0
        %920 = vmatprep.mubr.bf16.mxu0 0
        %921 = vmatmul.mubr.bf16.gmra.mrb[0].mxu0 %v298
        %v922 = vpop.f32.mrb[0].mxu0
        %v923 = vadd.f32 %v698, %v922
        %v924 = vpop.f32.mrb[0].mxu0
        %v925 = vpop.f32.mrb[0].mxu0
        %v926 = vadd.f32 %v701, %v925
        %v927 = vpop.f32.mrb[0].mxu0
        %928 = vmatprep.mubr.bf16.mxu0 0
        %929 = vmatmul.mubr.bf16.gmra.mrb[0].mxu0 %v299
        %v930 = vpop.f32.mrb[0].mxu0
        %v931 = vadd.f32 %v706, %v930
        %v932 = vpop.f32.mrb[0].mxu0
        %v933 = vpop.f32.mrb[0].mxu0
        %v934 = vadd.f32 %v709, %v933
        %v935 = vpop.f32.mrb[0].mxu0
        %936 = vmatprep.mubr.bf16.mxu0 0
        %937 = vmatmul.mubr.bf16.gmra.mrb[0].mxu0 %v300
        %v938 = vpop.f32.mrb[0].mxu0
        %v939 = vadd.f32 %v714, %v938
        %v940 = vpop.f32.mrb[0].mxu0
        %v941 = vpop.f32.mrb[0].mxu0
        %v942 = vadd.f32 %v717, %v941
        %v943 = vpop.f32.mrb[0].mxu0
        %944 = vmatprep.mubr.bf16.mxu0 0
        %945 = vmatmul.mubr.bf16.gmra.mrb[0].mxu0 %v301
        %v946 = vpop.f32.mrb[0].mxu0
        %v947 = vadd.f32 %v722, %v946
        %v948 = vpop.f32.mrb[0].mxu0
        %v949 = vpop.f32.mrb[0].mxu0
        %v950 = vadd.f32 %v725, %v949
        %v951 = vpop.f32.mrb[0].mxu0
        %952 = vdwg.mxu0
        %s953 = scalar_lea.vmem [#allocation5], 128
        %v954 = vld [vmem:[%s953] sm:$0xf]
        %v955 = vld [vmem:[%s953 + $0x4] sm:$0xf]
        %v956 = vld [vmem:[%s953 + $0x8] sm:$0xf]
        %v957 = vld [vmem:[%s953 + $0xc] sm:$0xf]
        %v958 = vld [vmem:[%s953 + $0x10] sm:$0xf]
        %v959 = vld [vmem:[%s953 + $0x14] sm:$0xf]
        %v960 = vld [vmem:[%s953 + $0x18] sm:$0xf]
        %v961 = vld [vmem:[%s953 + $0x1c] sm:$0xf]
        %v962 = vld [vmem:[%s953 + $0x20] sm:$0xf]
        %v963 = vld [vmem:[%s953 + $0x24] sm:$0xf]
        %v964 = vld [vmem:[%s953 + $0x28] sm:$0xf]
        %v965 = vld [vmem:[%s953 + $0x2c] sm:$0xf]
        %v966 = vld [vmem:[%s953 + $0x30] sm:$0xf]
        %v967 = vld [vmem:[%s953 + $0x34] sm:$0xf]
        %v968 = vld [vmem:[%s953 + $0x38] sm:$0xf]
        %v969 = vld [vmem:[%s953 + $0x3c] sm:$0xf]
        %vm989 = vcmask 1046528
        %v990 = vrot.slane %v284, 1
        %v991 = vrot.slane %v285, 1
        %v992 = vsel %vm989, %v990, %v991
        %v993 = vrot.slane %v286, 1
        %v994 = vsel %vm989, %v991, %v993
        %v995 = vrot.slane %v287, 1
        %v996 = vsel %vm989, %v993, %v995
        %v997 = vrot.slane %v288, 1
        %v998 = vsel %vm989, %v995, %v997
        %v999 = vrot.slane %v289, 1
        %v1000 = vsel %vm989, %v997, %v999
        %v1001 = vrot.slane %v290, 1
        %v1002 = vsel %vm989, %v999, %v1001
        %v1003 = vrot.slane %v291, 1
        %v1004 = vsel %vm989, %v1001, %v1003
        %v1005 = vrot.slane %v292, 1
        %v1006 = vsel %vm989, %v1003, %v1005
        %v1007 = vrot.slane %v293, 1
        %v1008 = vsel %vm989, %v1005, %v1007
        %v1009 = vrot.slane %v294, 1
        %v1010 = vsel %vm989, %v1007, %v1009
        %v1011 = vrot.slane %v295, 1
        %v1012 = vsel %vm989, %v1009, %v1011
        %v1013 = vrot.slane %v296, 1
        %v1014 = vsel %vm989, %v1011, %v1013
        %v1015 = vrot.slane %v297, 1
        %v1016 = vsel %vm989, %v1013, %v1015
        %v1017 = vrot.slane %v298, 1
        %v1018 = vsel %vm989, %v1015, %v1017
        %v1019 = vrot.slane %v299, 1
        %v1020 = vsel %vm989, %v1017, %v1019
        %v1021 = vrot.slane %v300, 1
        %v1022 = vsel %vm989, %v1019, %v1021
        %v1023 = vrot.slane %v301, 1
        %v1024 = vsel %vm989, %v1021, %v1023
        %v1025 = vrot.slane %v318, 1
        %v1026 = vsel %vm989, %v1023, %v1025
        %v1061 = vunpack.c.l.b16 %v954
        %v1062 = vunpack.c.l.b16 %v955
        %v1063 = vunpack.c.l.b16 %v956
        %v1064 = vunpack.c.l.b16 %v957
        %v1065 = vunpack.c.l.b16 %v958
        %v1066 = vunpack.c.l.b16 %v959
        %v1067 = vunpack.c.l.b16 %v960
        %v1068 = vunpack.c.l.b16 %v961
        %v1069 = vunpack.c.l.b16 %v962
        %v1070 = vunpack.c.l.b16 %v963
        %v1071 = vunpack.c.l.b16 %v964
        %v1072 = vunpack.c.l.b16 %v965
        %v1073 = vunpack.c.l.b16 %v966
        %v1074 = vunpack.c.l.b16 %v967
        %v1075 = vunpack.c.l.b16 %v968
        %v1076 = vunpack.c.l.b16 %v969
        %v1077 = vpack.c.b16 %v1062, %v1061
        %v1078 = vpack.c.b16 %v1064, %v1063
        %v1079 = vpack.c.b16 %v1066, %v1065
        %v1080 = vpack.c.b16 %v1068, %v1067
        %v1081 = vpack.c.b16 %v1070, %v1069
        %v1082 = vpack.c.b16 %v1072, %v1071
        %v1083 = vpack.c.b16 %v1074, %v1073
        %v1084 = vpack.c.b16 %v1076, %v1075
        %1093 = vmatprep.subr.bf16.mxu0 0
        %1094 = vmatpush1.bf16.msra.mxu0 %v1077
        %1095 = vmatprep.subr.bf16.mxu0 0
        %1096 = vmatpush1.bf16.msra.mxu0 %v1078
        %1097 = vmatprep.subr.bf16.mxu0 0
        %1098 = vmatpush1.bf16.msra.mxu0 %v1079
        %1099 = vmatprep.subr.bf16.mxu0 0
        %1100 = vmatpush1.bf16.msra.mxu0 %v1080
        %1101 = vmatprep.subr.bf16.mxu0 0
        %1102 = vmatpush1.bf16.msra.mxu0 %v1081
        %1103 = vmatprep.subr.bf16.mxu0 0
        %1104 = vmatpush1.bf16.msra.mxu0 %v1082
        %1105 = vmatprep.subr.bf16.mxu0 0
        %1106 = vmatpush1.bf16.msra.mxu0 %v1083
        %1107 = vmatprep.subr.bf16.mxu0 0
        %1108 = vmatpush1.bf16.msra.mxu0 %v1084
        %1109 = vmatprep.subr.bf16.mxu0 0
        %1110 = vmatpush1.bf16.msra.mxu0 0
        %1111 = vmatprep.subr.bf16.mxu0 0
        %1112 = vmatpush1.bf16.msra.mxu0 0
        %1113 = vmatprep.subr.bf16.mxu0 0
        %1114 = vmatpush1.bf16.msra.mxu0 0
        %1115 = vmatprep.subr.bf16.mxu0 0
        %1116 = vmatpush1.bf16.msra.mxu0 0
        %1117 = vmatprep.subr.bf16.mxu0 0
        %1118 = vmatpush1.bf16.msra.mxu0 0
        %1119 = vmatprep.subr.bf16.mxu0 0
        %1120 = vmatpush1.bf16.msra.mxu0 0
        %1121 = vmatprep.subr.bf16.mxu0 0
        %1122 = vmatpush1.bf16.msra.mxu0 0
        %1123 = vmatprep.subr.bf16.mxu0 0
        %1124 = vmatpush1.bf16.msra.mxu0 0
        %1125 = vmatprep.mubr.bf16.mxu0 0
        %1126 = vmatmul.mubr.bf16.gmra.mrb[0].mxu0 %v992
        %v1127 = vpop.f32.mrb[0].mxu0
        %v1128 = vadd.f32 0.0, %v1127
        %v1129 = vpop.f32.mrb[0].mxu0
        %v1130 = vpop.f32.mrb[0].mxu0
        %v1131 = vadd.f32 0.0, %v1130
        %v1132 = vpop.f32.mrb[0].mxu0
        %1133 = vmatprep.mubr.bf16.mxu0 0
        %1134 = vmatmul.mubr.bf16.gmra.mrb[0].mxu0 %v994
        %v1135 = vpop.f32.mrb[0].mxu0
        %v1136 = vadd.f32 0.0, %v1135
        %v1137 = vpop.f32.mrb[0].mxu0
        %v1138 = vpop.f32.mrb[0].mxu0
        %v1139 = vadd.f32 0.0, %v1138
        %v1140 = vpop.f32.mrb[0].mxu0
        %1141 = vmatprep.mubr.bf16.mxu0 0
        %1142 = vmatmul.mubr.bf16.gmra.mrb[0].mxu0 %v996
        %v1143 = vpop.f32.mrb[0].mxu0
        %v1144 = vadd.f32 0.0, %v1143
        %v1145 = vpop.f32.mrb[0].mxu0
        %v1146 = vpop.f32.mrb[0].mxu0
        %v1147 = vadd.f32 0.0, %v1146
        %v1148 = vpop.f32.mrb[0].mxu0
        %1149 = vmatprep.mubr.bf16.mxu0 0
        %1150 = vmatmul.mubr.bf16.gmra.mrb[0].mxu0 %v998
        %v1151 = vpop.f32.mrb[0].mxu0
        %v1152 = vadd.f32 0.0, %v1151
        %v1153 = vpop.f32.mrb[0].mxu0
        %v1154 = vpop.f32.mrb[0].mxu0
        %v1155 = vadd.f32 0.0, %v1154
        %v1156 = vpop.f32.mrb[0].mxu0
        %1157 = vmatprep.mubr.bf16.mxu0 0
        %1158 = vmatmul.mubr.bf16.gmra.mrb[0].mxu0 %v1000
        %v1159 = vpop.f32.mrb[0].mxu0
        %v1160 = vadd.f32 0.0, %v1159
        %v1161 = vpop.f32.mrb[0].mxu0
        %v1162 = vpop.f32.mrb[0].mxu0
        %v1163 = vadd.f32 0.0, %v1162
        %v1164 = vpop.f32.mrb[0].mxu0
        %1165 = vmatprep.mubr.bf16.mxu0 0
        %1166 = vmatmul.mubr.bf16.gmra.mrb[0].mxu0 %v1002
        %v1167 = vpop.f32.mrb[0].mxu0
        %v1168 = vadd.f32 0.0, %v1167
        %v1169 = vpop.f32.mrb[0].mxu0
        %v1170 = vpop.f32.mrb[0].mxu0
        %v1171 = vadd.f32 0.0, %v1170
        %v1172 = vpop.f32.mrb[0].mxu0
        %1173 = vmatprep.mubr.bf16.mxu0 0
        %1174 = vmatmul.mubr.bf16.gmra.mrb[0].mxu0 %v1004
        %v1175 = vpop.f32.mrb[0].mxu0
        %v1176 = vadd.f32 0.0, %v1175
        %v1177 = vpop.f32.mrb[0].mxu0
        %v1178 = vpop.f32.mrb[0].mxu0
        %v1179 = vadd.f32 0.0, %v1178
        %v1180 = vpop.f32.mrb[0].mxu0
        %1181 = vmatprep.mubr.bf16.mxu0 0
        %1182 = vmatmul.mubr.bf16.gmra.mrb[0].mxu0 %v1006
        %v1183 = vpop.f32.mrb[0].mxu0
        %v1184 = vadd.f32 0.0, %v1183
        %v1185 = vpop.f32.mrb[0].mxu0
        %v1186 = vpop.f32.mrb[0].mxu0
        %v1187 = vadd.f32 0.0, %v1186
        %v1188 = vpop.f32.mrb[0].mxu0
        %1189 = vmatprep.mubr.bf16.mxu0 0
        %1190 = vmatmul.mubr.bf16.gmra.mrb[0].mxu0 %v1008
        %v1191 = vpop.f32.mrb[0].mxu0
        %v1192 = vadd.f32 0.0, %v1191
        %v1193 = vpop.f32.mrb[0].mxu0
        %v1194 = vpop.f32.mrb[0].mxu0
        %v1195 = vadd.f32 0.0, %v1194
        %v1196 = vpop.f32.mrb[0].mxu0
        %1197 = vmatprep.mubr.bf16.mxu0 0
        %1198 = vmatmul.mubr.bf16.gmra.mrb[0].mxu0 %v1010
        %v1199 = vpop.f32.mrb[0].mxu0
        %v1200 = vadd.f32 0.0, %v1199
        %v1201 = vpop.f32.mrb[0].mxu0
        %v1202 = vpop.f32.mrb[0].mxu0
        %v1203 = vadd.f32 0.0, %v1202
        %v1204 = vpop.f32.mrb[0].mxu0
        %1205 = vmatprep.mubr.bf16.mxu0 0
        %1206 = vmatmul.mubr.bf16.gmra.mrb[0].mxu0 %v1012
        %v1207 = vpop.f32.mrb[0].mxu0
        %v1208 = vadd.f32 0.0, %v1207
        %v1209 = vpop.f32.mrb[0].mxu0
        %v1210 = vpop.f32.mrb[0].mxu0
        %v1211 = vadd.f32 0.0, %v1210
        %v1212 = vpop.f32.mrb[0].mxu0
        %1213 = vmatprep.mubr.bf16.mxu0 0
        %1214 = vmatmul.mubr.bf16.gmra.mrb[0].mxu0 %v1014
        %v1215 = vpop.f32.mrb[0].mxu0
        %v1216 = vadd.f32 0.0, %v1215
        %v1217 = vpop.f32.mrb[0].mxu0
        %v1218 = vpop.f32.mrb[0].mxu0
        %v1219 = vadd.f32 0.0, %v1218
        %v1220 = vpop.f32.mrb[0].mxu0
        %1221 = vmatprep.mubr.bf16.mxu0 0
        %1222 = vmatmul.mubr.bf16.gmra.mrb[0].mxu0 %v1016
        %v1223 = vpop.f32.mrb[0].mxu0
        %v1224 = vadd.f32 0.0, %v1223
        %v1225 = vpop.f32.mrb[0].mxu0
        %v1226 = vpop.f32.mrb[0].mxu0
        %v1227 = vadd.f32 0.0, %v1226
        %v1228 = vpop.f32.mrb[0].mxu0
        %1229 = vmatprep.mubr.bf16.mxu0 0
        %1230 = vmatmul.mubr.bf16.gmra.mrb[0].mxu0 %v1018
        %v1231 = vpop.f32.mrb[0].mxu0
        %v1232 = vadd.f32 0.0, %v1231
        %v1233 = vpop.f32.mrb[0].mxu0
        %v1234 = vpop.f32.mrb[0].mxu0
        %v1235 = vadd.f32 0.0, %v1234
        %v1236 = vpop.f32.mrb[0].mxu0
        %1237 = vmatprep.mubr.bf16.mxu0 0
        %1238 = vmatmul.mubr.bf16.gmra.mrb[0].mxu0 %v1020
        %v1239 = vpop.f32.mrb[0].mxu0
        %v1240 = vadd.f32 0.0, %v1239
        %v1241 = vpop.f32.mrb[0].mxu0
        %v1242 = vpop.f32.mrb[0].mxu0
        %v1243 = vadd.f32 0.0, %v1242
        %v1244 = vpop.f32.mrb[0].mxu0
        %1245 = vmatprep.mubr.bf16.mxu0 0
        %1246 = vmatmul.mubr.bf16.gmra.mrb[0].mxu0 %v1022
        %v1247 = vpop.f32.mrb[0].mxu0
        %v1248 = vadd.f32 0.0, %v1247
        %v1249 = vpop.f32.mrb[0].mxu0
        %v1250 = vpop.f32.mrb[0].mxu0
        %v1251 = vadd.f32 0.0, %v1250
        %v1252 = vpop.f32.mrb[0].mxu0
        %1253 = vmatprep.mubr.bf16.mxu0 0
        %1254 = vmatmul.mubr.bf16.gmra.mrb[0].mxu0 %v1024
        %v1255 = vpop.f32.mrb[0].mxu0
        %v1256 = vadd.f32 0.0, %v1255
        %v1257 = vpop.f32.mrb[0].mxu0
        %v1258 = vpop.f32.mrb[0].mxu0
        %v1259 = vadd.f32 0.0, %v1258
        %v1260 = vpop.f32.mrb[0].mxu0
        %1261 = vmatprep.mubr.bf16.mxu0 0
        %1262 = vmatmul.mubr.bf16.gmra.mrb[0].mxu0 %v1026
        %v1263 = vpop.f32.mrb[0].mxu0
        %v1264 = vadd.f32 0.0, %v1263
        %v1265 = vpop.f32.mrb[0].mxu0
        %v1266 = vpop.f32.mrb[0].mxu0
        %v1267 = vadd.f32 0.0, %v1266
        %v1268 = vpop.f32.mrb[0].mxu0
        %1269 = vdwg.mxu0
        %v1270 = vadd.f32 %v811, %v1128
        %v1271 = vadd.f32 %v814, %v1131
        %v1272 = vadd.f32 %v819, %v1136
        %v1273 = vadd.f32 %v822, %v1139
        %v1274 = vadd.f32 %v827, %v1144
        %v1275 = vadd.f32 %v830, %v1147
        %v1276 = vadd.f32 %v835, %v1152
        %v1277 = vadd.f32 %v838, %v1155
        %v1278 = vadd.f32 %v843, %v1160
        %v1279 = vadd.f32 %v846, %v1163
        %v1280 = vadd.f32 %v851, %v1168
        %v1281 = vadd.f32 %v854, %v1171
        %v1282 = vadd.f32 %v859, %v1176
        %v1283 = vadd.f32 %v862, %v1179
        %v1284 = vadd.f32 %v867, %v1184
        %v1285 = vadd.f32 %v870, %v1187
        %v1286 = vadd.f32 %v875, %v1192
        %v1287 = vadd.f32 %v878, %v1195
        %v1288 = vadd.f32 %v883, %v1200
        %v1289 = vadd.f32 %v886, %v1203
        %v1290 = vadd.f32 %v891, %v1208
        %v1291 = vadd.f32 %v894, %v1211
        %v1292 = vadd.f32 %v899, %v1216
        %v1293 = vadd.f32 %v902, %v1219
        %v1294 = vadd.f32 %v907, %v1224
        %v1295 = vadd.f32 %v910, %v1227
        %v1296 = vadd.f32 %v915, %v1232
        %v1297 = vadd.f32 %v918, %v1235
        %v1298 = vadd.f32 %v923, %v1240
        %v1299 = vadd.f32 %v926, %v1243
        %v1300 = vadd.f32 %v931, %v1248
        %v1301 = vadd.f32 %v934, %v1251
        %v1302 = vadd.f32 %v939, %v1256
        %v1303 = vadd.f32 %v942, %v1259
        %v1304 = vadd.f32 %v947, %v1264
        %v1305 = vadd.f32 %v950, %v1267
        %v1306 = vpack.c.bf16 %v280, %v279
        %v1307 = vpack.c.bf16 %v281, %v281
        %s1308 = scalar_lea.vmem [#allocation5], 192
        %v1309 = vld [vmem:[%s1308] sm:$0xf]
        %v1310 = vld [vmem:[%s1308 + $0x4] sm:$0xf]
        %v1311 = vld [vmem:[%s1308 + $0x8] sm:$0xf]
        %v1312 = vld [vmem:[%s1308 + $0xc] sm:$0xf]
        %v1313 = vld [vmem:[%s1308 + $0x10] sm:$0xf]
        %v1314 = vld [vmem:[%s1308 + $0x14] sm:$0xf]
        %v1315 = vld [vmem:[%s1308 + $0x18] sm:$0xf]
        %v1316 = vld [vmem:[%s1308 + $0x1c] sm:$0xf]
        %v1317 = vld [vmem:[%s1308 + $0x20] sm:$0xf]
        %v1318 = vld [vmem:[%s1308 + $0x24] sm:$0xf]
        %v1319 = vld [vmem:[%s1308 + $0x28] sm:$0xf]
        %v1320 = vld [vmem:[%s1308 + $0x2c] sm:$0xf]
        %v1321 = vld [vmem:[%s1308 + $0x30] sm:$0xf]
        %v1322 = vld [vmem:[%s1308 + $0x34] sm:$0xf]
        %v1323 = vld [vmem:[%s1308 + $0x38] sm:$0xf]
        %v1324 = vld [vmem:[%s1308 + $0x3c] sm:$0xf]
        %v1327 = vrot.slane %v1306, 1
        %v1328 = vsel %vm989, %v1023, %v1327
        %v1329 = vrot.slane %v1307, 1
        %v1330 = vsel %vm989, %v1327, %v1329
        %v1349 = vunpack.c.l.b16 %v1309
        %v1350 = vunpack.c.l.b16 %v1310
        %v1351 = vunpack.c.l.b16 %v1311
        %v1352 = vunpack.c.l.b16 %v1312
        %v1353 = vunpack.c.l.b16 %v1313
        %v1354 = vunpack.c.l.b16 %v1314
        %v1355 = vunpack.c.l.b16 %v1315
        %v1356 = vunpack.c.l.b16 %v1316
        %v1357 = vunpack.c.l.b16 %v1317
        %v1358 = vunpack.c.l.b16 %v1318
        %v1359 = vunpack.c.l.b16 %v1319
        %v1360 = vunpack.c.l.b16 %v1320
        %v1361 = vunpack.c.l.b16 %v1321
        %v1362 = vunpack.c.l.b16 %v1322
        %v1363 = vunpack.c.l.b16 %v1323
        %v1364 = vunpack.c.l.b16 %v1324
        %v1365 = vpack.c.b16 %v1350, %v1349
        %v1366 = vpack.c.b16 %v1352, %v1351
        %v1367 = vpack.c.b16 %v1354, %v1353
        %v1368 = vpack.c.b16 %v1356, %v1355
        %v1369 = vpack.c.b16 %v1358, %v1357
        %v1370 = vpack.c.b16 %v1360, %v1359
        %v1371 = vpack.c.b16 %v1362, %v1361
        %v1372 = vpack.c.b16 %v1364, %v1363
        %1381 = vmatprep.subr.bf16.mxu0 0
        %1382 = vmatpush1.bf16.msra.mxu0 %v1365
        %1383 = vmatprep.subr.bf16.mxu0 0
        %1384 = vmatpush1.bf16.msra.mxu0 %v1366
        %1385 = vmatprep.subr.bf16.mxu0 0
        %1386 = vmatpush1.bf16.msra.mxu0 %v1367
        %1387 = vmatprep.subr.bf16.mxu0 0
        %1388 = vmatpush1.bf16.msra.mxu0 %v1368
        %1389 = vmatprep.subr.bf16.mxu0 0
        %1390 = vmatpush1.bf16.msra.mxu0 %v1369
        %1391 = vmatprep.subr.bf16.mxu0 0
        %1392 = vmatpush1.bf16.msra.mxu0 %v1370
        %1393 = vmatprep.subr.bf16.mxu0 0
        %1394 = vmatpush1.bf16.msra.mxu0 %v1371
        %1395 = vmatprep.subr.bf16.mxu0 0
        %1396 = vmatpush1.bf16.msra.mxu0 %v1372
        %1397 = vmatprep.subr.bf16.mxu0 0
        %1398 = vmatpush1.bf16.msra.mxu0 0
        %1399 = vmatprep.subr.bf16.mxu0 0
        %1400 = vmatpush1.bf16.msra.mxu0 0
        %1401 = vmatprep.subr.bf16.mxu0 0
        %1402 = vmatpush1.bf16.msra.mxu0 0
        %1403 = vmatprep.subr.bf16.mxu0 0
        %1404 = vmatpush1.bf16.msra.mxu0 0
        %1405 = vmatprep.subr.bf16.mxu0 0
        %1406 = vmatpush1.bf16.msra.mxu0 0
        %1407 = vmatprep.subr.bf16.mxu0 0
        %1408 = vmatpush1.bf16.msra.mxu0 0
        %1409 = vmatprep.subr.bf16.mxu0 0
        %1410 = vmatpush1.bf16.msra.mxu0 0
        %1411 = vmatprep.subr.bf16.mxu0 0
        %1412 = vmatpush1.bf16.msra.mxu0 0
        %1413 = vmatprep.mubr.bf16.mxu0 0
        %1414 = vmatmul.mubr.bf16.gmra.mrb[0].mxu0 %v994
        %v1415 = vpop.f32.mrb[0].mxu0
        %v1416 = vadd.f32 0.0, %v1415
        %v1417 = vpop.f32.mrb[0].mxu0
        %v1418 = vpop.f32.mrb[0].mxu0
        %v1419 = vadd.f32 0.0, %v1418
        %v1420 = vpop.f32.mrb[0].mxu0
        %1421 = vmatprep.mubr.bf16.mxu0 0
        %1422 = vmatmul.mubr.bf16.gmra.mrb[0].mxu0 %v996
        %v1423 = vpop.f32.mrb[0].mxu0
        %v1424 = vadd.f32 0.0, %v1423
        %v1425 = vpop.f32.mrb[0].mxu0
        %v1426 = vpop.f32.mrb[0].mxu0
        %v1427 = vadd.f32 0.0, %v1426
        %v1428 = vpop.f32.mrb[0].mxu0
        %1429 = vmatprep.mubr.bf16.mxu0 0
        %1430 = vmatmul.mubr.bf16.gmra.mrb[0].mxu0 %v998
        %v1431 = vpop.f32.mrb[0].mxu0
        %v1432 = vadd.f32 0.0, %v1431
        %v1433 = vpop.f32.mrb[0].mxu0
        %v1434 = vpop.f32.mrb[0].mxu0
        %v1435 = vadd.f32 0.0, %v1434
        %v1436 = vpop.f32.mrb[0].mxu0
        %1437 = vmatprep.mubr.bf16.mxu0 0
        %1438 = vmatmul.mubr.bf16.gmra.mrb[0].mxu0 %v1000
        %v1439 = vpop.f32.mrb[0].mxu0
        %v1440 = vadd.f32 0.0, %v1439
        %v1441 = vpop.f32.mrb[0].mxu0
        %v1442 = vpop.f32.mrb[0].mxu0
        %v1443 = vadd.f32 0.0, %v1442
        %v1444 = vpop.f32.mrb[0].mxu0
        %1445 = vmatprep.mubr.bf16.mxu0 0
        %1446 = vmatmul.mubr.bf16.gmra.mrb[0].mxu0 %v1002
        %v1447 = vpop.f32.mrb[0].mxu0
        %v1448 = vadd.f32 0.0, %v1447
        %v1449 = vpop.f32.mrb[0].mxu0
        %v1450 = vpop.f32.mrb[0].mxu0
        %v1451 = vadd.f32 0.0, %v1450
        %v1452 = vpop.f32.mrb[0].mxu0
        %1453 = vmatprep.mubr.bf16.mxu0 0
        %1454 = vmatmul.mubr.bf16.gmra.mrb[0].mxu0 %v1004
        %v1455 = vpop.f32.mrb[0].mxu0
        %v1456 = vadd.f32 0.0, %v1455
        %v1457 = vpop.f32.mrb[0].mxu0
        %v1458 = vpop.f32.mrb[0].mxu0
        %v1459 = vadd.f32 0.0, %v1458
        %v1460 = vpop.f32.mrb[0].mxu0
        %1461 = vmatprep.mubr.bf16.mxu0 0
        %1462 = vmatmul.mubr.bf16.gmra.mrb[0].mxu0 %v1006
        %v1463 = vpop.f32.mrb[0].mxu0
        %v1464 = vadd.f32 0.0, %v1463
        %v1465 = vpop.f32.mrb[0].mxu0
        %v1466 = vpop.f32.mrb[0].mxu0
        %v1467 = vadd.f32 0.0, %v1466
        %v1468 = vpop.f32.mrb[0].mxu0
        %1469 = vmatprep.mubr.bf16.mxu0 0
        %1470 = vmatmul.mubr.bf16.gmra.mrb[0].mxu0 %v1008
        %v1471 = vpop.f32.mrb[0].mxu0
        %v1472 = vadd.f32 0.0, %v1471
        %v1473 = vpop.f32.mrb[0].mxu0
        %v1474 = vpop.f32.mrb[0].mxu0
        %v1475 = vadd.f32 0.0, %v1474
        %v1476 = vpop.f32.mrb[0].mxu0
        %1477 = vmatprep.mubr.bf16.mxu0 0
        %1478 = vmatmul.mubr.bf16.gmra.mrb[0].mxu0 %v1010
        %v1479 = vpop.f32.mrb[0].mxu0
        %v1480 = vadd.f32 0.0, %v1479
        %v1481 = vpop.f32.mrb[0].mxu0
        %v1482 = vpop.f32.mrb[0].mxu0
        %v1483 = vadd.f32 0.0, %v1482
        %v1484 = vpop.f32.mrb[0].mxu0
        %1485 = vmatprep.mubr.bf16.mxu0 0
        %1486 = vmatmul.mubr.bf16.gmra.mrb[0].mxu0 %v1012
        %v1487 = vpop.f32.mrb[0].mxu0
        %v1488 = vadd.f32 0.0, %v1487
        %v1489 = vpop.f32.mrb[0].mxu0
        %v1490 = vpop.f32.mrb[0].mxu0
        %v1491 = vadd.f32 0.0, %v1490
        %v1492 = vpop.f32.mrb[0].mxu0
        %1493 = vmatprep.mubr.bf16.mxu0 0
        %1494 = vmatmul.mubr.bf16.gmra.mrb[0].mxu0 %v1014
        %v1495 = vpop.f32.mrb[0].mxu0
        %v1496 = vadd.f32 0.0, %v1495
        %v1497 = vpop.f32.mrb[0].mxu0
        %v1498 = vpop.f32.mrb[0].mxu0
        %v1499 = vadd.f32 0.0, %v1498
        %v1500 = vpop.f32.mrb[0].mxu0
        %1501 = vmatprep.mubr.bf16.mxu0 0
        %1502 = vmatmul.mubr.bf16.gmra.mrb[0].mxu0 %v1016
        %v1503 = vpop.f32.mrb[0].mxu0
        %v1504 = vadd.f32 0.0, %v1503
        %v1505 = vpop.f32.mrb[0].mxu0
        %v1506 = vpop.f32.mrb[0].mxu0
        %v1507 = vadd.f32 0.0, %v1506
        %v1508 = vpop.f32.mrb[0].mxu0
        %1509 = vmatprep.mubr.bf16.mxu0 0
        %1510 = vmatmul.mubr.bf16.gmra.mrb[0].mxu0 %v1018
        %v1511 = vpop.f32.mrb[0].mxu0
        %v1512 = vadd.f32 0.0, %v1511
        %v1513 = vpop.f32.mrb[0].mxu0
        %v1514 = vpop.f32.mrb[0].mxu0
        %v1515 = vadd.f32 0.0, %v1514
        %v1516 = vpop.f32.mrb[0].mxu0
        %1517 = vmatprep.mubr.bf16.mxu0 0
        %1518 = vmatmul.mubr.bf16.gmra.mrb[0].mxu0 %v1020
        %v1519 = vpop.f32.mrb[0].mxu0
        %v1520 = vadd.f32 0.0, %v1519
        %v1521 = vpop.f32.mrb[0].mxu0
        %v1522 = vpop.f32.mrb[0].mxu0
        %v1523 = vadd.f32 0.0, %v1522
        %v1524 = vpop.f32.mrb[0].mxu0
        %1525 = vmatprep.mubr.bf16.mxu0 0
        %1526 = vmatmul.mubr.bf16.gmra.mrb[0].mxu0 %v1022
        %v1527 = vpop.f32.mrb[0].mxu0
        %v1528 = vadd.f32 0.0, %v1527
        %v1529 = vpop.f32.mrb[0].mxu0
        %v1530 = vpop.f32.mrb[0].mxu0
        %v1531 = vadd.f32 0.0, %v1530
        %v1532 = vpop.f32.mrb[0].mxu0
        %1533 = vmatprep.mubr.bf16.mxu0 0
        %1534 = vmatmul.mubr.bf16.gmra.mrb[0].mxu0 %v1024
        %v1535 = vpop.f32.mrb[0].mxu0
        %v1536 = vadd.f32 0.0, %v1535
        %v1537 = vpop.f32.mrb[0].mxu0
        %v1538 = vpop.f32.mrb[0].mxu0
        %v1539 = vadd.f32 0.0, %v1538
        %v1540 = vpop.f32.mrb[0].mxu0
        %1541 = vmatprep.mubr.bf16.mxu0 0
        %1542 = vmatmul.mubr.bf16.gmra.mrb[0].mxu0 %v1328
        %v1543 = vpop.f32.mrb[0].mxu0
        %v1544 = vadd.f32 0.0, %v1543
        %v1545 = vpop.f32.mrb[0].mxu0
        %v1546 = vpop.f32.mrb[0].mxu0
        %v1547 = vadd.f32 0.0, %v1546
        %v1548 = vpop.f32.mrb[0].mxu0
        %1549 = vmatprep.mubr.bf16.mxu0 0
        %1550 = vmatmul.mubr.bf16.gmra.mrb[0].mxu0 %v1330
        %v1551 = vpop.f32.mrb[0].mxu0
        %v1552 = vadd.f32 0.0, %v1551
        %v1553 = vpop.f32.mrb[0].mxu0
        %v1554 = vpop.f32.mrb[0].mxu0
        %v1555 = vadd.f32 0.0, %v1554
        %v1556 = vpop.f32.mrb[0].mxu0
        %1557 = vdwg.mxu0
        %v1558 = vadd.f32 %v1270, %v1416
        %v1559 = vadd.f32 %v1271, %v1419
        %v1560 = vadd.f32 %v1272, %v1424
        %v1561 = vadd.f32 %v1273, %v1427
        %v1562 = vadd.f32 %v1274, %v1432
        %v1563 = vadd.f32 %v1275, %v1435
        %v1564 = vadd.f32 %v1276, %v1440
        %v1565 = vadd.f32 %v1277, %v1443
        %v1566 = vadd.f32 %v1278, %v1448
        %v1567 = vadd.f32 %v1279, %v1451
        %v1568 = vadd.f32 %v1280, %v1456
        %v1569 = vadd.f32 %v1281, %v1459
        %v1570 = vadd.f32 %v1282, %v1464
        %v1571 = vadd.f32 %v1283, %v1467
        %v1572 = vadd.f32 %v1284, %v1472
        %v1573 = vadd.f32 %v1285, %v1475
        %v1574 = vadd.f32 %v1286, %v1480
        %v1575 = vadd.f32 %v1287, %v1483
        %v1576 = vadd.f32 %v1288, %v1488
        %v1577 = vadd.f32 %v1289, %v1491
        %v1578 = vadd.f32 %v1290, %v1496
        %v1579 = vadd.f32 %v1291, %v1499
        %v1580 = vadd.f32 %v1292, %v1504
        %v1581 = vadd.f32 %v1293, %v1507
        %v1582 = vadd.f32 %v1294, %v1512
        %v1583 = vadd.f32 %v1295, %v1515
        %v1584 = vadd.f32 %v1296, %v1520
        %v1585 = vadd.f32 %v1297, %v1523
        %v1586 = vadd.f32 %v1298, %v1528
        %v1587 = vadd.f32 %v1299, %v1531
        %v1588 = vadd.f32 %v1300, %v1536
        %v1589 = vadd.f32 %v1301, %v1539
        %v1590 = vadd.f32 %v1302, %v1544
        %v1591 = vadd.f32 %v1303, %v1547
        %v1592 = vadd.f32 %v1304, %v1552
        %v1593 = vadd.f32 %v1305, %v1555
        %s1594 = scalar_lea.vmem [#allocation5], 256
        %v1595 = vld [vmem:[%s1594] sm:$0xf]
        %v1596 = vld [vmem:[%s1594 + $0x4] sm:$0xf]
        %v1597 = vld [vmem:[%s1594 + $0x8] sm:$0xf]
        %v1598 = vld [vmem:[%s1594 + $0xc] sm:$0xf]
        %v1599 = vld [vmem:[%s1594 + $0x10] sm:$0xf]
        %v1600 = vld [vmem:[%s1594 + $0x14] sm:$0xf]
        %v1601 = vld [vmem:[%s1594 + $0x18] sm:$0xf]
        %v1602 = vld [vmem:[%s1594 + $0x1c] sm:$0xf]
        %v1603 = vld [vmem:[%s1594 + $0x20] sm:$0xf]
        %v1604 = vld [vmem:[%s1594 + $0x24] sm:$0xf]
        %v1605 = vld [vmem:[%s1594 + $0x28] sm:$0xf]
        %v1606 = vld [vmem:[%s1594 + $0x2c] sm:$0xf]
        %v1607 = vld [vmem:[%s1594 + $0x30] sm:$0xf]
        %v1608 = vld [vmem:[%s1594 + $0x34] sm:$0xf]
        %v1609 = vld [vmem:[%s1594 + $0x38] sm:$0xf]
        %v1610 = vld [vmem:[%s1594 + $0x3c] sm:$0xf]
        %vm1611 = vsmask.f32 6400
        %v1612 = vrot.slane %v349, 1
        %v1613 = vrot.slane %v345, 2
        %v1614 = vor.u32 %v1612, %v1613
        %v1615 = vrot.slane %v357, 1
        %v1616 = vrot.slane %v353, 2
        %v1617 = vor.u32 %v1615, %v1616
        %v1618 = vsel %vm1611, %v1614, %v1617
        %v1619 = vrot.slane %v365, 1
        %v1620 = vrot.slane %v361, 2
        %v1621 = vor.u32 %v1619, %v1620
        %v1622 = vsel %vm1611, %v1617, %v1621
        %v1623 = vrot.slane %v373, 1
        %v1624 = vrot.slane %v369, 2
        %v1625 = vor.u32 %v1623, %v1624
        %v1626 = vsel %vm1611, %v1621, %v1625
        %v1627 = vrot.slane %v381, 1
        %v1628 = vrot.slane %v377, 2
        %v1629 = vor.u32 %v1627, %v1628
        %v1630 = vsel %vm1611, %v1625, %v1629
        %v1631 = vrot.slane %v389, 1
        %v1632 = vrot.slane %v385, 2
        %v1633 = vor.u32 %v1631, %v1632
        %v1634 = vsel %vm1611, %v1629, %v1633
        %v1635 = vrot.slane %v397, 1
        %v1636 = vrot.slane %v393, 2
        %v1637 = vor.u32 %v1635, %v1636
        %v1638 = vsel %vm1611, %v1633, %v1637
        %v1639 = vrot.slane %v405, 1
        %v1640 = vrot.slane %v401, 2
        %v1641 = vor.u32 %v1639, %v1640
        %v1642 = vsel %vm1611, %v1637, %v1641
        %v1643 = vrot.slane %v413, 1
        %v1644 = vrot.slane %v409, 2
        %v1645 = vor.u32 %v1643, %v1644
        %v1646 = vsel %vm1611, %v1641, %v1645
        %v1647 = vrot.slane %v421, 1
        %v1648 = vrot.slane %v417, 2
        %v1649 = vor.u32 %v1647, %v1648
        %v1650 = vsel %vm1611, %v1645, %v1649
        %v1651 = vrot.slane %v429, 1
        %v1652 = vrot.slane %v425, 2
        %v1653 = vor.u32 %v1651, %v1652
        %v1654 = vsel %vm1611, %v1649, %v1653
        %v1655 = vrot.slane %v437, 1
        %v1656 = vrot.slane %v433, 2
        %v1657 = vor.u32 %v1655, %v1656
        %v1658 = vsel %vm1611, %v1653, %v1657
        %v1659 = vrot.slane %v445, 1
        %v1660 = vrot.slane %v441, 2
        %v1661 = vor.u32 %v1659, %v1660
        %v1662 = vsel %vm1611, %v1657, %v1661
        %v1663 = vrot.slane %v453, 1
        %v1664 = vrot.slane %v449, 2
        %v1665 = vor.u32 %v1663, %v1664
        %v1666 = vsel %vm1611, %v1661, %v1665
        %v1667 = vrot.slane %v461, 1
        %v1668 = vrot.slane %v457, 2
        %v1669 = vor.u32 %v1667, %v1668
        %v1670 = vsel %vm1611, %v1665, %v1669
        %v1671 = vrot.slane %v469, 1
        %v1672 = vrot.slane %v465, 2
        %v1673 = vor.u32 %v1671, %v1672
        %v1674 = vsel %vm1611, %v1669, %v1673
        %v1675 = vrot.slane %v477, 1
        %v1676 = vrot.slane %v473, 2
        %v1677 = vor.u32 %v1675, %v1676
        %v1678 = vsel %vm1611, %v1673, %v1677
        %v1680 = vshrl.u32 %v1306, 16
        %v1682 = vrot.slane %v1680, 1
        %v1683 = vshll.u32 %v1306, 16
        %v1685 = vrot.slane %v1683, 2
        %v1686 = vor.u32 %v1682, %v1685
        %v1687 = vsel %vm1611, %v1677, %v1686
        %v1689 = vshrl.u32 %v1307, 16
        %v1691 = vrot.slane %v1689, 1
        %v1692 = vshll.u32 %v1307, 16
        %v1694 = vrot.slane %v1692, 2
        %v1695 = vor.u32 %v1691, %v1694
        %v1696 = vsel %vm1611, %v1686, %v1695
        %v1731 = vunpack.c.l.b16 %v1595
        %v1732 = vunpack.c.l.b16 %v1596
        %v1733 = vunpack.c.l.b16 %v1597
        %v1734 = vunpack.c.l.b16 %v1598
        %v1735 = vunpack.c.l.b16 %v1599
        %v1736 = vunpack.c.l.b16 %v1600
        %v1737 = vunpack.c.l.b16 %v1601
        %v1738 = vunpack.c.l.b16 %v1602
        %v1739 = vunpack.c.l.b16 %v1603
        %v1740 = vunpack.c.l.b16 %v1604
        %v1741 = vunpack.c.l.b16 %v1605
        %v1742 = vunpack.c.l.b16 %v1606
        %v1743 = vunpack.c.l.b16 %v1607
        %v1744 = vunpack.c.l.b16 %v1608
        %v1745 = vunpack.c.l.b16 %v1609
        %v1746 = vunpack.c.l.b16 %v1610
        %v1747 = vpack.c.b16 %v1732, %v1731
        %v1748 = vpack.c.b16 %v1734, %v1733
        %v1749 = vpack.c.b16 %v1736, %v1735
        %v1750 = vpack.c.b16 %v1738, %v1737
        %v1751 = vpack.c.b16 %v1740, %v1739
        %v1752 = vpack.c.b16 %v1742, %v1741
        %v1753 = vpack.c.b16 %v1744, %v1743
        %v1754 = vpack.c.b16 %v1746, %v1745
        %1763 = vmatprep.subr.bf16.mxu0 0
        %1764 = vmatpush1.bf16.msra.mxu0 %v1747
        %1765 = vmatprep.subr.bf16.mxu0 0
        %1766 = vmatpush1.bf16.msra.mxu0 %v1748
        %1767 = vmatprep.subr.bf16.mxu0 0
        %1768 = vmatpush1.bf16.msra.mxu0 %v1749
        %1769 = vmatprep.subr.bf16.mxu0 0
        %1770 = vmatpush1.bf16.msra.mxu0 %v1750
        %1771 = vmatprep.subr.bf16.mxu0 0
        %1772 = vmatpush1.bf16.msra.mxu0 %v1751
        %1773 = vmatprep.subr.bf16.mxu0 0
        %1774 = vmatpush1.bf16.msra.mxu0 %v1752
        %1775 = vmatprep.subr.bf16.mxu0 0
        %1776 = vmatpush1.bf16.msra.mxu0 %v1753
        %1777 = vmatprep.subr.bf16.mxu0 0
        %1778 = vmatpush1.bf16.msra.mxu0 %v1754
        %1779 = vmatprep.subr.bf16.mxu0 0
        %1780 = vmatpush1.bf16.msra.mxu0 0
        %1781 = vmatprep.subr.bf16.mxu0 0
        %1782 = vmatpush1.bf16.msra.mxu0 0
        %1783 = vmatprep.subr.bf16.mxu0 0
        %1784 = vmatpush1.bf16.msra.mxu0 0
        %1785 = vmatprep.subr.bf16.mxu0 0
        %1786 = vmatpush1.bf16.msra.mxu0 0
        %1787 = vmatprep.subr.bf16.mxu0 0
        %1788 = vmatpush1.bf16.msra.mxu0 0
        %1789 = vmatprep.subr.bf16.mxu0 0
        %1790 = vmatpush1.bf16.msra.mxu0 0
        %1791 = vmatprep.subr.bf16.mxu0 0
        %1792 = vmatpush1.bf16.msra.mxu0 0
        %1793 = vmatprep.subr.bf16.mxu0 0
        %1794 = vmatpush1.bf16.msra.mxu0 0
        %1795 = vmatprep.mubr.bf16.mxu0 0
        %1796 = vmatmul.mubr.bf16.gmra.mrb[0].mxu0 %v1618
        %v1797 = vpop.f32.mrb[0].mxu0
        %v1798 = vadd.f32 0.0, %v1797
        %v1799 = vpop.f32.mrb[0].mxu0
        %v1800 = vpop.f32.mrb[0].mxu0
        %v1801 = vadd.f32 0.0, %v1800
        %v1802 = vpop.f32.mrb[0].mxu0
        %1803 = vmatprep.mubr.bf16.mxu0 0
        %1804 = vmatmul.mubr.bf16.gmra.mrb[0].mxu0 %v1622
        %v1805 = vpop.f32.mrb[0].mxu0
        %v1806 = vadd.f32 0.0, %v1805
        %v1807 = vpop.f32.mrb[0].mxu0
        %v1808 = vpop.f32.mrb[0].mxu0
        %v1809 = vadd.f32 0.0, %v1808
        %v1810 = vpop.f32.mrb[0].mxu0
        %1811 = vmatprep.mubr.bf16.mxu0 0
        %1812 = vmatmul.mubr.bf16.gmra.mrb[0].mxu0 %v1626
        %v1813 = vpop.f32.mrb[0].mxu0
        %v1814 = vadd.f32 0.0, %v1813
        %v1815 = vpop.f32.mrb[0].mxu0
        %v1816 = vpop.f32.mrb[0].mxu0
        %v1817 = vadd.f32 0.0, %v1816
        %v1818 = vpop.f32.mrb[0].mxu0
        %1819 = vmatprep.mubr.bf16.mxu0 0
        %1820 = vmatmul.mubr.bf16.gmra.mrb[0].mxu0 %v1630
        %v1821 = vpop.f32.mrb[0].mxu0
        %v1822 = vadd.f32 0.0, %v1821
        %v1823 = vpop.f32.mrb[0].mxu0
        %v1824 = vpop.f32.mrb[0].mxu0
        %v1825 = vadd.f32 0.0, %v1824
        %v1826 = vpop.f32.mrb[0].mxu0
        %1827 = vmatprep.mubr.bf16.mxu0 0
        %1828 = vmatmul.mubr.bf16.gmra.mrb[0].mxu0 %v1634
        %v1829 = vpop.f32.mrb[0].mxu0
        %v1830 = vadd.f32 0.0, %v1829
        %v1831 = vpop.f32.mrb[0].mxu0
        %v1832 = vpop.f32.mrb[0].mxu0
        %v1833 = vadd.f32 0.0, %v1832
        %v1834 = vpop.f32.mrb[0].mxu0
        %1835 = vmatprep.mubr.bf16.mxu0 0
        %1836 = vmatmul.mubr.bf16.gmra.mrb[0].mxu0 %v1638
        %v1837 = vpop.f32.mrb[0].mxu0
        %v1838 = vadd.f32 0.0, %v1837
        %v1839 = vpop.f32.mrb[0].mxu0
        %v1840 = vpop.f32.mrb[0].mxu0
        %v1841 = vadd.f32 0.0, %v1840
        %v1842 = vpop.f32.mrb[0].mxu0
        %1843 = vmatprep.mubr.bf16.mxu0 0
        %1844 = vmatmul.mubr.bf16.gmra.mrb[0].mxu0 %v1642
        %v1845 = vpop.f32.mrb[0].mxu0
        %v1846 = vadd.f32 0.0, %v1845
        %v1847 = vpop.f32.mrb[0].mxu0
        %v1848 = vpop.f32.mrb[0].mxu0
        %v1849 = vadd.f32 0.0, %v1848
        %v1850 = vpop.f32.mrb[0].mxu0
        %1851 = vmatprep.mubr.bf16.mxu0 0
        %1852 = vmatmul.mubr.bf16.gmra.mrb[0].mxu0 %v1646
        %v1853 = vpop.f32.mrb[0].mxu0
        %v1854 = vadd.f32 0.0, %v1853
        %v1855 = vpop.f32.mrb[0].mxu0
        %v1856 = vpop.f32.mrb[0].mxu0
        %v1857 = vadd.f32 0.0, %v1856
        %v1858 = vpop.f32.mrb[0].mxu0
        %1859 = vmatprep.mubr.bf16.mxu0 0
        %1860 = vmatmul.mubr.bf16.gmra.mrb[0].mxu0 %v1650
        %v1861 = vpop.f32.mrb[0].mxu0
        %v1862 = vadd.f32 0.0, %v1861
        %v1863 = vpop.f32.mrb[0].mxu0
        %v1864 = vpop.f32.mrb[0].mxu0
        %v1865 = vadd.f32 0.0, %v1864
        %v1866 = vpop.f32.mrb[0].mxu0
        %1867 = vmatprep.mubr.bf16.mxu0 0
        %1868 = vmatmul.mubr.bf16.gmra.mrb[0].mxu0 %v1654
        %v1869 = vpop.f32.mrb[0].mxu0
        %v1870 = vadd.f32 0.0, %v1869
        %v1871 = vpop.f32.mrb[0].mxu0
        %v1872 = vpop.f32.mrb[0].mxu0
        %v1873 = vadd.f32 0.0, %v1872
        %v1874 = vpop.f32.mrb[0].mxu0
        %1875 = vmatprep.mubr.bf16.mxu0 0
        %1876 = vmatmul.mubr.bf16.gmra.mrb[0].mxu0 %v1658
        %v1877 = vpop.f32.mrb[0].mxu0
        %v1878 = vadd.f32 0.0, %v1877
        %v1879 = vpop.f32.mrb[0].mxu0
        %v1880 = vpop.f32.mrb[0].mxu0
        %v1881 = vadd.f32 0.0, %v1880
        %v1882 = vpop.f32.mrb[0].mxu0
        %1883 = vmatprep.mubr.bf16.mxu0 0
        %1884 = vmatmul.mubr.bf16.gmra.mrb[0].mxu0 %v1662
        %v1885 = vpop.f32.mrb[0].mxu0
        %v1886 = vadd.f32 0.0, %v1885
        %v1887 = vpop.f32.mrb[0].mxu0
        %v1888 = vpop.f32.mrb[0].mxu0
        %v1889 = vadd.f32 0.0, %v1888
        %v1890 = vpop.f32.mrb[0].mxu0
        %1891 = vmatprep.mubr.bf16.mxu0 0
        %1892 = vmatmul.mubr.bf16.gmra.mrb[0].mxu0 %v1666
        %v1893 = vpop.f32.mrb[0].mxu0
        %v1894 = vadd.f32 0.0, %v1893
        %v1895 = vpop.f32.mrb[0].mxu0
        %v1896 = vpop.f32.mrb[0].mxu0
        %v1897 = vadd.f32 0.0, %v1896
        %v1898 = vpop.f32.mrb[0].mxu0
        %1899 = vmatprep.mubr.bf16.mxu0 0
        %1900 = vmatmul.mubr.bf16.gmra.mrb[0].mxu0 %v1670
        %v1901 = vpop.f32.mrb[0].mxu0
        %v1902 = vadd.f32 0.0, %v1901
        %v1903 = vpop.f32.mrb[0].mxu0
        %v1904 = vpop.f32.mrb[0].mxu0
        %v1905 = vadd.f32 0.0, %v1904
        %v1906 = vpop.f32.mrb[0].mxu0
        %1907 = vmatprep.mubr.bf16.mxu0 0
        %1908 = vmatmul.mubr.bf16.gmra.mrb[0].mxu0 %v1674
        %v1909 = vpop.f32.mrb[0].mxu0
        %v1910 = vadd.f32 0.0, %v1909
        %v1911 = vpop.f32.mrb[0].mxu0
        %v1912 = vpop.f32.mrb[0].mxu0
        %v1913 = vadd.f32 0.0, %v1912
        %v1914 = vpop.f32.mrb[0].mxu0
        %1915 = vmatprep.mubr.bf16.mxu0 0
        %1916 = vmatmul.mubr.bf16.gmra.mrb[0].mxu0 %v1678
        %v1917 = vpop.f32.mrb[0].mxu0
        %v1918 = vadd.f32 0.0, %v1917
        %v1919 = vpop.f32.mrb[0].mxu0
        %v1920 = vpop.f32.mrb[0].mxu0
        %v1921 = vadd.f32 0.0, %v1920
        %v1922 = vpop.f32.mrb[0].mxu0
        %1923 = vmatprep.mubr.bf16.mxu0 0
        %1924 = vmatmul.mubr.bf16.gmra.mrb[0].mxu0 %v1687
        %v1925 = vpop.f32.mrb[0].mxu0
        %v1926 = vadd.f32 0.0, %v1925
        %v1927 = vpop.f32.mrb[0].mxu0
        %v1928 = vpop.f32.mrb[0].mxu0
        %v1929 = vadd.f32 0.0, %v1928
        %v1930 = vpop.f32.mrb[0].mxu0
        %1931 = vmatprep.mubr.bf16.mxu0 0
        %1932 = vmatmul.mubr.bf16.gmra.mrb[0].mxu0 %v1696
        %v1933 = vpop.f32.mrb[0].mxu0
        %v1934 = vadd.f32 0.0, %v1933
        %v1935 = vpop.f32.mrb[0].mxu0
        %v1936 = vpop.f32.mrb[0].mxu0
        %v1937 = vadd.f32 0.0, %v1936
        %v1938 = vpop.f32.mrb[0].mxu0
        %1939 = vdwg.mxu0
        %v1940 = vadd.f32 %v1558, %v1798
        %v1941 = vadd.f32 %v1559, %v1801
        %v1942 = vadd.f32 %v1560, %v1806
        %v1943 = vadd.f32 %v1561, %v1809
        %v1944 = vadd.f32 %v1562, %v1814
        %v1945 = vadd.f32 %v1563, %v1817
        %v1946 = vadd.f32 %v1564, %v1822
        %v1947 = vadd.f32 %v1565, %v1825
        %v1948 = vadd.f32 %v1566, %v1830
        %v1949 = vadd.f32 %v1567, %v1833
        %v1950 = vadd.f32 %v1568, %v1838
        %v1951 = vadd.f32 %v1569, %v1841
        %v1952 = vadd.f32 %v1570, %v1846
        %v1953 = vadd.f32 %v1571, %v1849
        %v1954 = vadd.f32 %v1572, %v1854
        %v1955 = vadd.f32 %v1573, %v1857
        %v1956 = vadd.f32 %v1574, %v1862
        %v1957 = vadd.f32 %v1575, %v1865
        %v1958 = vadd.f32 %v1576, %v1870
        %v1959 = vadd.f32 %v1577, %v1873
        %v1960 = vadd.f32 %v1578, %v1878
        %v1961 = vadd.f32 %v1579, %v1881
        %v1962 = vadd.f32 %v1580, %v1886
        %v1963 = vadd.f32 %v1581, %v1889
        %v1964 = vadd.f32 %v1582, %v1894
        %v1965 = vadd.f32 %v1583, %v1897
        %v1966 = vadd.f32 %v1584, %v1902
        %v1967 = vadd.f32 %v1585, %v1905
        %v1968 = vadd.f32 %v1586, %v1910
        %v1969 = vadd.f32 %v1587, %v1913
        %v1970 = vadd.f32 %v1588, %v1918
        %v1971 = vadd.f32 %v1589, %v1921
        %v1972 = vadd.f32 %v1590, %v1926
        %v1973 = vadd.f32 %v1591, %v1929
        %v1974 = vadd.f32 %v1592, %v1934
        %v1975 = vadd.f32 %v1593, %v1937
        %s1976 = scalar_lea.vmem [#allocation5], 320
        %v1977 = vld [vmem:[%s1976] sm:$0xf]
        %v1978 = vld [vmem:[%s1976 + $0x4] sm:$0xf]
        %v1979 = vld [vmem:[%s1976 + $0x8] sm:$0xf]
        %v1980 = vld [vmem:[%s1976 + $0xc] sm:$0xf]
        %v1981 = vld [vmem:[%s1976 + $0x10] sm:$0xf]
        %v1982 = vld [vmem:[%s1976 + $0x14] sm:$0xf]
        %v1983 = vld [vmem:[%s1976 + $0x18] sm:$0xf]
        %v1984 = vld [vmem:[%s1976 + $0x1c] sm:$0xf]
        %v1985 = vld [vmem:[%s1976 + $0x20] sm:$0xf]
        %v1986 = vld [vmem:[%s1976 + $0x24] sm:$0xf]
        %v1987 = vld [vmem:[%s1976 + $0x28] sm:$0xf]
        %v1988 = vld [vmem:[%s1976 + $0x2c] sm:$0xf]
        %v1989 = vld [vmem:[%s1976 + $0x30] sm:$0xf]
        %v1990 = vld [vmem:[%s1976 + $0x34] sm:$0xf]
        %v1991 = vld [vmem:[%s1976 + $0x38] sm:$0xf]
        %v1992 = vld [vmem:[%s1976 + $0x3c] sm:$0xf]
        %vm1993 = vcmask 1045504
        %v1994 = vrot.slane %v285, 2
        %v1995 = vrot.slane %v286, 2
        %v1996 = vsel %vm1993, %v1994, %v1995
        %v1997 = vrot.slane %v287, 2
        %v1998 = vsel %vm1993, %v1995, %v1997
        %v1999 = vrot.slane %v288, 2
        %v2000 = vsel %vm1993, %v1997, %v1999
        %v2001 = vrot.slane %v289, 2
        %v2002 = vsel %vm1993, %v1999, %v2001
        %v2003 = vrot.slane %v290, 2
        %v2004 = vsel %vm1993, %v2001, %v2003
        %v2005 = vrot.slane %v291, 2
        %v2006 = vsel %vm1993, %v2003, %v2005
        %v2007 = vrot.slane %v292, 2
        %v2008 = vsel %vm1993, %v2005, %v2007
        %v2009 = vrot.slane %v293, 2
        %v2010 = vsel %vm1993, %v2007, %v2009
        %v2011 = vrot.slane %v294, 2
        %v2012 = vsel %vm1993, %v2009, %v2011
        %v2013 = vrot.slane %v295, 2
        %v2014 = vsel %vm1993, %v2011, %v2013
        %v2015 = vrot.slane %v296, 2
        %v2016 = vsel %vm1993, %v2013, %v2015
        %v2017 = vrot.slane %v297, 2
        %v2018 = vsel %vm1993, %v2015, %v2017
        %v2019 = vrot.slane %v298, 2
        %v2020 = vsel %vm1993, %v2017, %v2019
        %v2021 = vrot.slane %v299, 2
        %v2022 = vsel %vm1993, %v2019, %v2021
        %v2023 = vrot.slane %v300, 2
        %v2024 = vsel %vm1993, %v2021, %v2023
        %v2025 = vrot.slane %v301, 2
        %v2026 = vsel %vm1993, %v2023, %v2025
        %v2027 = vrot.slane %v1306, 2
        %v2028 = vsel %vm1993, %v2025, %v2027
        %v2029 = vrot.slane %v1307, 2
        %v2030 = vsel %vm1993, %v2027, %v2029
        %v2065 = vunpack.c.l.b16 %v1977
        %v2066 = vunpack.c.l.b16 %v1978
        %v2067 = vunpack.c.l.b16 %v1979
        %v2068 = vunpack.c.l.b16 %v1980
        %v2069 = vunpack.c.l.b16 %v1981
        %v2070 = vunpack.c.l.b16 %v1982
        %v2071 = vunpack.c.l.b16 %v1983
        %v2072 = vunpack.c.l.b16 %v1984
        %v2073 = vunpack.c.l.b16 %v1985
        %v2074 = vunpack.c.l.b16 %v1986
        %v2075 = vunpack.c.l.b16 %v1987
        %v2076 = vunpack.c.l.b16 %v1988
        %v2077 = vunpack.c.l.b16 %v1989
        %v2078 = vunpack.c.l.b16 %v1990
        %v2079 = vunpack.c.l.b16 %v1991
        %v2080 = vunpack.c.l.b16 %v1992
        %v2081 = vpack.c.b16 %v2066, %v2065
        %v2082 = vpack.c.b16 %v2068, %v2067
        %v2083 = vpack.c.b16 %v2070, %v2069
        %v2084 = vpack.c.b16 %v2072, %v2071
        %v2085 = vpack.c.b16 %v2074, %v2073
        %v2086 = vpack.c.b16 %v2076, %v2075
        %v2087 = vpack.c.b16 %v2078, %v2077
        %v2088 = vpack.c.b16 %v2080, %v2079
        %2097 = vmatprep.subr.bf16.mxu0 0
        %2098 = vmatpush1.bf16.msra.mxu0 %v2081
        %2099 = vmatprep.subr.bf16.mxu0 0
        %2100 = vmatpush1.bf16.msra.mxu0 %v2082
        %2101 = vmatprep.subr.bf16.mxu0 0
        %2102 = vmatpush1.bf16.msra.mxu0 %v2083
        %2103 = vmatprep.subr.bf16.mxu0 0
        %2104 = vmatpush1.bf16.msra.mxu0 %v2084
        %2105 = vmatprep.subr.bf16.mxu0 0
        %2106 = vmatpush1.bf16.msra.mxu0 %v2085
        %2107 = vmatprep.subr.bf16.mxu0 0
        %2108 = vmatpush1.bf16.msra.mxu0 %v2086
        %2109 = vmatprep.subr.bf16.mxu0 0
        %2110 = vmatpush1.bf16.msra.mxu0 %v2087
        %2111 = vmatprep.subr.bf16.mxu0 0
        %2112 = vmatpush1.bf16.msra.mxu0 %v2088
        %2113 = vmatprep.subr.bf16.mxu0 0
        %2114 = vmatpush1.bf16.msra.mxu0 0
        %2115 = vmatprep.subr.bf16.mxu0 0
        %2116 = vmatpush1.bf16.msra.mxu0 0
        %2117 = vmatprep.subr.bf16.mxu0 0
        %2118 = vmatpush1.bf16.msra.mxu0 0
        %2119 = vmatprep.subr.bf16.mxu0 0
        %2120 = vmatpush1.bf16.msra.mxu0 0
        %2121 = vmatprep.subr.bf16.mxu0 0
        %2122 = vmatpush1.bf16.msra.mxu0 0
        %2123 = vmatprep.subr.bf16.mxu0 0
        %2124 = vmatpush1.bf16.msra.mxu0 0
        %2125 = vmatprep.subr.bf16.mxu0 0
        %2126 = vmatpush1.bf16.msra.mxu0 0
        %2127 = vmatprep.subr.bf16.mxu0 0
        %2128 = vmatpush1.bf16.msra.mxu0 0
        %2129 = vmatprep.mubr.bf16.mxu0 0
        %2130 = vmatmul.mubr.bf16.gmra.mrb[0].mxu0 %v1996
        %v2131 = vpop.f32.mrb[0].mxu0
        %v2132 = vadd.f32 0.0, %v2131
        %v2133 = vpop.f32.mrb[0].mxu0
        %v2134 = vpop.f32.mrb[0].mxu0
        %v2135 = vadd.f32 0.0, %v2134
        %v2136 = vpop.f32.mrb[0].mxu0
        %2137 = vmatprep.mubr.bf16.mxu0 0
        %2138 = vmatmul.mubr.bf16.gmra.mrb[0].mxu0 %v1998
        %v2139 = vpop.f32.mrb[0].mxu0
        %v2140 = vadd.f32 0.0, %v2139
        %v2141 = vpop.f32.mrb[0].mxu0
        %v2142 = vpop.f32.mrb[0].mxu0
        %v2143 = vadd.f32 0.0, %v2142
        %v2144 = vpop.f32.mrb[0].mxu0
        %2145 = vmatprep.mubr.bf16.mxu0 0
        %2146 = vmatmul.mubr.bf16.gmra.mrb[0].mxu0 %v2000
        %v2147 = vpop.f32.mrb[0].mxu0
        %v2148 = vadd.f32 0.0, %v2147
        %v2149 = vpop.f32.mrb[0].mxu0
        %v2150 = vpop.f32.mrb[0].mxu0
        %v2151 = vadd.f32 0.0, %v2150
        %v2152 = vpop.f32.mrb[0].mxu0
        %2153 = vmatprep.mubr.bf16.mxu0 0
        %2154 = vmatmul.mubr.bf16.gmra.mrb[0].mxu0 %v2002
        %v2155 = vpop.f32.mrb[0].mxu0
        %v2156 = vadd.f32 0.0, %v2155
        %v2157 = vpop.f32.mrb[0].mxu0
        %v2158 = vpop.f32.mrb[0].mxu0
        %v2159 = vadd.f32 0.0, %v2158
        %v2160 = vpop.f32.mrb[0].mxu0
        %2161 = vmatprep.mubr.bf16.mxu0 0
        %2162 = vmatmul.mubr.bf16.gmra.mrb[0].mxu0 %v2004
        %v2163 = vpop.f32.mrb[0].mxu0
        %v2164 = vadd.f32 0.0, %v2163
        %v2165 = vpop.f32.mrb[0].mxu0
        %v2166 = vpop.f32.mrb[0].mxu0
        %v2167 = vadd.f32 0.0, %v2166
        %v2168 = vpop.f32.mrb[0].mxu0
        %2169 = vmatprep.mubr.bf16.mxu0 0
        %2170 = vmatmul.mubr.bf16.gmra.mrb[0].mxu0 %v2006
        %v2171 = vpop.f32.mrb[0].mxu0
        %v2172 = vadd.f32 0.0, %v2171
        %v2173 = vpop.f32.mrb[0].mxu0
        %v2174 = vpop.f32.mrb[0].mxu0
        %v2175 = vadd.f32 0.0, %v2174
        %v2176 = vpop.f32.mrb[0].mxu0
        %2177 = vmatprep.mubr.bf16.mxu0 0
        %2178 = vmatmul.mubr.bf16.gmra.mrb[0].mxu0 %v2008
        %v2179 = vpop.f32.mrb[0].mxu0
        %v2180 = vadd.f32 0.0, %v2179
        %v2181 = vpop.f32.mrb[0].mxu0
        %v2182 = vpop.f32.mrb[0].mxu0
        %v2183 = vadd.f32 0.0, %v2182
        %v2184 = vpop.f32.mrb[0].mxu0
        %2185 = vmatprep.mubr.bf16.mxu0 0
        %2186 = vmatmul.mubr.bf16.gmra.mrb[0].mxu0 %v2010
        %v2187 = vpop.f32.mrb[0].mxu0
        %v2188 = vadd.f32 0.0, %v2187
        %v2189 = vpop.f32.mrb[0].mxu0
        %v2190 = vpop.f32.mrb[0].mxu0
        %v2191 = vadd.f32 0.0, %v2190
        %v2192 = vpop.f32.mrb[0].mxu0
        %2193 = vmatprep.mubr.bf16.mxu0 0
        %2194 = vmatmul.mubr.bf16.gmra.mrb[0].mxu0 %v2012
        %v2195 = vpop.f32.mrb[0].mxu0
        %v2196 = vadd.f32 0.0, %v2195
        %v2197 = vpop.f32.mrb[0].mxu0
        %v2198 = vpop.f32.mrb[0].mxu0
        %v2199 = vadd.f32 0.0, %v2198
        %v2200 = vpop.f32.mrb[0].mxu0
        %2201 = vmatprep.mubr.bf16.mxu0 0
        %2202 = vmatmul.mubr.bf16.gmra.mrb[0].mxu0 %v2014
        %v2203 = vpop.f32.mrb[0].mxu0
        %v2204 = vadd.f32 0.0, %v2203
        %v2205 = vpop.f32.mrb[0].mxu0
        %v2206 = vpop.f32.mrb[0].mxu0
        %v2207 = vadd.f32 0.0, %v2206
        %v2208 = vpop.f32.mrb[0].mxu0
        %2209 = vmatprep.mubr.bf16.mxu0 0
        %2210 = vmatmul.mubr.bf16.gmra.mrb[0].mxu0 %v2016
        %v2211 = vpop.f32.mrb[0].mxu0
        %v2212 = vadd.f32 0.0, %v2211
        %v2213 = vpop.f32.mrb[0].mxu0
        %v2214 = vpop.f32.mrb[0].mxu0
        %v2215 = vadd.f32 0.0, %v2214
        %v2216 = vpop.f32.mrb[0].mxu0
        %2217 = vmatprep.mubr.bf16.mxu0 0
        %2218 = vmatmul.mubr.bf16.gmra.mrb[0].mxu0 %v2018
        %v2219 = vpop.f32.mrb[0].mxu0
        %v2220 = vadd.f32 0.0, %v2219
        %v2221 = vpop.f32.mrb[0].mxu0
        %v2222 = vpop.f32.mrb[0].mxu0
        %v2223 = vadd.f32 0.0, %v2222
        %v2224 = vpop.f32.mrb[0].mxu0
        %2225 = vmatprep.mubr.bf16.mxu0 0
        %2226 = vmatmul.mubr.bf16.gmra.mrb[0].mxu0 %v2020
        %v2227 = vpop.f32.mrb[0].mxu0
        %v2228 = vadd.f32 0.0, %v2227
        %v2229 = vpop.f32.mrb[0].mxu0
        %v2230 = vpop.f32.mrb[0].mxu0
        %v2231 = vadd.f32 0.0, %v2230
        %v2232 = vpop.f32.mrb[0].mxu0
        %2233 = vmatprep.mubr.bf16.mxu0 0
        %2234 = vmatmul.mubr.bf16.gmra.mrb[0].mxu0 %v2022
        %v2235 = vpop.f32.mrb[0].mxu0
        %v2236 = vadd.f32 0.0, %v2235
        %v2237 = vpop.f32.mrb[0].mxu0
        %v2238 = vpop.f32.mrb[0].mxu0
        %v2239 = vadd.f32 0.0, %v2238
        %v2240 = vpop.f32.mrb[0].mxu0
        %2241 = vmatprep.mubr.bf16.mxu0 0
        %2242 = vmatmul.mubr.bf16.gmra.mrb[0].mxu0 %v2024
        %v2243 = vpop.f32.mrb[0].mxu0
        %v2244 = vadd.f32 0.0, %v2243
        %v2245 = vpop.f32.mrb[0].mxu0
        %v2246 = vpop.f32.mrb[0].mxu0
        %v2247 = vadd.f32 0.0, %v2246
        %v2248 = vpop.f32.mrb[0].mxu0
        %2249 = vmatprep.mubr.bf16.mxu0 0
        %2250 = vmatmul.mubr.bf16.gmra.mrb[0].mxu0 %v2026
        %v2251 = vpop.f32.mrb[0].mxu0
        %v2252 = vadd.f32 0.0, %v2251
        %v2253 = vpop.f32.mrb[0].mxu0
        %v2254 = vpop.f32.mrb[0].mxu0
        %v2255 = vadd.f32 0.0, %v2254
        %v2256 = vpop.f32.mrb[0].mxu0
        %2257 = vmatprep.mubr.bf16.mxu0 0
        %2258 = vmatmul.mubr.bf16.gmra.mrb[0].mxu0 %v2028
        %v2259 = vpop.f32.mrb[0].mxu0
        %v2260 = vadd.f32 0.0, %v2259
        %v2261 = vpop.f32.mrb[0].mxu0
        %v2262 = vpop.f32.mrb[0].mxu0
        %v2263 = vadd.f32 0.0, %v2262
        %v2264 = vpop.f32.mrb[0].mxu0
        %2265 = vmatprep.mubr.bf16.mxu0 0
        %2266 = vmatmul.mubr.bf16.gmra.mrb[0].mxu0 %v2030
        %v2267 = vpop.f32.mrb[0].mxu0
        %v2268 = vadd.f32 0.0, %v2267
        %v2269 = vpop.f32.mrb[0].mxu0
        %v2270 = vpop.f32.mrb[0].mxu0
        %v2271 = vadd.f32 0.0, %v2270
        %v2272 = vpop.f32.mrb[0].mxu0
        %2273 = vdwg.mxu0
        %v2274 = vadd.f32 %v1940, %v2132
        %v2275 = vadd.f32 %v1941, %v2135
        %v2276 = vadd.f32 %v1942, %v2140
        %v2277 = vadd.f32 %v1943, %v2143
        %v2278 = vadd.f32 %v1944, %v2148
        %v2279 = vadd.f32 %v1945, %v2151
        %v2280 = vadd.f32 %v1946, %v2156
        %v2281 = vadd.f32 %v1947, %v2159
        %v2282 = vadd.f32 %v1948, %v2164
        %v2283 = vadd.f32 %v1949, %v2167
        %v2284 = vadd.f32 %v1950, %v2172
        %v2285 = vadd.f32 %v1951, %v2175
        %v2286 = vadd.f32 %v1952, %v2180
        %v2287 = vadd.f32 %v1953, %v2183
        %v2288 = vadd.f32 %v1954, %v2188
        %v2289 = vadd.f32 %v1955, %v2191
        %v2290 = vadd.f32 %v1956, %v2196
        %v2291 = vadd.f32 %v1957, %v2199
        %v2292 = vadd.f32 %v1958, %v2204
        %v2293 = vadd.f32 %v1959, %v2207
        %v2294 = vadd.f32 %v1960, %v2212
        %v2295 = vadd.f32 %v1961, %v2215
        %v2296 = vadd.f32 %v1962, %v2220
        %v2297 = vadd.f32 %v1963, %v2223
        %v2298 = vadd.f32 %v1964, %v2228
        %v2299 = vadd.f32 %v1965, %v2231
        %v2300 = vadd.f32 %v1966, %v2236
        %v2301 = vadd.f32 %v1967, %v2239
        %v2302 = vadd.f32 %v1968, %v2244
        %v2303 = vadd.f32 %v1969, %v2247
        %v2304 = vadd.f32 %v1970, %v2252
        %v2305 = vadd.f32 %v1971, %v2255
        %v2306 = vadd.f32 %v1972, %v2260
        %v2307 = vadd.f32 %v1973, %v2263
        %v2308 = vadd.f32 %v1974, %v2268
        %v2309 = vadd.f32 %v1975, %v2271
        %v2310 = vpack.c.bf16 %v282, %v281
        %v2311 = vpack.c.bf16 %v283, %v283
        %s2312 = scalar_lea.vmem [#allocation5], 384
        %v2313 = vld [vmem:[%s2312] sm:$0xf]
        %v2314 = vld [vmem:[%s2312 + $0x4] sm:$0xf]
        %v2315 = vld [vmem:[%s2312 + $0x8] sm:$0xf]
        %v2316 = vld [vmem:[%s2312 + $0xc] sm:$0xf]
        %v2317 = vld [vmem:[%s2312 + $0x10] sm:$0xf]
        %v2318 = vld [vmem:[%s2312 + $0x14] sm:$0xf]
        %v2319 = vld [vmem:[%s2312 + $0x18] sm:$0xf]
        %v2320 = vld [vmem:[%s2312 + $0x1c] sm:$0xf]
        %v2321 = vld [vmem:[%s2312 + $0x20] sm:$0xf]
        %v2322 = vld [vmem:[%s2312 + $0x24] sm:$0xf]
        %v2323 = vld [vmem:[%s2312 + $0x28] sm:$0xf]
        %v2324 = vld [vmem:[%s2312 + $0x2c] sm:$0xf]
        %v2325 = vld [vmem:[%s2312 + $0x30] sm:$0xf]
        %v2326 = vld [vmem:[%s2312 + $0x34] sm:$0xf]
        %v2327 = vld [vmem:[%s2312 + $0x38] sm:$0xf]
        %v2328 = vld [vmem:[%s2312 + $0x3c] sm:$0xf]
        %v2331 = vrot.slane %v2310, 2
        %v2332 = vsel %vm1993, %v2027, %v2331
        %v2333 = vrot.slane %v2311, 2
        %v2334 = vsel %vm1993, %v2331, %v2333
        %v2353 = vunpack.c.l.b16 %v2313
        %v2354 = vunpack.c.l.b16 %v2314
        %v2355 = vunpack.c.l.b16 %v2315
        %v2356 = vunpack.c.l.b16 %v2316
        %v2357 = vunpack.c.l.b16 %v2317
        %v2358 = vunpack.c.l.b16 %v2318
        %v2359 = vunpack.c.l.b16 %v2319
        %v2360 = vunpack.c.l.b16 %v2320
        %v2361 = vunpack.c.l.b16 %v2321
        %v2362 = vunpack.c.l.b16 %v2322
        %v2363 = vunpack.c.l.b16 %v2323
        %v2364 = vunpack.c.l.b16 %v2324
        %v2365 = vunpack.c.l.b16 %v2325
        %v2366 = vunpack.c.l.b16 %v2326
        %v2367 = vunpack.c.l.b16 %v2327
        %v2368 = vunpack.c.l.b16 %v2328
        %v2369 = vpack.c.b16 %v2354, %v2353
        %v2370 = vpack.c.b16 %v2356, %v2355
        %v2371 = vpack.c.b16 %v2358, %v2357
        %v2372 = vpack.c.b16 %v2360, %v2359
        %v2373 = vpack.c.b16 %v2362, %v2361
        %v2374 = vpack.c.b16 %v2364, %v2363
        %v2375 = vpack.c.b16 %v2366, %v2365
        %v2376 = vpack.c.b16 %v2368, %v2367
        %2385 = vmatprep.subr.bf16.mxu0 0
        %2386 = vmatpush1.bf16.msra.mxu0 %v2369
        %2387 = vmatprep.subr.bf16.mxu0 0
        %2388 = vmatpush1.bf16.msra.mxu0 %v2370
        %2389 = vmatprep.subr.bf16.mxu0 0
        %2390 = vmatpush1.bf16.msra.mxu0 %v2371
        %2391 = vmatprep.subr.bf16.mxu0 0
        %2392 = vmatpush1.bf16.msra.mxu0 %v2372
        %2393 = vmatprep.subr.bf16.mxu0 0
        %2394 = vmatpush1.bf16.msra.mxu0 %v2373
        %2395 = vmatprep.subr.bf16.mxu0 0
        %2396 = vmatpush1.bf16.msra.mxu0 %v2374
        %2397 = vmatprep.subr.bf16.mxu0 0
        %2398 = vmatpush1.bf16.msra.mxu0 %v2375
        %2399 = vmatprep.subr.bf16.mxu0 0
        %2400 = vmatpush1.bf16.msra.mxu0 %v2376
        %2401 = vmatprep.subr.bf16.mxu0 0
        %2402 = vmatpush1.bf16.msra.mxu0 0
        %2403 = vmatprep.subr.bf16.mxu0 0
        %2404 = vmatpush1.bf16.msra.mxu0 0
        %2405 = vmatprep.subr.bf16.mxu0 0
        %2406 = vmatpush1.bf16.msra.mxu0 0
        %2407 = vmatprep.subr.bf16.mxu0 0
        %2408 = vmatpush1.bf16.msra.mxu0 0
        %2409 = vmatprep.subr.bf16.mxu0 0
        %2410 = vmatpush1.bf16.msra.mxu0 0
        %2411 = vmatprep.subr.bf16.mxu0 0
        %2412 = vmatpush1.bf16.msra.mxu0 0
        %2413 = vmatprep.subr.bf16.mxu0 0
        %2414 = vmatpush1.bf16.msra.mxu0 0
        %2415 = vmatprep.subr.bf16.mxu0 0
        %2416 = vmatpush1.bf16.msra.mxu0 0
        %2417 = vmatprep.mubr.bf16.mxu0 0
        %2418 = vmatmul.mubr.bf16.gmra.mrb[0].mxu0 %v1998
        %v2419 = vpop.f32.mrb[0].mxu0
        %v2420 = vadd.f32 0.0, %v2419
        %v2421 = vpop.f32.mrb[0].mxu0
        %v2422 = vpop.f32.mrb[0].mxu0
        %v2423 = vadd.f32 0.0, %v2422
        %v2424 = vpop.f32.mrb[0].mxu0
        %2425 = vmatprep.mubr.bf16.mxu0 0
        %2426 = vmatmul.mubr.bf16.gmra.mrb[0].mxu0 %v2000
        %v2427 = vpop.f32.mrb[0].mxu0
        %v2428 = vadd.f32 0.0, %v2427
        %v2429 = vpop.f32.mrb[0].mxu0
        %v2430 = vpop.f32.mrb[0].mxu0
        %v2431 = vadd.f32 0.0, %v2430
        %v2432 = vpop.f32.mrb[0].mxu0
        %2433 = vmatprep.mubr.bf16.mxu0 0
        %2434 = vmatmul.mubr.bf16.gmra.mrb[0].mxu0 %v2002
        %v2435 = vpop.f32.mrb[0].mxu0
        %v2436 = vadd.f32 0.0, %v2435
        %v2437 = vpop.f32.mrb[0].mxu0
        %v2438 = vpop.f32.mrb[0].mxu0
        %v2439 = vadd.f32 0.0, %v2438
        %v2440 = vpop.f32.mrb[0].mxu0
        %2441 = vmatprep.mubr.bf16.mxu0 0
        %2442 = vmatmul.mubr.bf16.gmra.mrb[0].mxu0 %v2004
        %v2443 = vpop.f32.mrb[0].mxu0
        %v2444 = vadd.f32 0.0, %v2443
        %v2445 = vpop.f32.mrb[0].mxu0
        %v2446 = vpop.f32.mrb[0].mxu0
        %v2447 = vadd.f32 0.0, %v2446
        %v2448 = vpop.f32.mrb[0].mxu0
        %2449 = vmatprep.mubr.bf16.mxu0 0
        %2450 = vmatmul.mubr.bf16.gmra.mrb[0].mxu0 %v2006
        %v2451 = vpop.f32.mrb[0].mxu0
        %v2452 = vadd.f32 0.0, %v2451
        %v2453 = vpop.f32.mrb[0].mxu0
        %v2454 = vpop.f32.mrb[0].mxu0
        %v2455 = vadd.f32 0.0, %v2454
        %v2456 = vpop.f32.mrb[0].mxu0
        %2457 = vmatprep.mubr.bf16.mxu0 0
        %2458 = vmatmul.mubr.bf16.gmra.mrb[0].mxu0 %v2008
        %v2459 = vpop.f32.mrb[0].mxu0
        %v2460 = vadd.f32 0.0, %v2459
        %v2461 = vpop.f32.mrb[0].mxu0
        %v2462 = vpop.f32.mrb[0].mxu0
        %v2463 = vadd.f32 0.0, %v2462
        %v2464 = vpop.f32.mrb[0].mxu0
        %2465 = vmatprep.mubr.bf16.mxu0 0
        %2466 = vmatmul.mubr.bf16.gmra.mrb[0].mxu0 %v2010
        %v2467 = vpop.f32.mrb[0].mxu0
        %v2468 = vadd.f32 0.0, %v2467
        %v2469 = vpop.f32.mrb[0].mxu0
        %v2470 = vpop.f32.mrb[0].mxu0
        %v2471 = vadd.f32 0.0, %v2470
        %v2472 = vpop.f32.mrb[0].mxu0
        %2473 = vmatprep.mubr.bf16.mxu0 0
        %2474 = vmatmul.mubr.bf16.gmra.mrb[0].mxu0 %v2012
        %v2475 = vpop.f32.mrb[0].mxu0
        %v2476 = vadd.f32 0.0, %v2475
        %v2477 = vpop.f32.mrb[0].mxu0
        %v2478 = vpop.f32.mrb[0].mxu0
        %v2479 = vadd.f32 0.0, %v2478
        %v2480 = vpop.f32.mrb[0].mxu0
        %2481 = vmatprep.mubr.bf16.mxu0 0
        %2482 = vmatmul.mubr.bf16.gmra.mrb[0].mxu0 %v2014
        %v2483 = vpop.f32.mrb[0].mxu0
        %v2484 = vadd.f32 0.0, %v2483
        %v2485 = vpop.f32.mrb[0].mxu0
        %v2486 = vpop.f32.mrb[0].mxu0
        %v2487 = vadd.f32 0.0, %v2486
        %v2488 = vpop.f32.mrb[0].mxu0
        %2489 = vmatprep.mubr.bf16.mxu0 0
        %2490 = vmatmul.mubr.bf16.gmra.mrb[0].mxu0 %v2016
        %v2491 = vpop.f32.mrb[0].mxu0
        %v2492 = vadd.f32 0.0, %v2491
        %v2493 = vpop.f32.mrb[0].mxu0
        %v2494 = vpop.f32.mrb[0].mxu0
        %v2495 = vadd.f32 0.0, %v2494
        %v2496 = vpop.f32.mrb[0].mxu0
        %2497 = vmatprep.mubr.bf16.mxu0 0
        %2498 = vmatmul.mubr.bf16.gmra.mrb[0].mxu0 %v2018
        %v2499 = vpop.f32.mrb[0].mxu0
        %v2500 = vadd.f32 0.0, %v2499
        %v2501 = vpop.f32.mrb[0].mxu0
        %v2502 = vpop.f32.mrb[0].mxu0
        %v2503 = vadd.f32 0.0, %v2502
        %v2504 = vpop.f32.mrb[0].mxu0
        %2505 = vmatprep.mubr.bf16.mxu0 0
        %2506 = vmatmul.mubr.bf16.gmra.mrb[0].mxu0 %v2020
        %v2507 = vpop.f32.mrb[0].mxu0
        %v2508 = vadd.f32 0.0, %v2507
        %v2509 = vpop.f32.mrb[0].mxu0
        %v2510 = vpop.f32.mrb[0].mxu0
        %v2511 = vadd.f32 0.0, %v2510
        %v2512 = vpop.f32.mrb[0].mxu0
        %2513 = vmatprep.mubr.bf16.mxu0 0
        %2514 = vmatmul.mubr.bf16.gmra.mrb[0].mxu0 %v2022
        %v2515 = vpop.f32.mrb[0].mxu0
        %v2516 = vadd.f32 0.0, %v2515
        %v2517 = vpop.f32.mrb[0].mxu0
        %v2518 = vpop.f32.mrb[0].mxu0
        %v2519 = vadd.f32 0.0, %v2518
        %v2520 = vpop.f32.mrb[0].mxu0
        %2521 = vmatprep.mubr.bf16.mxu0 0
        %2522 = vmatmul.mubr.bf16.gmra.mrb[0].mxu0 %v2024
        %v2523 = vpop.f32.mrb[0].mxu0
        %v2524 = vadd.f32 0.0, %v2523
        %v2525 = vpop.f32.mrb[0].mxu0
        %v2526 = vpop.f32.mrb[0].mxu0
        %v2527 = vadd.f32 0.0, %v2526
        %v2528 = vpop.f32.mrb[0].mxu0
        %2529 = vmatprep.mubr.bf16.mxu0 0
        %2530 = vmatmul.mubr.bf16.gmra.mrb[0].mxu0 %v2026
        %v2531 = vpop.f32.mrb[0].mxu0
        %v2532 = vadd.f32 0.0, %v2531
        %v2533 = vpop.f32.mrb[0].mxu0
        %v2534 = vpop.f32.mrb[0].mxu0
        %v2535 = vadd.f32 0.0, %v2534
        %v2536 = vpop.f32.mrb[0].mxu0
        %2537 = vmatprep.mubr.bf16.mxu0 0
        %2538 = vmatmul.mubr.bf16.gmra.mrb[0].mxu0 %v2028
        %v2539 = vpop.f32.mrb[0].mxu0
        %v2540 = vadd.f32 0.0, %v2539
        %v2541 = vpop.f32.mrb[0].mxu0
        %v2542 = vpop.f32.mrb[0].mxu0
        %v2543 = vadd.f32 0.0, %v2542
        %v2544 = vpop.f32.mrb[0].mxu0
        %2545 = vmatprep.mubr.bf16.mxu0 0
        %2546 = vmatmul.mubr.bf16.gmra.mrb[0].mxu0 %v2332
        %v2547 = vpop.f32.mrb[0].mxu0
        %v2548 = vadd.f32 0.0, %v2547
        %v2549 = vpop.f32.mrb[0].mxu0
        %v2550 = vpop.f32.mrb[0].mxu0
        %v2551 = vadd.f32 0.0, %v2550
        %v2552 = vpop.f32.mrb[0].mxu0
        %2553 = vmatprep.mubr.bf16.mxu0 0
        %2554 = vmatmul.mubr.bf16.gmra.mrb[0].mxu0 %v2334
        %v2555 = vpop.f32.mrb[0].mxu0
        %v2556 = vadd.f32 0.0, %v2555
        %v2557 = vpop.f32.mrb[0].mxu0
        %v2558 = vpop.f32.mrb[0].mxu0
        %v2559 = vadd.f32 0.0, %v2558
        %v2560 = vpop.f32.mrb[0].mxu0
        %2561 = vdwg.mxu0
        %v2562 = vadd.f32 %v2274, %v2420
        %v2563 = vadd.f32 %v2275, %v2423
        %v2564 = vadd.f32 %v2276, %v2428
        %v2565 = vadd.f32 %v2277, %v2431
        %v2566 = vadd.f32 %v2278, %v2436
        %v2567 = vadd.f32 %v2279, %v2439
        %v2568 = vadd.f32 %v2280, %v2444
        %v2569 = vadd.f32 %v2281, %v2447
        %v2570 = vadd.f32 %v2282, %v2452
        %v2571 = vadd.f32 %v2283, %v2455
        %v2572 = vadd.f32 %v2284, %v2460
        %v2573 = vadd.f32 %v2285, %v2463
        %v2574 = vadd.f32 %v2286, %v2468
        %v2575 = vadd.f32 %v2287, %v2471
        %v2576 = vadd.f32 %v2288, %v2476
        %v2577 = vadd.f32 %v2289, %v2479
        %v2578 = vadd.f32 %v2290, %v2484
        %v2579 = vadd.f32 %v2291, %v2487
        %v2580 = vadd.f32 %v2292, %v2492
        %v2581 = vadd.f32 %v2293, %v2495
        %v2582 = vadd.f32 %v2294, %v2500
        %v2583 = vadd.f32 %v2295, %v2503
        %v2584 = vadd.f32 %v2296, %v2508
        %v2585 = vadd.f32 %v2297, %v2511
        %v2586 = vadd.f32 %v2298, %v2516
        %v2587 = vadd.f32 %v2299, %v2519
        %v2588 = vadd.f32 %v2300, %v2524
        %v2589 = vadd.f32 %v2301, %v2527
        %v2590 = vadd.f32 %v2302, %v2532
        %v2591 = vadd.f32 %v2303, %v2535
        %v2592 = vadd.f32 %v2304, %v2540
        %v2593 = vadd.f32 %v2305, %v2543
        %v2594 = vadd.f32 %v2306, %v2548
        %v2595 = vadd.f32 %v2307, %v2551
        %v2596 = vadd.f32 %v2308, %v2556
        %v2597 = vadd.f32 %v2309, %v2559
        %s2598 = scalar_lea.vmem [#allocation5], 448
        %v2599 = vld [vmem:[%s2598] sm:$0xf]
        %v2600 = vld [vmem:[%s2598 + $0x4] sm:$0xf]
        %v2601 = vld [vmem:[%s2598 + $0x8] sm:$0xf]
        %v2602 = vld [vmem:[%s2598 + $0xc] sm:$0xf]
        %v2603 = vld [vmem:[%s2598 + $0x10] sm:$0xf]
        %v2604 = vld [vmem:[%s2598 + $0x14] sm:$0xf]
        %v2605 = vld [vmem:[%s2598 + $0x18] sm:$0xf]
        %v2606 = vld [vmem:[%s2598 + $0x1c] sm:$0xf]
        %v2607 = vld [vmem:[%s2598 + $0x20] sm:$0xf]
        %v2608 = vld [vmem:[%s2598 + $0x24] sm:$0xf]
        %v2609 = vld [vmem:[%s2598 + $0x28] sm:$0xf]
        %v2610 = vld [vmem:[%s2598 + $0x2c] sm:$0xf]
        %v2611 = vld [vmem:[%s2598 + $0x30] sm:$0xf]
        %v2612 = vld [vmem:[%s2598 + $0x34] sm:$0xf]
        %v2613 = vld [vmem:[%s2598 + $0x38] sm:$0xf]
        %v2614 = vld [vmem:[%s2598 + $0x3c] sm:$0xf]
        %vm2615 = vsmask.f32 5376
        %v2616 = vrot.slane %v357, 2
        %v2617 = vrot.slane %v353, 3
        %v2618 = vor.u32 %v2616, %v2617
        %v2619 = vrot.slane %v365, 2
        %v2620 = vrot.slane %v361, 3
        %v2621 = vor.u32 %v2619, %v2620
        %v2622 = vsel %vm2615, %v2618, %v2621
        %v2623 = vrot.slane %v373, 2
        %v2624 = vrot.slane %v369, 3
        %v2625 = vor.u32 %v2623, %v2624
        %v2626 = vsel %vm2615, %v2621, %v2625
        %v2627 = vrot.slane %v381, 2
        %v2628 = vrot.slane %v377, 3
        %v2629 = vor.u32 %v2627, %v2628
        %v2630 = vsel %vm2615, %v2625, %v2629
        %v2631 = vrot.slane %v389, 2
        %v2632 = vrot.slane %v385, 3
        %v2633 = vor.u32 %v2631, %v2632
        %v2634 = vsel %vm2615, %v2629, %v2633
        %v2635 = vrot.slane %v397, 2
        %v2636 = vrot.slane %v393, 3
        %v2637 = vor.u32 %v2635, %v2636
        %v2638 = vsel %vm2615, %v2633, %v2637
        %v2639 = vrot.slane %v405, 2
        %v2640 = vrot.slane %v401, 3
        %v2641 = vor.u32 %v2639, %v2640
        %v2642 = vsel %vm2615, %v2637, %v2641
        %v2643 = vrot.slane %v413, 2
        %v2644 = vrot.slane %v409, 3
        %v2645 = vor.u32 %v2643, %v2644
        %v2646 = vsel %vm2615, %v2641, %v2645
        %v2647 = vrot.slane %v421, 2
        %v2648 = vrot.slane %v417, 3
        %v2649 = vor.u32 %v2647, %v2648
        %v2650 = vsel %vm2615, %v2645, %v2649
        %v2651 = vrot.slane %v429, 2
        %v2652 = vrot.slane %v425, 3
        %v2653 = vor.u32 %v2651, %v2652
        %v2654 = vsel %vm2615, %v2649, %v2653
        %v2655 = vrot.slane %v437, 2
        %v2656 = vrot.slane %v433, 3
        %v2657 = vor.u32 %v2655, %v2656
        %v2658 = vsel %vm2615, %v2653, %v2657
        %v2659 = vrot.slane %v445, 2
        %v2660 = vrot.slane %v441, 3
        %v2661 = vor.u32 %v2659, %v2660
        %v2662 = vsel %vm2615, %v2657, %v2661
        %v2663 = vrot.slane %v453, 2
        %v2664 = vrot.slane %v449, 3
        %v2665 = vor.u32 %v2663, %v2664
        %v2666 = vsel %vm2615, %v2661, %v2665
        %v2667 = vrot.slane %v461, 2
        %v2668 = vrot.slane %v457, 3
        %v2669 = vor.u32 %v2667, %v2668
        %v2670 = vsel %vm2615, %v2665, %v2669
        %v2671 = vrot.slane %v469, 2
        %v2672 = vrot.slane %v465, 3
        %v2673 = vor.u32 %v2671, %v2672
        %v2674 = vsel %vm2615, %v2669, %v2673
        %v2675 = vrot.slane %v477, 2
        %v2676 = vrot.slane %v473, 3
        %v2677 = vor.u32 %v2675, %v2676
        %v2678 = vsel %vm2615, %v2673, %v2677
        %v2679 = vrot.slane %v1680, 2
        %v2680 = vrot.slane %v1683, 3
        %v2681 = vor.u32 %v2679, %v2680
        %v2682 = vsel %vm2615, %v2677, %v2681
        %v2684 = vshrl.u32 %v2310, 16
        %v2686 = vrot.slane %v2684, 2
        %v2687 = vshll.u32 %v2310, 16
        %v2689 = vrot.slane %v2687, 3
        %v2690 = vor.u32 %v2686, %v2689
        %v2691 = vsel %vm2615, %v2681, %v2690
        %v2693 = vshrl.u32 %v2311, 16
        %v2695 = vrot.slane %v2693, 2
        %v2696 = vshll.u32 %v2311, 16
        %v2698 = vrot.slane %v2696, 3
        %v2699 = vor.u32 %v2695, %v2698
        %v2700 = vsel %vm2615, %v2690, %v2699
        %v2735 = vunpack.c.l.b16 %v2599
        %v2736 = vunpack.c.l.b16 %v2600
        %v2737 = vunpack.c.l.b16 %v2601
        %v2738 = vunpack.c.l.b16 %v2602
        %v2739 = vunpack.c.l.b16 %v2603
        %v2740 = vunpack.c.l.b16 %v2604
        %v2741 = vunpack.c.l.b16 %v2605
        %v2742 = vunpack.c.l.b16 %v2606
        %v2743 = vunpack.c.l.b16 %v2607
        %v2744 = vunpack.c.l.b16 %v2608
        %v2745 = vunpack.c.l.b16 %v2609
        %v2746 = vunpack.c.l.b16 %v2610
        %v2747 = vunpack.c.l.b16 %v2611
        %v2748 = vunpack.c.l.b16 %v2612
        %v2749 = vunpack.c.l.b16 %v2613
        %v2750 = vunpack.c.l.b16 %v2614
        %v2751 = vpack.c.b16 %v2736, %v2735
        %v2752 = vpack.c.b16 %v2738, %v2737
        %v2753 = vpack.c.b16 %v2740, %v2739
        %v2754 = vpack.c.b16 %v2742, %v2741
        %v2755 = vpack.c.b16 %v2744, %v2743
        %v2756 = vpack.c.b16 %v2746, %v2745
        %v2757 = vpack.c.b16 %v2748, %v2747
        %v2758 = vpack.c.b16 %v2750, %v2749
        %2767 = vmatprep.subr.bf16.mxu0 0
        %2768 = vmatpush1.bf16.msra.mxu0 %v2751
        %2769 = vmatprep.subr.bf16.mxu0 0
        %2770 = vmatpush1.bf16.msra.mxu0 %v2752
        %2771 = vmatprep.subr.bf16.mxu0 0
        %2772 = vmatpush1.bf16.msra.mxu0 %v2753
        %2773 = vmatprep.subr.bf16.mxu0 0
        %2774 = vmatpush1.bf16.msra.mxu0 %v2754
        %2775 = vmatprep.subr.bf16.mxu0 0
        %2776 = vmatpush1.bf16.msra.mxu0 %v2755
        %2777 = vmatprep.subr.bf16.mxu0 0
        %2778 = vmatpush1.bf16.msra.mxu0 %v2756
        %2779 = vmatprep.subr.bf16.mxu0 0
        %2780 = vmatpush1.bf16.msra.mxu0 %v2757
        %2781 = vmatprep.subr.bf16.mxu0 0
        %2782 = vmatpush1.bf16.msra.mxu0 %v2758
        %2783 = vmatprep.subr.bf16.mxu0 0
        %2784 = vmatpush1.bf16.msra.mxu0 0
        %2785 = vmatprep.subr.bf16.mxu0 0
        %2786 = vmatpush1.bf16.msra.mxu0 0
        %2787 = vmatprep.subr.bf16.mxu0 0
        %2788 = vmatpush1.bf16.msra.mxu0 0
        %2789 = vmatprep.subr.bf16.mxu0 0
        %2790 = vmatpush1.bf16.msra.mxu0 0
        %2791 = vmatprep.subr.bf16.mxu0 0
        %2792 = vmatpush1.bf16.msra.mxu0 0
        %2793 = vmatprep.subr.bf16.mxu0 0
        %2794 = vmatpush1.bf16.msra.mxu0 0
        %2795 = vmatprep.subr.bf16.mxu0 0
        %2796 = vmatpush1.bf16.msra.mxu0 0
        %2797 = vmatprep.subr.bf16.mxu0 0
        %2798 = vmatpush1.bf16.msra.mxu0 0
        %2799 = vmatprep.mubr.bf16.mxu0 0
        %2800 = vmatmul.mubr.bf16.gmra.mrb[0].mxu0 %v2622
        %v2801 = vpop.f32.mrb[0].mxu0
        %v2802 = vadd.f32 0.0, %v2801
        %v2803 = vpop.f32.mrb[0].mxu0
        %v2804 = vpop.f32.mrb[0].mxu0
        %v2805 = vadd.f32 0.0, %v2804
        %v2806 = vpop.f32.mrb[0].mxu0
        %2807 = vmatprep.mubr.bf16.mxu0 0
        %2808 = vmatmul.mubr.bf16.gmra.mrb[0].mxu0 %v2626
        %v2809 = vpop.f32.mrb[0].mxu0
        %v2810 = vadd.f32 0.0, %v2809
        %v2811 = vpop.f32.mrb[0].mxu0
        %v2812 = vpop.f32.mrb[0].mxu0
        %v2813 = vadd.f32 0.0, %v2812
        %v2814 = vpop.f32.mrb[0].mxu0
        %2815 = vmatprep.mubr.bf16.mxu0 0
        %2816 = vmatmul.mubr.bf16.gmra.mrb[0].mxu0 %v2630
        %v2817 = vpop.f32.mrb[0].mxu0
        %v2818 = vadd.f32 0.0, %v2817
        %v2819 = vpop.f32.mrb[0].mxu0
        %v2820 = vpop.f32.mrb[0].mxu0
        %v2821 = vadd.f32 0.0, %v2820
        %v2822 = vpop.f32.mrb[0].mxu0
        %2823 = vmatprep.mubr.bf16.mxu0 0
        %2824 = vmatmul.mubr.bf16.gmra.mrb[0].mxu0 %v2634
        %v2825 = vpop.f32.mrb[0].mxu0
        %v2826 = vadd.f32 0.0, %v2825
        %v2827 = vpop.f32.mrb[0].mxu0
        %v2828 = vpop.f32.mrb[0].mxu0
        %v2829 = vadd.f32 0.0, %v2828
        %v2830 = vpop.f32.mrb[0].mxu0
        %2831 = vmatprep.mubr.bf16.mxu0 0
        %2832 = vmatmul.mubr.bf16.gmra.mrb[0].mxu0 %v2638
        %v2833 = vpop.f32.mrb[0].mxu0
        %v2834 = vadd.f32 0.0, %v2833
        %v2835 = vpop.f32.mrb[0].mxu0
        %v2836 = vpop.f32.mrb[0].mxu0
        %v2837 = vadd.f32 0.0, %v2836
        %v2838 = vpop.f32.mrb[0].mxu0
        %2839 = vmatprep.mubr.bf16.mxu0 0
        %2840 = vmatmul.mubr.bf16.gmra.mrb[0].mxu0 %v2642
        %v2841 = vpop.f32.mrb[0].mxu0
        %v2842 = vadd.f32 0.0, %v2841
        %v2843 = vpop.f32.mrb[0].mxu0
        %v2844 = vpop.f32.mrb[0].mxu0
        %v2845 = vadd.f32 0.0, %v2844
        %v2846 = vpop.f32.mrb[0].mxu0
        %2847 = vmatprep.mubr.bf16.mxu0 0
        %2848 = vmatmul.mubr.bf16.gmra.mrb[0].mxu0 %v2646
        %v2849 = vpop.f32.mrb[0].mxu0
        %v2850 = vadd.f32 0.0, %v2849
        %v2851 = vpop.f32.mrb[0].mxu0
        %v2852 = vpop.f32.mrb[0].mxu0
        %v2853 = vadd.f32 0.0, %v2852
        %v2854 = vpop.f32.mrb[0].mxu0
        %2855 = vmatprep.mubr.bf16.mxu0 0
        %2856 = vmatmul.mubr.bf16.gmra.mrb[0].mxu0 %v2650
        %v2857 = vpop.f32.mrb[0].mxu0
        %v2858 = vadd.f32 0.0, %v2857
        %v2859 = vpop.f32.mrb[0].mxu0
        %v2860 = vpop.f32.mrb[0].mxu0
        %v2861 = vadd.f32 0.0, %v2860
        %v2862 = vpop.f32.mrb[0].mxu0
        %2863 = vmatprep.mubr.bf16.mxu0 0
        %2864 = vmatmul.mubr.bf16.gmra.mrb[0].mxu0 %v2654
        %v2865 = vpop.f32.mrb[0].mxu0
        %v2866 = vadd.f32 0.0, %v2865
        %v2867 = vpop.f32.mrb[0].mxu0
        %v2868 = vpop.f32.mrb[0].mxu0
        %v2869 = vadd.f32 0.0, %v2868
        %v2870 = vpop.f32.mrb[0].mxu0
        %2871 = vmatprep.mubr.bf16.mxu0 0
        %2872 = vmatmul.mubr.bf16.gmra.mrb[0].mxu0 %v2658
        %v2873 = vpop.f32.mrb[0].mxu0
        %v2874 = vadd.f32 0.0, %v2873
        %v2875 = vpop.f32.mrb[0].mxu0
        %v2876 = vpop.f32.mrb[0].mxu0
        %v2877 = vadd.f32 0.0, %v2876
        %v2878 = vpop.f32.mrb[0].mxu0
        %2879 = vmatprep.mubr.bf16.mxu0 0
        %2880 = vmatmul.mubr.bf16.gmra.mrb[0].mxu0 %v2662
        %v2881 = vpop.f32.mrb[0].mxu0
        %v2882 = vadd.f32 0.0, %v2881
        %v2883 = vpop.f32.mrb[0].mxu0
        %v2884 = vpop.f32.mrb[0].mxu0
        %v2885 = vadd.f32 0.0, %v2884
        %v2886 = vpop.f32.mrb[0].mxu0
        %2887 = vmatprep.mubr.bf16.mxu0 0
        %2888 = vmatmul.mubr.bf16.gmra.mrb[0].mxu0 %v2666
        %v2889 = vpop.f32.mrb[0].mxu0
        %v2890 = vadd.f32 0.0, %v2889
        %v2891 = vpop.f32.mrb[0].mxu0
        %v2892 = vpop.f32.mrb[0].mxu0
        %v2893 = vadd.f32 0.0, %v2892
        %v2894 = vpop.f32.mrb[0].mxu0
        %2895 = vmatprep.mubr.bf16.mxu0 0
        %2896 = vmatmul.mubr.bf16.gmra.mrb[0].mxu0 %v2670
        %v2897 = vpop.f32.mrb[0].mxu0
        %v2898 = vadd.f32 0.0, %v2897
        %v2899 = vpop.f32.mrb[0].mxu0
        %v2900 = vpop.f32.mrb[0].mxu0
        %v2901 = vadd.f32 0.0, %v2900
        %v2902 = vpop.f32.mrb[0].mxu0
        %2903 = vmatprep.mubr.bf16.mxu0 0
        %2904 = vmatmul.mubr.bf16.gmra.mrb[0].mxu0 %v2674
        %v2905 = vpop.f32.mrb[0].mxu0
        %v2906 = vadd.f32 0.0, %v2905
        %v2907 = vpop.f32.mrb[0].mxu0
        %v2908 = vpop.f32.mrb[0].mxu0
        %v2909 = vadd.f32 0.0, %v2908
        %v2910 = vpop.f32.mrb[0].mxu0
        %2911 = vmatprep.mubr.bf16.mxu0 0
        %2912 = vmatmul.mubr.bf16.gmra.mrb[0].mxu0 %v2678
        %v2913 = vpop.f32.mrb[0].mxu0
        %v2914 = vadd.f32 0.0, %v2913
        %v2915 = vpop.f32.mrb[0].mxu0
        %v2916 = vpop.f32.mrb[0].mxu0
        %v2917 = vadd.f32 0.0, %v2916
        %v2918 = vpop.f32.mrb[0].mxu0
        %2919 = vmatprep.mubr.bf16.mxu0 0
        %2920 = vmatmul.mubr.bf16.gmra.mrb[0].mxu0 %v2682
        %v2921 = vpop.f32.mrb[0].mxu0
        %v2922 = vadd.f32 0.0, %v2921
        %v2923 = vpop.f32.mrb[0].mxu0
        %v2924 = vpop.f32.mrb[0].mxu0
        %v2925 = vadd.f32 0.0, %v2924
        %v2926 = vpop.f32.mrb[0].mxu0
        %2927 = vmatprep.mubr.bf16.mxu0 0
        %2928 = vmatmul.mubr.bf16.gmra.mrb[0].mxu0 %v2691
        %v2929 = vpop.f32.mrb[0].mxu0
        %v2930 = vadd.f32 0.0, %v2929
        %v2931 = vpop.f32.mrb[0].mxu0
        %v2932 = vpop.f32.mrb[0].mxu0
        %v2933 = vadd.f32 0.0, %v2932
        %v2934 = vpop.f32.mrb[0].mxu0
        %2935 = vmatprep.mubr.bf16.mxu0 0
        %2936 = vmatmul.mubr.bf16.gmra.mrb[0].mxu0 %v2700
        %v2937 = vpop.f32.mrb[0].mxu0
        %v2938 = vadd.f32 0.0, %v2937
        %v2939 = vpop.f32.mrb[0].mxu0
        %v2940 = vpop.f32.mrb[0].mxu0
        %v2941 = vadd.f32 0.0, %v2940
        %v2942 = vpop.f32.mrb[0].mxu0
        %2943 = vdwg.mxu0
        %v2944 = vadd.f32 %v2562, %v2802
        %v2945 = vadd.f32 %v2563, %v2805
        %v2946 = vadd.f32 %v2564, %v2810
        %v2947 = vadd.f32 %v2565, %v2813
        %v2948 = vadd.f32 %v2566, %v2818
        %v2949 = vadd.f32 %v2567, %v2821
        %v2950 = vadd.f32 %v2568, %v2826
        %v2951 = vadd.f32 %v2569, %v2829
        %v2952 = vadd.f32 %v2570, %v2834
        %v2953 = vadd.f32 %v2571, %v2837
        %v2954 = vadd.f32 %v2572, %v2842
        %v2955 = vadd.f32 %v2573, %v2845
        %v2956 = vadd.f32 %v2574, %v2850
        %v2957 = vadd.f32 %v2575, %v2853
        %v2958 = vadd.f32 %v2576, %v2858
        %v2959 = vadd.f32 %v2577, %v2861
        %v2960 = vadd.f32 %v2578, %v2866
        %v2961 = vadd.f32 %v2579, %v2869
        %v2962 = vadd.f32 %v2580, %v2874
        %v2963 = vadd.f32 %v2581, %v2877
        %v2964 = vadd.f32 %v2582, %v2882
        %v2965 = vadd.f32 %v2583, %v2885
        %v2966 = vadd.f32 %v2584, %v2890
        %v2967 = vadd.f32 %v2585, %v2893
        %v2968 = vadd.f32 %v2586, %v2898
        %v2969 = vadd.f32 %v2587, %v2901
        %v2970 = vadd.f32 %v2588, %v2906
        %v2971 = vadd.f32 %v2589, %v2909
        %v2972 = vadd.f32 %v2590, %v2914
        %v2973 = vadd.f32 %v2591, %v2917
        %v2974 = vadd.f32 %v2592, %v2922
        %v2975 = vadd.f32 %v2593, %v2925
        %v2976 = vadd.f32 %v2594, %v2930
        %v2977 = vadd.f32 %v2595, %v2933
        %v2978 = vadd.f32 %v2596, %v2938
        %v2979 = vadd.f32 %v2597, %v2941
        %s2980 = scalar_lea.vmem [#allocation5], 512
        %v2981 = vld [vmem:[%s2980] sm:$0xf]
        %v2982 = vld [vmem:[%s2980 + $0x4] sm:$0xf]
        %v2983 = vld [vmem:[%s2980 + $0x8] sm:$0xf]
        %v2984 = vld [vmem:[%s2980 + $0xc] sm:$0xf]
        %v2985 = vld [vmem:[%s2980 + $0x10] sm:$0xf]
        %v2986 = vld [vmem:[%s2980 + $0x14] sm:$0xf]
        %v2987 = vld [vmem:[%s2980 + $0x18] sm:$0xf]
        %v2988 = vld [vmem:[%s2980 + $0x1c] sm:$0xf]
        %v2989 = vld [vmem:[%s2980 + $0x20] sm:$0xf]
        %v2990 = vld [vmem:[%s2980 + $0x24] sm:$0xf]
        %v2991 = vld [vmem:[%s2980 + $0x28] sm:$0xf]
        %v2992 = vld [vmem:[%s2980 + $0x2c] sm:$0xf]
        %v2993 = vld [vmem:[%s2980 + $0x30] sm:$0xf]
        %v2994 = vld [vmem:[%s2980 + $0x34] sm:$0xf]
        %v2995 = vld [vmem:[%s2980 + $0x38] sm:$0xf]
        %v2996 = vld [vmem:[%s2980 + $0x3c] sm:$0xf]
        %vm2997 = vcmask 1044480
        %v2998 = vrot.slane %v286, 3
        %v2999 = vrot.slane %v287, 3
        %v3000 = vsel %vm2997, %v2998, %v2999
        %v3001 = vrot.slane %v288, 3
        %v3002 = vsel %vm2997, %v2999, %v3001
        %v3003 = vrot.slane %v289, 3
        %v3004 = vsel %vm2997, %v3001, %v3003
        %v3005 = vrot.slane %v290, 3
        %v3006 = vsel %vm2997, %v3003, %v3005
        %v3007 = vrot.slane %v291, 3
        %v3008 = vsel %vm2997, %v3005, %v3007
        %v3009 = vrot.slane %v292, 3
        %v3010 = vsel %vm2997, %v3007, %v3009
        %v3011 = vrot.slane %v293, 3
        %v3012 = vsel %vm2997, %v3009, %v3011
        %v3013 = vrot.slane %v294, 3
        %v3014 = vsel %vm2997, %v3011, %v3013
        %v3015 = vrot.slane %v295, 3
        %v3016 = vsel %vm2997, %v3013, %v3015
        %v3017 = vrot.slane %v296, 3
        %v3018 = vsel %vm2997, %v3015, %v3017
        %v3019 = vrot.slane %v297, 3
        %v3020 = vsel %vm2997, %v3017, %v3019
        %v3021 = vrot.slane %v298, 3
        %v3022 = vsel %vm2997, %v3019, %v3021
        %v3023 = vrot.slane %v299, 3
        %v3024 = vsel %vm2997, %v3021, %v3023
        %v3025 = vrot.slane %v300, 3
        %v3026 = vsel %vm2997, %v3023, %v3025
        %v3027 = vrot.slane %v301, 3
        %v3028 = vsel %vm2997, %v3025, %v3027
        %v3029 = vrot.slane %v1306, 3
        %v3030 = vsel %vm2997, %v3027, %v3029
        %v3031 = vrot.slane %v2310, 3
        %v3032 = vsel %vm2997, %v3029, %v3031
        %v3033 = vrot.slane %v2311, 3
        %v3034 = vsel %vm2997, %v3031, %v3033
        %v3069 = vunpack.c.l.b16 %v2981
        %v3070 = vunpack.c.l.b16 %v2982
        %v3071 = vunpack.c.l.b16 %v2983
        %v3072 = vunpack.c.l.b16 %v2984
        %v3073 = vunpack.c.l.b16 %v2985
        %v3074 = vunpack.c.l.b16 %v2986
        %v3075 = vunpack.c.l.b16 %v2987
        %v3076 = vunpack.c.l.b16 %v2988
        %v3077 = vunpack.c.l.b16 %v2989
        %v3078 = vunpack.c.l.b16 %v2990
        %v3079 = vunpack.c.l.b16 %v2991
        %v3080 = vunpack.c.l.b16 %v2992
        %v3081 = vunpack.c.l.b16 %v2993
        %v3082 = vunpack.c.l.b16 %v2994
        %v3083 = vunpack.c.l.b16 %v2995
        %v3084 = vunpack.c.l.b16 %v2996
        %v3085 = vpack.c.b16 %v3070, %v3069
        %v3086 = vpack.c.b16 %v3072, %v3071
        %v3087 = vpack.c.b16 %v3074, %v3073
        %v3088 = vpack.c.b16 %v3076, %v3075
        %v3089 = vpack.c.b16 %v3078, %v3077
        %v3090 = vpack.c.b16 %v3080, %v3079
        %v3091 = vpack.c.b16 %v3082, %v3081
        %v3092 = vpack.c.b16 %v3084, %v3083
        %3101 = vmatprep.subr.bf16.mxu0 0
        %3102 = vmatpush1.bf16.msra.mxu0 %v3085
        %3103 = vmatprep.subr.bf16.mxu0 0
        %3104 = vmatpush1.bf16.msra.mxu0 %v3086
        %3105 = vmatprep.subr.bf16.mxu0 0
        %3106 = vmatpush1.bf16.msra.mxu0 %v3087
        %3107 = vmatprep.subr.bf16.mxu0 0
        %3108 = vmatpush1.bf16.msra.mxu0 %v3088
        %3109 = vmatprep.subr.bf16.mxu0 0
        %3110 = vmatpush1.bf16.msra.mxu0 %v3089
        %3111 = vmatprep.subr.bf16.mxu0 0
        %3112 = vmatpush1.bf16.msra.mxu0 %v3090
        %3113 = vmatprep.subr.bf16.mxu0 0
        %3114 = vmatpush1.bf16.msra.mxu0 %v3091
        %3115 = vmatprep.subr.bf16.mxu0 0
        %3116 = vmatpush1.bf16.msra.mxu0 %v3092
        %3117 = vmatprep.subr.bf16.mxu0 0
        %3118 = vmatpush1.bf16.msra.mxu0 0
        %3119 = vmatprep.subr.bf16.mxu0 0
        %3120 = vmatpush1.bf16.msra.mxu0 0
        %3121 = vmatprep.subr.bf16.mxu0 0
        %3122 = vmatpush1.bf16.msra.mxu0 0
        %3123 = vmatprep.subr.bf16.mxu0 0
        %3124 = vmatpush1.bf16.msra.mxu0 0
        %3125 = vmatprep.subr.bf16.mxu0 0
        %3126 = vmatpush1.bf16.msra.mxu0 0
        %3127 = vmatprep.subr.bf16.mxu0 0
        %3128 = vmatpush1.bf16.msra.mxu0 0
        %3129 = vmatprep.subr.bf16.mxu0 0
        %3130 = vmatpush1.bf16.msra.mxu0 0
        %3131 = vmatprep.subr.bf16.mxu0 0
        %3132 = vmatpush1.bf16.msra.mxu0 0
        %3133 = vmatprep.mubr.bf16.mxu0 0
        %3134 = vmatmul.mubr.bf16.gmra.mrb[0].mxu0 %v3000
        %v3135 = vpop.f32.mrb[0].mxu0
        %v3136 = vadd.f32 0.0, %v3135
        %v3137 = vpop.f32.mrb[0].mxu0
        %v3138 = vpop.f32.mrb[0].mxu0
        %v3139 = vadd.f32 0.0, %v3138
        %v3140 = vpop.f32.mrb[0].mxu0
        %3141 = vmatprep.mubr.bf16.mxu0 0
        %3142 = vmatmul.mubr.bf16.gmra.mrb[0].mxu0 %v3002
        %v3143 = vpop.f32.mrb[0].mxu0
        %v3144 = vadd.f32 0.0, %v3143
        %v3145 = vpop.f32.mrb[0].mxu0
        %v3146 = vpop.f32.mrb[0].mxu0
        %v3147 = vadd.f32 0.0, %v3146
        %v3148 = vpop.f32.mrb[0].mxu0
        %3149 = vmatprep.mubr.bf16.mxu0 0
        %3150 = vmatmul.mubr.bf16.gmra.mrb[0].mxu0 %v3004
        %v3151 = vpop.f32.mrb[0].mxu0
        %v3152 = vadd.f32 0.0, %v3151
        %v3153 = vpop.f32.mrb[0].mxu0
        %v3154 = vpop.f32.mrb[0].mxu0
        %v3155 = vadd.f32 0.0, %v3154
        %v3156 = vpop.f32.mrb[0].mxu0
        %3157 = vmatprep.mubr.bf16.mxu0 0
        %3158 = vmatmul.mubr.bf16.gmra.mrb[0].mxu0 %v3006
        %v3159 = vpop.f32.mrb[0].mxu0
        %v3160 = vadd.f32 0.0, %v3159
        %v3161 = vpop.f32.mrb[0].mxu0
        %v3162 = vpop.f32.mrb[0].mxu0
        %v3163 = vadd.f32 0.0, %v3162
        %v3164 = vpop.f32.mrb[0].mxu0
        %3165 = vmatprep.mubr.bf16.mxu0 0
        %3166 = vmatmul.mubr.bf16.gmra.mrb[0].mxu0 %v3008
        %v3167 = vpop.f32.mrb[0].mxu0
        %v3168 = vadd.f32 0.0, %v3167
        %v3169 = vpop.f32.mrb[0].mxu0
        %v3170 = vpop.f32.mrb[0].mxu0
        %v3171 = vadd.f32 0.0, %v3170
        %v3172 = vpop.f32.mrb[0].mxu0
        %3173 = vmatprep.mubr.bf16.mxu0 0
        %3174 = vmatmul.mubr.bf16.gmra.mrb[0].mxu0 %v3010
        %v3175 = vpop.f32.mrb[0].mxu0
        %v3176 = vadd.f32 0.0, %v3175
        %v3177 = vpop.f32.mrb[0].mxu0
        %v3178 = vpop.f32.mrb[0].mxu0
        %v3179 = vadd.f32 0.0, %v3178
        %v3180 = vpop.f32.mrb[0].mxu0
        %3181 = vmatprep.mubr.bf16.mxu0 0
        %3182 = vmatmul.mubr.bf16.gmra.mrb[0].mxu0 %v3012
        %v3183 = vpop.f32.mrb[0].mxu0
        %v3184 = vadd.f32 0.0, %v3183
        %v3185 = vpop.f32.mrb[0].mxu0
        %v3186 = vpop.f32.mrb[0].mxu0
        %v3187 = vadd.f32 0.0, %v3186
        %v3188 = vpop.f32.mrb[0].mxu0
        %3189 = vmatprep.mubr.bf16.mxu0 0
        %3190 = vmatmul.mubr.bf16.gmra.mrb[0].mxu0 %v3014
        %v3191 = vpop.f32.mrb[0].mxu0
        %v3192 = vadd.f32 0.0, %v3191
        %v3193 = vpop.f32.mrb[0].mxu0
        %v3194 = vpop.f32.mrb[0].mxu0
        %v3195 = vadd.f32 0.0, %v3194
        %v3196 = vpop.f32.mrb[0].mxu0
        %3197 = vmatprep.mubr.bf16.mxu0 0
        %3198 = vmatmul.mubr.bf16.gmra.mrb[0].mxu0 %v3016
        %v3199 = vpop.f32.mrb[0].mxu0
        %v3200 = vadd.f32 0.0, %v3199
        %v3201 = vpop.f32.mrb[0].mxu0
        %v3202 = vpop.f32.mrb[0].mxu0
        %v3203 = vadd.f32 0.0, %v3202
        %v3204 = vpop.f32.mrb[0].mxu0
        %3205 = vmatprep.mubr.bf16.mxu0 0
        %3206 = vmatmul.mubr.bf16.gmra.mrb[0].mxu0 %v3018
        %v3207 = vpop.f32.mrb[0].mxu0
        %v3208 = vadd.f32 0.0, %v3207
        %v3209 = vpop.f32.mrb[0].mxu0
        %v3210 = vpop.f32.mrb[0].mxu0
        %v3211 = vadd.f32 0.0, %v3210
        %v3212 = vpop.f32.mrb[0].mxu0
        %3213 = vmatprep.mubr.bf16.mxu0 0
        %3214 = vmatmul.mubr.bf16.gmra.mrb[0].mxu0 %v3020
        %v3215 = vpop.f32.mrb[0].mxu0
        %v3216 = vadd.f32 0.0, %v3215
        %v3217 = vpop.f32.mrb[0].mxu0
        %v3218 = vpop.f32.mrb[0].mxu0
        %v3219 = vadd.f32 0.0, %v3218
        %v3220 = vpop.f32.mrb[0].mxu0
        %3221 = vmatprep.mubr.bf16.mxu0 0
        %3222 = vmatmul.mubr.bf16.gmra.mrb[0].mxu0 %v3022
        %v3223 = vpop.f32.mrb[0].mxu0
        %v3224 = vadd.f32 0.0, %v3223
        %v3225 = vpop.f32.mrb[0].mxu0
        %v3226 = vpop.f32.mrb[0].mxu0
        %v3227 = vadd.f32 0.0, %v3226
        %v3228 = vpop.f32.mrb[0].mxu0
        %3229 = vmatprep.mubr.bf16.mxu0 0
        %3230 = vmatmul.mubr.bf16.gmra.mrb[0].mxu0 %v3024
        %v3231 = vpop.f32.mrb[0].mxu0
        %v3232 = vadd.f32 0.0, %v3231
        %v3233 = vpop.f32.mrb[0].mxu0
        %v3234 = vpop.f32.mrb[0].mxu0
        %v3235 = vadd.f32 0.0, %v3234
        %v3236 = vpop.f32.mrb[0].mxu0
        %3237 = vmatprep.mubr.bf16.mxu0 0
        %3238 = vmatmul.mubr.bf16.gmra.mrb[0].mxu0 %v3026
        %v3239 = vpop.f32.mrb[0].mxu0
        %v3240 = vadd.f32 0.0, %v3239
        %v3241 = vpop.f32.mrb[0].mxu0
        %v3242 = vpop.f32.mrb[0].mxu0
        %v3243 = vadd.f32 0.0, %v3242
        %v3244 = vpop.f32.mrb[0].mxu0
        %3245 = vmatprep.mubr.bf16.mxu0 0
        %3246 = vmatmul.mubr.bf16.gmra.mrb[0].mxu0 %v3028
        %v3247 = vpop.f32.mrb[0].mxu0
        %v3248 = vadd.f32 0.0, %v3247
        %v3249 = vpop.f32.mrb[0].mxu0
        %v3250 = vpop.f32.mrb[0].mxu0
        %v3251 = vadd.f32 0.0, %v3250
        %v3252 = vpop.f32.mrb[0].mxu0
        %3253 = vmatprep.mubr.bf16.mxu0 0
        %3254 = vmatmul.mubr.bf16.gmra.mrb[0].mxu0 %v3030
        %v3255 = vpop.f32.mrb[0].mxu0
        %v3256 = vadd.f32 0.0, %v3255
        %v3257 = vpop.f32.mrb[0].mxu0
        %v3258 = vpop.f32.mrb[0].mxu0
        %v3259 = vadd.f32 0.0, %v3258
        %v3260 = vpop.f32.mrb[0].mxu0
        %3261 = vmatprep.mubr.bf16.mxu0 0
        %3262 = vmatmul.mubr.bf16.gmra.mrb[0].mxu0 %v3032
        %v3263 = vpop.f32.mrb[0].mxu0
        %v3264 = vadd.f32 0.0, %v3263
        %v3265 = vpop.f32.mrb[0].mxu0
        %v3266 = vpop.f32.mrb[0].mxu0
        %v3267 = vadd.f32 0.0, %v3266
        %v3268 = vpop.f32.mrb[0].mxu0
        %3269 = vmatprep.mubr.bf16.mxu0 0
        %3270 = vmatmul.mubr.bf16.gmra.mrb[0].mxu0 %v3034
        %v3271 = vpop.f32.mrb[0].mxu0
        %v3272 = vadd.f32 0.0, %v3271
        %v3273 = vpop.f32.mrb[0].mxu0
        %v3274 = vpop.f32.mrb[0].mxu0
        %v3275 = vadd.f32 0.0, %v3274
        %v3276 = vpop.f32.mrb[0].mxu0
        %3277 = vdwg.mxu0
        %v3278 = vadd.f32 %v2944, %v3136
        %v3279 = vadd.f32 %v2945, %v3139
        %v3280 = vadd.f32 %v2946, %v3144
        %v3281 = vadd.f32 %v2947, %v3147
        %v3282 = vadd.f32 %v2948, %v3152
        %v3283 = vadd.f32 %v2949, %v3155
        %v3284 = vadd.f32 %v2950, %v3160
        %v3285 = vadd.f32 %v2951, %v3163
        %v3286 = vadd.f32 %v2952, %v3168
        %v3287 = vadd.f32 %v2953, %v3171
        %v3288 = vadd.f32 %v2954, %v3176
        %v3289 = vadd.f32 %v2955, %v3179
        %v3290 = vadd.f32 %v2956, %v3184
        %v3291 = vadd.f32 %v2957, %v3187
        %v3292 = vadd.f32 %v2958, %v3192
        %v3293 = vadd.f32 %v2959, %v3195
        %v3294 = vadd.f32 %v2960, %v3200
        %v3295 = vadd.f32 %v2961, %v3203
        %v3296 = vadd.f32 %v2962, %v3208
        %v3297 = vadd.f32 %v2963, %v3211
        %v3298 = vadd.f32 %v2964, %v3216
        %v3299 = vadd.f32 %v2965, %v3219
        %v3300 = vadd.f32 %v2966, %v3224
        %v3301 = vadd.f32 %v2967, %v3227
        %v3302 = vadd.f32 %v2968, %v3232
        %v3303 = vadd.f32 %v2969, %v3235
        %v3304 = vadd.f32 %v2970, %v3240
        %v3305 = vadd.f32 %v2971, %v3243
        %v3306 = vadd.f32 %v2972, %v3248
        %v3307 = vadd.f32 %v2973, %v3251
        %v3308 = vadd.f32 %v2974, %v3256
        %v3309 = vadd.f32 %v2975, %v3259
        %v3310 = vadd.f32 %v2976, %v3264
        %v3311 = vadd.f32 %v2977, %v3267
        %v3312 = vadd.f32 %v2978, %v3272
        %v3313 = vadd.f32 %v2979, %v3275
        %v3314 = vpack.c.bf16 %v3279, %v3278
        %v3315 = vpack.c.bf16 %v3281, %v3280
        %v3316 = vpack.c.bf16 %v3283, %v3282
        %v3317 = vpack.c.bf16 %v3285, %v3284
        %v3318 = vpack.c.bf16 %v3287, %v3286
        %v3319 = vpack.c.bf16 %v3289, %v3288
        %v3320 = vpack.c.bf16 %v3291, %v3290
        %v3321 = vpack.c.bf16 %v3293, %v3292
        %v3322 = vpack.c.bf16 %v3295, %v3294
        %v3323 = vpack.c.bf16 %v3297, %v3296
        %v3324 = vpack.c.bf16 %v3299, %v3298
        %v3325 = vpack.c.bf16 %v3301, %v3300
        %v3326 = vpack.c.bf16 %v3303, %v3302
        %v3327 = vpack.c.bf16 %v3305, %v3304
        %v3328 = vpack.c.bf16 %v3307, %v3306
        %v3329 = vpack.c.bf16 %v3309, %v3308
        %v3330 = vpack.c.bf16 %v3311, %v3310
        %v3331 = vpack.c.bf16 %v3313, %v3312
        %v3350 = vunpack.c.l.b16 %v3314
        %v3351 = vunpack.c.h.b16 %v3314
        %v3352 = vunpack.c.l.b16 %v3315
        %v3353 = vunpack.c.h.b16 %v3315
        %v3354 = vunpack.c.l.b16 %v3316
        %v3355 = vunpack.c.h.b16 %v3316
        %v3356 = vunpack.c.l.b16 %v3317
        %v3357 = vunpack.c.h.b16 %v3317
        %v3358 = vunpack.c.l.b16 %v3318
        %v3359 = vunpack.c.h.b16 %v3318
        %v3360 = vunpack.c.l.b16 %v3319
        %v3361 = vunpack.c.h.b16 %v3319
        %v3362 = vunpack.c.l.b16 %v3320
        %v3363 = vunpack.c.h.b16 %v3320
        %v3364 = vunpack.c.l.b16 %v3321
        %v3365 = vunpack.c.h.b16 %v3321
        %v3366 = vunpack.c.l.b16 %v3322
        %v3367 = vunpack.c.h.b16 %v3322
        %v3368 = vunpack.c.l.b16 %v3323
        %v3369 = vunpack.c.h.b16 %v3323
        %v3370 = vunpack.c.l.b16 %v3324
        %v3371 = vunpack.c.h.b16 %v3324
        %v3372 = vunpack.c.l.b16 %v3325
        %v3373 = vunpack.c.h.b16 %v3325
        %v3374 = vunpack.c.l.b16 %v3326
        %v3375 = vunpack.c.h.b16 %v3326
        %v3376 = vunpack.c.l.b16 %v3327
        %v3377 = vunpack.c.h.b16 %v3327
        %v3378 = vunpack.c.l.b16 %v3328
        %v3379 = vunpack.c.h.b16 %v3328
        %v3380 = vunpack.c.l.b16 %v3329
        %v3381 = vunpack.c.h.b16 %v3329
        %v3382 = vunpack.c.l.b16 %v3330
        %v3383 = vunpack.c.h.b16 %v3330
        %v3384 = vunpack.c.l.b16 %v3331
        %v3385 = vunpack.c.h.b16 %v3331
        %v3386 = vpack.c.b16 %v3350, %v3350
        %v3387 = vpack.c.b16 %v3351, %v3351
        %v3388 = vpack.c.b16 %v3352, %v3352
        %v3389 = vpack.c.b16 %v3353, %v3353
        %v3390 = vpack.c.b16 %v3354, %v3354
        %v3391 = vpack.c.b16 %v3355, %v3355
        %v3392 = vpack.c.b16 %v3356, %v3356
        %v3393 = vpack.c.b16 %v3357, %v3357
        %v3394 = vpack.c.b16 %v3358, %v3358
        %v3395 = vpack.c.b16 %v3359, %v3359
        %v3396 = vpack.c.b16 %v3360, %v3360
        %v3397 = vpack.c.b16 %v3361, %v3361
        %v3398 = vpack.c.b16 %v3362, %v3362
        %v3399 = vpack.c.b16 %v3363, %v3363
        %v3400 = vpack.c.b16 %v3364, %v3364
        %v3401 = vpack.c.b16 %v3365, %v3365
        %v3402 = vpack.c.b16 %v3366, %v3366
        %v3403 = vpack.c.b16 %v3367, %v3367
        %v3404 = vpack.c.b16 %v3368, %v3368
        %v3405 = vpack.c.b16 %v3369, %v3369
        %v3406 = vpack.c.b16 %v3370, %v3370
        %v3407 = vpack.c.b16 %v3371, %v3371
        %v3408 = vpack.c.b16 %v3372, %v3372
        %v3409 = vpack.c.b16 %v3373, %v3373
        %v3410 = vpack.c.b16 %v3374, %v3374
        %v3411 = vpack.c.b16 %v3375, %v3375
        %v3412 = vpack.c.b16 %v3376, %v3376
        %v3413 = vpack.c.b16 %v3377, %v3377
        %v3414 = vpack.c.b16 %v3378, %v3378
        %v3415 = vpack.c.b16 %v3379, %v3379
        %v3416 = vpack.c.b16 %v3380, %v3380
        %v3417 = vpack.c.b16 %v3381, %v3381
        %v3418 = vpack.c.b16 %v3382, %v3382
        %v3419 = vpack.c.b16 %v3383, %v3383
        %v3420 = vpack.c.b16 %v3384, %v3384
        %v3421 = vpack.c.b16 %v3385, %v3385
        %3458 = vst [vmem:[%s234] sm:$0xf] %v3386
        %3459 = vst [vmem:[%s234 + $0x4] sm:$0xf] %v3387
        %3460 = vst [vmem:[%s234 + $0x8] sm:$0xf] %v3388
        %3461 = vst [vmem:[%s234 + $0xc] sm:$0xf] %v3389
        %3462 = vst [vmem:[%s234 + $0x10] sm:$0xf] %v3390
        %3463 = vst [vmem:[%s234 + $0x14] sm:$0xf] %v3391
        %3464 = vst [vmem:[%s234 + $0x18] sm:$0xf] %v3392
        %3465 = vst [vmem:[%s234 + $0x1c] sm:$0xf] %v3393
        %3466 = vst [vmem:[%s234 + $0x20] sm:$0xf] %v3394
        %3467 = vst [vmem:[%s234 + $0x24] sm:$0xf] %v3395
        %3468 = vst [vmem:[%s234 + $0x28] sm:$0xf] %v3396
        %3469 = vst [vmem:[%s234 + $0x2c] sm:$0xf] %v3397
        %3470 = vst [vmem:[%s234 + $0x30] sm:$0xf] %v3398
        %3471 = vst [vmem:[%s234 + $0x34] sm:$0xf] %v3399
        %3472 = vst [vmem:[%s234 + $0x38] sm:$0xf] %v3400
        %3473 = vst [vmem:[%s234 + $0x3c] sm:$0xf] %v3401
        %3474 = vst [vmem:[%s234 + $0x40] sm:$0xf] %v3402
        %3475 = vst [vmem:[%s234 + $0x44] sm:$0xf] %v3403
        %3476 = vst [vmem:[%s234 + $0x48] sm:$0xf] %v3404
        %3477 = vst [vmem:[%s234 + $0x4c] sm:$0xf] %v3405
        %3478 = vst [vmem:[%s234 + $0x50] sm:$0xf] %v3406
        %3479 = vst [vmem:[%s234 + $0x54] sm:$0xf] %v3407
        %3480 = vst [vmem:[%s234 + $0x58] sm:$0xf] %v3408
        %3481 = vst [vmem:[%s234 + $0x5c] sm:$0xf] %v3409
        %3482 = vst [vmem:[%s234 + $0x60] sm:$0xf] %v3410
        %3483 = vst [vmem:[%s234 + $0x64] sm:$0xf] %v3411
        %3484 = vst [vmem:[%s234 + $0x68] sm:$0xf] %v3412
        %3485 = vst [vmem:[%s234 + $0x6c] sm:$0xf] %v3413
        %3486 = vst [vmem:[%s234 + $0x70] sm:$0xf] %v3414
        %3487 = vst [vmem:[%s234 + $0x74] sm:$0xf] %v3415
        %3488 = vst [vmem:[%s234 + $0x78] sm:$0xf] %v3416
        %3489 = vst [vmem:[%s234 + $0x7c] sm:$0xf] %v3417
        %3490 = vst [vmem:[%s234 + $0x80] sm:$0xf] %v3418
        %3491 = vst [vmem:[%s234 + $0x84] sm:$0xf] %v3419
        %3492 = vst [vmem:[%s234 + $0x88] sm:$0xf] %v3420
        %3493 = vst [vmem:[%s234 + $0x8c] sm:$0xf] %v3421
        %v3494 = vld [vmem:[%s2] sm:$0xff]
        %v3495 = vld [vmem:[%s2 + $0x8] sm:$0xff]
        %v3496 = vld [vmem:[%s2 + $0x10] sm:$0xff]
        %v3497 = vld [vmem:[%s2 + $0x18] sm:$0xff]
        %v3498 = vld [vmem:[%s2 + $0x20] sm:$0xff]
        %v3499 = vld [vmem:[%s2 + $0x28] sm:$0xff]
        %v3500 = vld [vmem:[%s2 + $0x30] sm:$0xff]
        %v3501 = vld [vmem:[%s2 + $0x38] sm:$0xff]
        %v3502 = vld [vmem:[%s2 + $0x40] sm:$0xff]
        %v3503 = vld [vmem:[%s2 + $0x48] sm:$0xff]
        %v3504 = vld [vmem:[%s2 + $0x50] sm:$0xff]
        %v3505 = vld [vmem:[%s2 + $0x58] sm:$0xff]
        %v3506 = vld [vmem:[%s2 + $0x60] sm:$0xff]
        %v3507 = vld [vmem:[%s2 + $0x68] sm:$0xff]
        %v3508 = vld [vmem:[%s2 + $0x70] sm:$0xff]
        %v3509 = vld [vmem:[%s2 + $0x78] sm:$0xff]
        %v3510 = vld [vmem:[%s2 + $0x80] sm:$0xff]
        %v3511 = vld [vmem:[%s2 + $0x88] sm:$0xff]
        %v3512 = vld [vmem:[%s2 + $0x90] sm:$0xff]
        %v3513 = vld [vmem:[%s2 + $0x98] sm:$0xff]
        %v3514 = vld [vmem:[%s2 + $0xa0] sm:$0xff]
        %v3515 = vld [vmem:[%s2 + $0xa8] sm:$0xff]
        %v3516 = vld [vmem:[%s2 + $0xb0] sm:$0xff]
        %v3517 = vld [vmem:[%s2 + $0xb8] sm:$0xff]
        %v3518 = vld [vmem:[%s2 + $0xc0] sm:$0xff]
        %v3519 = vld [vmem:[%s2 + $0xc8] sm:$0xff]
        %v3520 = vld [vmem:[%s2 + $0xd0] sm:$0xff]
        %v3521 = vld [vmem:[%s2 + $0xd8] sm:$0xff]
        %v3522 = vld [vmem:[%s2 + $0xe0] sm:$0xff]
        %v3523 = vld [vmem:[%s2 + $0xe8] sm:$0xff]
        %v3524 = vld [vmem:[%s2 + $0xf0] sm:$0xff]
        %v3525 = vld [vmem:[%s2 + $0xf8] sm:$0xff]
        %v3526 = vld [vmem:[%s2 + $0x100] sm:$0xff]
        %v3527 = vld [vmem:[%s2 + $0x108] sm:$0xff]
        %v3528 = vld [vmem:[%s2 + $0x110] sm:$0xff]
        %v3529 = vld [vmem:[%s2 + $0x118] sm:$0xff]
        %3531 = vset.pattern.permute.xlu0 0
        %3532 = vperm.xlu0 %3531, %v3494
        %v3533 = vpop.permute.xlu0 %3532
        %3536 = vset.pattern.permute.xlu0 0
        %3537 = vperm.xlu0 %3536, %v3495
        %v3538 = vpop.permute.xlu0 %3537
        %3541 = vset.pattern.permute.xlu0 0
        %3542 = vperm.xlu0 %3541, %v3496
        %v3543 = vpop.permute.xlu0 %3542
        %3546 = vset.pattern.permute.xlu0 0
        %3547 = vperm.xlu0 %3546, %v3497
        %v3548 = vpop.permute.xlu0 %3547
        %3551 = vset.pattern.permute.xlu0 0
        %3552 = vperm.xlu0 %3551, %v3498
        %v3553 = vpop.permute.xlu0 %3552
        %3556 = vset.pattern.permute.xlu0 0
        %3557 = vperm.xlu0 %3556, %v3499
        %v3558 = vpop.permute.xlu0 %3557
        %3561 = vset.pattern.permute.xlu0 0
        %3562 = vperm.xlu0 %3561, %v3500
        %v3563 = vpop.permute.xlu0 %3562
        %3566 = vset.pattern.permute.xlu0 0
        %3567 = vperm.xlu0 %3566, %v3501
        %v3568 = vpop.permute.xlu0 %3567
        %3571 = vset.pattern.permute.xlu0 0
        %3572 = vperm.xlu0 %3571, %v3502
        %v3573 = vpop.permute.xlu0 %3572
        %3576 = vset.pattern.permute.xlu0 0
        %3577 = vperm.xlu0 %3576, %v3503
        %v3578 = vpop.permute.xlu0 %3577
        %3581 = vset.pattern.permute.xlu0 0
        %3582 = vperm.xlu0 %3581, %v3504
        %v3583 = vpop.permute.xlu0 %3582
        %3586 = vset.pattern.permute.xlu0 0
        %3587 = vperm.xlu0 %3586, %v3505
        %v3588 = vpop.permute.xlu0 %3587
        %3591 = vset.pattern.permute.xlu0 0
        %3592 = vperm.xlu0 %3591, %v3506
        %v3593 = vpop.permute.xlu0 %3592
        %3596 = vset.pattern.permute.xlu0 0
        %3597 = vperm.xlu0 %3596, %v3507
        %v3598 = vpop.permute.xlu0 %3597
        %3601 = vset.pattern.permute.xlu0 0
        %3602 = vperm.xlu0 %3601, %v3508
        %v3603 = vpop.permute.xlu0 %3602
        %3606 = vset.pattern.permute.xlu0 0
        %3607 = vperm.xlu0 %3606, %v3509
        %v3608 = vpop.permute.xlu0 %3607
        %3611 = vset.pattern.permute.xlu0 0
        %3612 = vperm.xlu0 %3611, %v3510
        %v3613 = vpop.permute.xlu0 %3612
        %3616 = vset.pattern.permute.xlu0 0
        %3617 = vperm.xlu0 %3616, %v3511
        %v3618 = vpop.permute.xlu0 %3617
        %3621 = vset.pattern.permute.xlu0 0
        %3622 = vperm.xlu0 %3621, %v3512
        %v3623 = vpop.permute.xlu0 %3622
        %3626 = vset.pattern.permute.xlu0 0
        %3627 = vperm.xlu0 %3626, %v3513
        %v3628 = vpop.permute.xlu0 %3627
        %3631 = vset.pattern.permute.xlu0 0
        %3632 = vperm.xlu0 %3631, %v3514
        %v3633 = vpop.permute.xlu0 %3632
        %3636 = vset.pattern.permute.xlu0 0
        %3637 = vperm.xlu0 %3636, %v3515
        %v3638 = vpop.permute.xlu0 %3637
        %3641 = vset.pattern.permute.xlu0 0
        %3642 = vperm.xlu0 %3641, %v3516
        %v3643 = vpop.permute.xlu0 %3642
        %3646 = vset.pattern.permute.xlu0 0
        %3647 = vperm.xlu0 %3646, %v3517
        %v3648 = vpop.permute.xlu0 %3647
        %3651 = vset.pattern.permute.xlu0 0
        %3652 = vperm.xlu0 %3651, %v3518
        %v3653 = vpop.permute.xlu0 %3652
        %3656 = vset.pattern.permute.xlu0 0
        %3657 = vperm.xlu0 %3656, %v3519
        %v3658 = vpop.permute.xlu0 %3657
        %3661 = vset.pattern.permute.xlu0 0
        %3662 = vperm.xlu0 %3661, %v3520
        %v3663 = vpop.permute.xlu0 %3662
        %3666 = vset.pattern.permute.xlu0 0
        %3667 = vperm.xlu0 %3666, %v3521
        %v3668 = vpop.permute.xlu0 %3667
        %3671 = vset.pattern.permute.xlu0 0
        %3672 = vperm.xlu0 %3671, %v3522
        %v3673 = vpop.permute.xlu0 %3672
        %3676 = vset.pattern.permute.xlu0 0
        %3677 = vperm.xlu0 %3676, %v3523
        %v3678 = vpop.permute.xlu0 %3677
        %3681 = vset.pattern.permute.xlu0 0
        %3682 = vperm.xlu0 %3681, %v3524
        %v3683 = vpop.permute.xlu0 %3682
        %3686 = vset.pattern.permute.xlu0 0
        %3687 = vperm.xlu0 %3686, %v3525
        %v3688 = vpop.permute.xlu0 %3687
        %3691 = vset.pattern.permute.xlu0 0
        %3692 = vperm.xlu0 %3691, %v3526
        %v3693 = vpop.permute.xlu0 %3692
        %3696 = vset.pattern.permute.xlu0 0
        %3697 = vperm.xlu0 %3696, %v3527
        %v3698 = vpop.permute.xlu0 %3697
        %3701 = vset.pattern.permute.xlu0 0
        %3702 = vperm.xlu0 %3701, %v3528
        %v3703 = vpop.permute.xlu0 %3702
        %3706 = vset.pattern.permute.xlu0 0
        %3707 = vperm.xlu0 %3706, %v3529
        %v3708 = vpop.permute.xlu0 %3707
        %v3710 = vmul.f32 %v3278, %v3533
        %v3711 = vmul.f32 %v3279, %v3538
        %v3712 = vmul.f32 %v3280, %v3543
        %v3713 = vmul.f32 %v3281, %v3548
        %v3714 = vmul.f32 %v3282, %v3553
        %v3715 = vmul.f32 %v3283, %v3558
        %v3716 = vmul.f32 %v3284, %v3563
        %v3717 = vmul.f32 %v3285, %v3568
        %v3718 = vmul.f32 %v3286, %v3573
        %v3719 = vmul.f32 %v3287, %v3578
        %v3720 = vmul.f32 %v3288, %v3583
        %v3721 = vmul.f32 %v3289, %v3588
        %v3722 = vmul.f32 %v3290, %v3593
        %v3723 = vmul.f32 %v3291, %v3598
        %v3724 = vmul.f32 %v3292, %v3603
        %v3725 = vmul.f32 %v3293, %v3608
        %v3726 = vmul.f32 %v3294, %v3613
        %v3727 = vmul.f32 %v3295, %v3618
        %v3728 = vmul.f32 %v3296, %v3623
        %v3729 = vmul.f32 %v3297, %v3628
        %v3730 = vmul.f32 %v3298, %v3633
        %v3731 = vmul.f32 %v3299, %v3638
        %v3732 = vmul.f32 %v3300, %v3643
        %v3733 = vmul.f32 %v3301, %v3648
        %v3734 = vmul.f32 %v3302, %v3653
        %v3735 = vmul.f32 %v3303, %v3658
        %v3736 = vmul.f32 %v3304, %v3663
        %v3737 = vmul.f32 %v3305, %v3668
        %v3738 = vmul.f32 %v3306, %v3673
        %v3739 = vmul.f32 %v3307, %v3678
        %v3740 = vmul.f32 %v3308, %v3683
        %v3741 = vmul.f32 %v3309, %v3688
        %v3742 = vmul.f32 %v3310, %v3693
        %v3743 = vmul.f32 %v3311, %v3698
        %v3744 = vmul.f32 %v3312, %v3703
        %v3745 = vmul.f32 %v3313, %v3708
        %v3746 = vadd.f32 %v3710, %v3711
        %v3747 = vadd.f32 %v3746, %v3712
        %v3748 = vadd.f32 %v3747, %v3713
        %v3749 = vadd.f32 %v3748, %v3714
        %v3750 = vadd.f32 %v3749, %v3715
        %v3751 = vadd.f32 %v3750, %v3716
        %v3752 = vadd.f32 %v3751, %v3717
        %v3753 = vadd.f32 %v3752, %v3718
        %v3754 = vadd.f32 %v3753, %v3719
        %v3755 = vadd.f32 %v3754, %v3720
        %v3756 = vadd.f32 %v3755, %v3721
        %v3757 = vadd.f32 %v3756, %v3722
        %v3758 = vadd.f32 %v3757, %v3723
        %v3759 = vadd.f32 %v3758, %v3724
        %v3760 = vadd.f32 %v3759, %v3725
        %v3761 = vadd.f32 %v3760, %v3726
        %v3762 = vadd.f32 %v3761, %v3727
        %v3763 = vadd.f32 %v3762, %v3728
        %v3764 = vadd.f32 %v3763, %v3729
        %v3765 = vadd.f32 %v3764, %v3730
        %v3766 = vadd.f32 %v3765, %v3731
        %v3767 = vadd.f32 %v3766, %v3732
        %v3768 = vadd.f32 %v3767, %v3733
        %v3769 = vadd.f32 %v3768, %v3734
        %v3770 = vadd.f32 %v3769, %v3735
        %v3771 = vadd.f32 %v3770, %v3736
        %v3772 = vadd.f32 %v3771, %v3737
        %v3773 = vadd.f32 %v3772, %v3738
        %v3774 = vadd.f32 %v3773, %v3739
        %v3775 = vadd.f32 %v3774, %v3740
        %v3776 = vadd.f32 %v3775, %v3741
        %v3777 = vadd.f32 %v3776, %v3742
        %v3778 = vadd.f32 %v3777, %v3743
        %v3779 = vadd.f32 %v3778, %v3744
        %v3780 = vadd.f32 %v3779, %v3745
        %v3781 = vrot.slane %v3780, 4
        %v3782 = vadd.f32 %v3780, %v3781
        %v3783 = vrot.slane %v3782, 2
        %v3784 = vadd.f32 %v3782, %v3783
        %v3785 = vrot.slane %v3784, 1
        %v3786 = vadd.f32 %v3784, %v3785
        %v3787 = vmul.f32 %v3710, %v3710
        %v3788 = vmul.f32 %v3711, %v3711
        %v3789 = vmul.f32 %v3712, %v3712
        %v3790 = vmul.f32 %v3713, %v3713
        %v3791 = vmul.f32 %v3714, %v3714
        %v3792 = vmul.f32 %v3715, %v3715
        %v3793 = vmul.f32 %v3716, %v3716
        %v3794 = vmul.f32 %v3717, %v3717
        %v3795 = vmul.f32 %v3718, %v3718
        %v3796 = vmul.f32 %v3719, %v3719
        %v3797 = vmul.f32 %v3720, %v3720
        %v3798 = vmul.f32 %v3721, %v3721
        %v3799 = vmul.f32 %v3722, %v3722
        %v3800 = vmul.f32 %v3723, %v3723
        %v3801 = vmul.f32 %v3724, %v3724
        %v3802 = vmul.f32 %v3725, %v3725
        %v3803 = vmul.f32 %v3726, %v3726
        %v3804 = vmul.f32 %v3727, %v3727
        %v3805 = vmul.f32 %v3728, %v3728
        %v3806 = vmul.f32 %v3729, %v3729
        %v3807 = vmul.f32 %v3730, %v3730
        %v3808 = vmul.f32 %v3731, %v3731
        %v3809 = vmul.f32 %v3732, %v3732
        %v3810 = vmul.f32 %v3733, %v3733
        %v3811 = vmul.f32 %v3734, %v3734
        %v3812 = vmul.f32 %v3735, %v3735
        %v3813 = vmul.f32 %v3736, %v3736
        %v3814 = vmul.f32 %v3737, %v3737
        %v3815 = vmul.f32 %v3738, %v3738
        %v3816 = vmul.f32 %v3739, %v3739
        %v3817 = vmul.f32 %v3740, %v3740
        %v3818 = vmul.f32 %v3741, %v3741
        %v3819 = vmul.f32 %v3742, %v3742
        %v3820 = vmul.f32 %v3743, %v3743
        %v3821 = vmul.f32 %v3744, %v3744
        %v3822 = vmul.f32 %v3745, %v3745
        %v3823 = vadd.f32 %v3787, %v3788
        %v3824 = vadd.f32 %v3823, %v3789
        %v3825 = vadd.f32 %v3824, %v3790
        %v3826 = vadd.f32 %v3825, %v3791
        %v3827 = vadd.f32 %v3826, %v3792
        %v3828 = vadd.f32 %v3827, %v3793
        %v3829 = vadd.f32 %v3828, %v3794
        %v3830 = vadd.f32 %v3829, %v3795
        %v3831 = vadd.f32 %v3830, %v3796
        %v3832 = vadd.f32 %v3831, %v3797
        %v3833 = vadd.f32 %v3832, %v3798
        %v3834 = vadd.f32 %v3833, %v3799
        %v3835 = vadd.f32 %v3834, %v3800
        %v3836 = vadd.f32 %v3835, %v3801
        %v3837 = vadd.f32 %v3836, %v3802
        %v3838 = vadd.f32 %v3837, %v3803
        %v3839 = vadd.f32 %v3838, %v3804
        %v3840 = vadd.f32 %v3839, %v3805
        %v3841 = vadd.f32 %v3840, %v3806
        %v3842 = vadd.f32 %v3841, %v3807
        %v3843 = vadd.f32 %v3842, %v3808
        %v3844 = vadd.f32 %v3843, %v3809
        %v3845 = vadd.f32 %v3844, %v3810
        %v3846 = vadd.f32 %v3845, %v3811
        %v3847 = vadd.f32 %v3846, %v3812
        %v3848 = vadd.f32 %v3847, %v3813
        %v3849 = vadd.f32 %v3848, %v3814
        %v3850 = vadd.f32 %v3849, %v3815
        %v3851 = vadd.f32 %v3850, %v3816
        %v3852 = vadd.f32 %v3851, %v3817
        %v3853 = vadd.f32 %v3852, %v3818
        %v3854 = vadd.f32 %v3853, %v3819
        %v3855 = vadd.f32 %v3854, %v3820
        %v3856 = vadd.f32 %v3855, %v3821
        %v3857 = vadd.f32 %v3856, %v3822
        %v3858 = vrot.slane %v3857, 4
        %v3859 = vadd.f32 %v3857, %v3858
        %v3860 = vrot.slane %v3859, 2
        %v3861 = vadd.f32 %v3859, %v3860
        %v3862 = vrot.slane %v3861, 1
        %v3863 = vadd.f32 %v3861, %v3862
        %vm3864 = vcmask 1040384
        %v3865 = vsel %vm3864, %v3786, %v3863
        %3866 = vst [vmem:[%s241] sm:$0x3] %v3865
        %s3867 = sand.u32 %s102, 1
        %s3868 = scalar_lea.sflag [#allocation4], %s3867
        %s3869 = sand.u32 %s102, 1
        %s3870 = smul.addr %s3869, 144
        %s3871 = scalar_lea.vmem [#allocation7], %s3870
        %s3872 = sand.u32 %s128, 1
        %s3873 = scalar_lea.sflag [#allocation9], %s3872
        %s3874 = sand.u32 %s128, 1
        %s3875 = smul.addr %s3874, 2
        %s3876 = scalar_lea.vmem [#allocation8], %s3875
        // Predicated region
        $region41: #{tpu_custom_call.1} parent=31 // pred_check
          %p3877 = pneg %p112
        $region42: #{tpu_custom_call.1} parent=31 // pred_check_branch
          %3879 = sbr.rel (%p3877) target = $region44
        $region43: #{tpu_custom_call.1} parent=31 // pred_region
          %s3881 = ssub.s32 2304, 2304
          %3882 = vsyncadd %s3868, %s3881
          %s3883 = smul.addr %s26, 36
          %s3884 = smul.addr %s3883, 64
          %s3885 = scalar_lea.hbm %s3, %s3884
          %s3886 = sshll.u32 %s3871, 4
          %s3887 = int_to_ptr.vmem [resolvable:$true] %s3886
          %3892 = dma.vmem_to_hbm [thread:$0]  %s3887, 2304, %s3885, %s3868, 64, 64, 4
        $region44: #{tpu_custom_call.1} parent=31 // pred_fallthru
          _
        // Predicated region
        $region45: #{tpu_custom_call.1} parent=31 // pred_check
          %p3893 = pneg %p138
        $region46: #{tpu_custom_call.1} parent=31 // pred_check_branch
          %3895 = sbr.rel (%p3893) target = $region48
        $region47: #{tpu_custom_call.1} parent=31 // pred_region
          %s3897 = ssub.s32 32, 32
          %3898 = vsyncadd %s3873, %s3897
          %s3899 = smul.addr %s26, 32
          %s3900 = scalar_lea.hbm %s4, %s3899
          %s3902 = sshll.u32 %s3876, 4
          %s3903 = int_to_ptr.vmem [resolvable:$true] %s3902
          %3905 = dma.vmem_to_hbm [thread:$0]  %s3903, 32, %s3900, %s3873
        $region48: #{tpu_custom_call.1} parent=31 // pred_fallthru
          _
      $region32: #{tpu_custom_call.1} parent=5 // pred_fallthru
        _
      %p3906 = scmp.le.s32.totalorder 2, %s21
      // Predicated region
      $region49: #{tpu_custom_call.1} parent=5 // pred_check
        %p3907 = pneg %p3906
      $region50: #{tpu_custom_call.1} parent=5 // pred_check_branch
        %3909 = sbr.rel (%p3907) target = $region52
      $region51: #{tpu_custom_call.1} parent=5 // pred_region
        %s3910 = ssub.s32 %s21, 2
        // Predicated region
        $region53: #{tpu_custom_call.1} parent=51 // pred_check
          %p3911 = pneg %p118
        $region54: #{tpu_custom_call.1} parent=51 // pred_check_branch
          %3913 = sbr.rel (%p3911) target = $region56
        $region55: #{tpu_custom_call.1} parent=51 // pred_region
          %s3914 = sand.u32 %s103, 1
          %s3915 = scalar_lea.sflag [#allocation4], %s3914
          %s3916 = sand.u32 %s103, 1
          %s3917 = smul.addr %s3916, 144
          %s3918 = scalar_lea.vmem [#allocation7], %s3917
          %3919 = dma.done %s3915, 2304
        $region56: #{tpu_custom_call.1} parent=51 // pred_fallthru
          _
        // Predicated region
        $region57: #{tpu_custom_call.1} parent=51 // pred_check
          %p3920 = pneg %p144
        $region58: #{tpu_custom_call.1} parent=51 // pred_check_branch
          %3922 = sbr.rel (%p3920) target = $region60
        $region59: #{tpu_custom_call.1} parent=51 // pred_region
          %s3923 = sand.u32 %s129, 1
          %s3924 = scalar_lea.sflag [#allocation9], %s3923
          %s3925 = sand.u32 %s129, 1
          %s3926 = smul.addr %s3925, 2
          %s3927 = scalar_lea.vmem [#allocation8], %s3926
          %3928 = dma.done %s3924, 32
        $region60: #{tpu_custom_call.1} parent=51 // pred_fallthru
          _
      $region52: #{tpu_custom_call.1} parent=5 // pred_fallthru
        _
    $region6: #{tpu_custom_call.1} parent=1 // loop_footer
      %s25 = sadd.s32 1, %s21
    $region7: #{tpu_custom_call.1} parent=1 // loop_footer_branch
      %20 = sbr.rel target = $region3
    $region8: #{tpu_custom_call.1} parent=1 // loop_exit
      _
    %3929 = vsyncpa [#allocation3], 1
    %s3930 = scalar_lea.sflag [#allocation3], 1
    %3931 = vsyncpa %s3930, 1
    %3932 = vsyncpa [#allocation6], 1
    %3933 = vsyncpa [#allocation4], 1
    %s3934 = scalar_lea.sflag [#allocation4], 1
    %3935 = vsyncpa %s3934, 1
    %3936 = vsyncpa [#allocation9], 1
    %s3937 = scalar_lea.sflag [#allocation9], 1
    %3938 = vsyncpa %s3937, 1

</llo_original>
